<compile_context>
chip_gen: v6e
topology: v6e:2x2x1
jax: 0.10.0
libtpu: 0.0.40
codegen_flags: <defaults>
</compile_context>

<pallas_src>
import functools

import jax
import jax.numpy as jnp
from jax import lax
from jax.experimental import pallas as pl
from jax.experimental.pallas import tpu as pltpu


def _sent_attn_kernel(seq_ref, mask_ref,
                      wih_t_ref, whh_f_t_ref, whh_r_t_ref,
                      wsent_f_t_ref, wsent_r_t_ref, bsent_ref, us_ref,
                      v_ref, attn_ref,
                      gi_ref, outf_ref, outr_ref):
    L, TB, D = seq_ref.shape
    H = whh_f_t_ref.shape[0]
    GH = 3 * H
    NEG = jnp.float32(-1e30)

    mask_bt = mask_ref[...]                                    # (TB, L)
    len_col = jnp.sum(mask_bt, axis=1, keepdims=True)          # (TB, 1) per-doc length

    # Fused fwd+rev input projection: one (L*TB, D) @ (D, 6H) MXU pass.
    x2 = seq_ref[...].reshape(L * TB, D)
    gi_ref[...] = jnp.dot(x2, wih_t_ref[...],
                          preferred_element_type=jnp.float32).reshape(L, TB, 2 * GH)

    whh_f_t = whh_f_t_ref[...]                                 # (H, 3H) pre-transposed
    whh_r_t = whh_r_t_ref[...]

    def cell(gi, h, whh_t):
        # PyTorch GRU equations, gate order [r, z, n]; GRU biases are zero.
        gh = jnp.dot(h, whh_t, preferred_element_type=jnp.float32)     # (TB, 3H)
        r = jax.nn.sigmoid(gi[:, 0:H] + gh[:, 0:H])
        z = jax.nn.sigmoid(gi[:, H:2 * H] + gh[:, H:2 * H])
        n = jnp.tanh(gi[:, 2 * H:GH] + r * gh[:, 2 * H:GH])
        return (1.0 - z) * n + z * h

    h0 = jnp.zeros((TB, H), jnp.float32)

    def fwd_body(t, h):
        m = (len_col > t).astype(jnp.float32)                  # (TB, 1), no mask load
        gi = gi_ref[t][:, 0:GH]                                # (TB, 3H) fwd half
        h_new = cell(gi, h, whh_f_t)
        h_keep = m * h_new                                     # zero at padding
        outf_ref[pl.ds(t, 1), :, :] = h_keep[None]
        return h_keep + (1.0 - m) * h                          # freeze past length

    lax.fori_loop(0, L, fwd_body, h0, unroll=True)

    def rev_body(i, h):
        t = L - 1 - i
        m = (len_col > t).astype(jnp.float32)
        gi = gi_ref[t][:, GH:2 * GH]                           # (TB, 3H) rev half
        h_new = cell(gi, h, whh_r_t)
        h_keep = m * h_new                                     # h stays 0 until the
        outr_ref[pl.ds(t, 1), :, :] = h_keep[None]             # last valid step
        return h_keep + (1.0 - m) * h

    lax.fori_loop(0, L, rev_body, h0, unroll=True)

    # u_i = tanh(W_sent([h_fwd ; h_rev]) + b): split-weight form avoids any concat.
    outf2 = outf_ref[...].reshape(L * TB, H)
    outr2 = outr_ref[...].reshape(L * TB, H)
    u2 = jnp.tanh(
        jnp.dot(outf2, wsent_f_t_ref[...], preferred_element_type=jnp.float32)
        + jnp.dot(outr2, wsent_r_t_ref[...], preferred_element_type=jnp.float32)
        + bsent_ref[...])                                      # (L*TB, 2H)
    u = u2.reshape(L, TB, 2 * H)

    # attn logits = u_i . u_s ; masked softmax over the time axis (axis 0).
    logits = jnp.sum(u * us_ref[...], axis=-1)                 # (L, TB)
    mask_lb = mask_bt.T                                        # tiny per-step transpose
    logits = jnp.where(mask_lb > 0.5, logits, NEG)             # finite fill -> no NaN
    lmax = jnp.max(logits, axis=0, keepdims=True)              # for empty / padded docs
    ex = jnp.exp(logits - lmax)
    attn = ex * pl.reciprocal(jnp.sum(ex, axis=0, keepdims=True), approx=True)

    # v = sum_t attn_t * u_t
    v_ref[...] = jnp.sum(attn[:, :, None] * u, axis=0)         # (TB, 2H)
    attn_ref[...] = attn.T                                     # (TB, L) lane-dense out


@functools.partial(jax.jit, static_argnames=("tile_b",))
def sent_attn_forward(seq, mask, params, tile_b=8):
    """seq: (B, L, D) f32; mask: (B, L) {0,1} prefix mask.
    Returns (v: (B, 2H), attn: (B, L))."""
    B, L, D = seq.shape
    H = params["whh_f_t"].shape[0]
    H2, GH = 2 * H, 3 * H
    TB = tile_b
    assert TB % 8 == 0, "tile_b must be a multiple of 8 (sublane granularity)"
    Bp = ((B + TB - 1) // TB) * TB

    seq = seq.astype(jnp.float32)
    mask_f = mask.astype(jnp.float32)
    if Bp != B:
        # Pad the batch with empty (all-masked) documents; sliced off at the end.
        seq = jnp.pad(seq, ((0, Bp - B), (0, 0), (0, 0)))
        mask_f = jnp.pad(mask_f, ((0, Bp - B), (0, 0)))

    seq_t = jnp.transpose(seq, (1, 0, 2))                      # (L, Bp, D) time-major

    v, attn = pl.pallas_call(
        _sent_attn_kernel,
        out_shape=(jax.ShapeDtypeStruct((Bp, H2), jnp.float32),
                   jax.ShapeDtypeStruct((Bp, L), jnp.float32)),
        grid=(Bp // TB,),
        in_specs=[
            pl.BlockSpec((L, TB, D), lambda b: (0, b, 0)),     # seq (time-major)
            pl.BlockSpec((TB, L), lambda b: (b, 0)),           # mask
            pl.BlockSpec((D, 2 * GH), lambda b: (0, 0)),       # [W_ih_f ; W_ih_r]^T
            pl.BlockSpec((H, GH), lambda b: (0, 0)),           # W_hh_f^T
            pl.BlockSpec((H, GH), lambda b: (0, 0)),           # W_hh_r^T
            pl.BlockSpec((H, H2), lambda b: (0, 0)),           # W_sent[:, :H]^T
            pl.BlockSpec((H, H2), lambda b: (0, 0)),           # W_sent[:, H:]^T
            pl.BlockSpec((1, H2), lambda b: (0, 0)),           # b_sent
            pl.BlockSpec((1, H2), lambda b: (0, 0)),           # u_s (row)
        ],
        out_specs=(
            pl.BlockSpec((TB, H2), lambda b: (b, 0)),          # v
            pl.BlockSpec((TB, L), lambda b: (b, 0)),           # attn (lane-dense)
        ),
        scratch_shapes=[
            pltpu.VMEM((L, TB, 2 * GH), jnp.float32),          # fused input projections
            pltpu.VMEM((L, TB, H), jnp.float32),               # fwd hidden states
            pltpu.VMEM((L, TB, H), jnp.float32),               # rev hidden states
        ],
        compiler_params=pltpu.CompilerParams(
            dimension_semantics=("parallel",),                 # batch tiles independent
            vmem_limit_bytes=32 * 1024 * 1024,                 # re-derive TB per chip gen
        ),
    )(seq_t, mask_f,
      params["wih_t"], params["whh_f_t"], params["whh_r_t"],
      params["wsent_f_t"], params["wsent_r_t"], params["b_sent"], params["u_s_row"])

    return v[:B], attn[:B]


def init_params(key, sent_vec_dim, sent_hidden_dim):
    """Deterministic synthetic init mirroring SentAttnModel.__init__, stored in the
    pre-transposed / pre-stacked layout the kernel consumes."""
    D, H = sent_vec_dim, sent_hidden_dim
    ks = jax.random.split(key, 7)
    ortho = jax.nn.initializers.orthogonal()
    glorot = jax.nn.initializers.glorot_normal()
    wih_f = ortho(ks[0], (3 * H, D), jnp.float32)              # weight_ih_l0
    whh_f = ortho(ks[1], (3 * H, H), jnp.float32)              # weight_hh_l0
    wih_r = ortho(ks[2], (3 * H, D), jnp.float32)              # weight_ih_l0_reverse
    whh_r = ortho(ks[3], (3 * H, H), jnp.float32)              # weight_hh_l0_reverse
    w_sent = glorot(ks[4], (2 * H, 2 * H), jnp.float32)
    b_sent = (0.01 * jax.random.normal(ks[5], (1, 2 * H))).astype(jnp.float32)
    u_s = glorot(ks[6], (2 * H, 1), jnp.float32)               # xavier_normal_(u_s)
    # GRU biases are zeroed by _gru_init -> folded out of the kernel.
    return {
        "wih_t": jnp.concatenate([wih_f.T, wih_r.T], axis=1),  # (D, 6H)
        "whh_f_t": whh_f.T,                                    # (H, 3H)
        "whh_r_t": whh_r.T,                                    # (H, 3H)
        "wsent_f_t": w_sent[:, :H].T,                          # (H, 2H)
        "wsent_r_t": w_sent[:, H:].T,                          # (H, 2H)
        "b_sent": b_sent,                                      # (1, 2H)
        "u_s_row": u_s.T,                                      # (1, 2H)
    }


if __name__ == "__main__":
    B, L = 2, 8                 # batch, max_n_sents
    D, H = 32, 16               # sent_vec_dim, sent_hidden_dim (2H = 32)

    key = jax.random.PRNGKey(0)
    k_seq, k_par = jax.random.split(key)

    seq = jax.random.normal(k_seq, (B, L, D), dtype=jnp.float32)
    lengths = jnp.array([L, 5], dtype=jnp.int32)
    mask = (jnp.arange(L)[None, :] < lengths[:, None]).astype(jnp.float32)

    params = init_params(k_par, D, H)

    v, attn = sent_attn_forward(seq, mask, params)
    jax.block_until_ready((v, attn))

    assert v.shape == (B, 2 * H) and attn.shape == (B, L)
    print("KERNEL_OK")
</pallas_src>

<mosaic_0001>
module attributes {stable_mosaic.version = 11 : i64} {
  func.func @_sent_attn_kernel(%arg0: i32, %arg1: memref<8x8x32xf32, #tpu.memory_space<vmem>>, %arg2: memref<8x8xf32, #tpu.memory_space<vmem>>, %arg3: memref<32x96xf32, #tpu.memory_space<vmem>>, %arg4: memref<16x48xf32, #tpu.memory_space<vmem>>, %arg5: memref<16x48xf32, #tpu.memory_space<vmem>>, %arg6: memref<16x32xf32, #tpu.memory_space<vmem>>, %arg7: memref<16x32xf32, #tpu.memory_space<vmem>>, %arg8: memref<1x32xf32, #tpu.memory_space<vmem>>, %arg9: memref<1x32xf32, #tpu.memory_space<vmem>>, %arg10: memref<8x32xf32, #tpu.memory_space<vmem>>, %arg11: memref<8x8xf32, #tpu.memory_space<vmem>>, %arg12: memref<8x8x96xf32, #tpu.memory_space<vmem>>, %arg13: memref<8x8x16xf32, #tpu.memory_space<vmem>>, %arg14: memref<8x8x16xf32, #tpu.memory_space<vmem>>) attributes {dimension_semantics = [#tpu.dimension_semantics<parallel>], iteration_bounds = array<i64: 1>, scalar_prefetch = 0 : i64, scratch_operands = 3 : i64, tpu.core_type = #tpu.core_type<tc>, window_params = [{transform_indices = @transform_0, window_bounds = array<i64: 8, 8, 32>}, {transform_indices = @transform_1, window_bounds = array<i64: 8, 8>}, {pipeline_mode = #tpu.pipeline_mode<synchronous>, transform_indices = @transform_2, window_bounds = array<i64: 32, 96>}, {pipeline_mode = #tpu.pipeline_mode<synchronous>, transform_indices = @transform_3, window_bounds = array<i64: 16, 48>}, {pipeline_mode = #tpu.pipeline_mode<synchronous>, transform_indices = @transform_4, window_bounds = array<i64: 16, 48>}, {pipeline_mode = #tpu.pipeline_mode<synchronous>, transform_indices = @transform_5, window_bounds = array<i64: 16, 32>}, {pipeline_mode = #tpu.pipeline_mode<synchronous>, transform_indices = @transform_6, window_bounds = array<i64: 16, 32>}, {pipeline_mode = #tpu.pipeline_mode<synchronous>, transform_indices = @transform_7, window_bounds = array<i64: 1, 32>}, {pipeline_mode = #tpu.pipeline_mode<synchronous>, transform_indices = @transform_8, window_bounds = array<i64: 1, 32>}, {transform_indices = @transform_9, window_bounds = array<i64: 8, 32>}, {transform_indices = @transform_10, window_bounds = array<i64: 8, 8>}]} {
    %c0 = arith.constant 0 : index
    %c0_0 = arith.constant 0 : index
    %0 = vector.load %arg2[%c0, %c0_0] : memref<8x8xf32, #tpu.memory_space<vmem>>, vector<8x8xf32>
    %cst = arith.constant dense<0.000000e+00> : vector<8xf32>
    %1 = vector.multi_reduction <add>, %0, %cst [1] : vector<8x8xf32> to vector<8xf32>
    %2 = vector.shape_cast %1 : vector<8xf32> to vector<8x1xf32>
    %c0_1 = arith.constant 0 : index
    %c0_2 = arith.constant 0 : index
    %c0_3 = arith.constant 0 : index
    %3 = vector.load %arg1[%c0_1, %c0_2, %c0_3] : memref<8x8x32xf32, #tpu.memory_space<vmem>>, vector<8x8x32xf32>
    %4 = vector.shape_cast %3 : vector<8x8x32xf32> to vector<64x32xf32>
    %c0_4 = arith.constant 0 : index
    %c0_5 = arith.constant 0 : index
    %5 = vector.load %arg3[%c0_4, %c0_5] : memref<32x96xf32, #tpu.memory_space<vmem>>, vector<32x96xf32>
    %cst_6 = arith.constant dense<0.000000e+00> : vector<64x96xf32>
    %6 = tpu.matmul %4, %5, %cst_6 {dimension_numbers = #tpu.dot_dimension_numbers<[1], [0], [0], [1], [0, 0, 1, 1], [], []>} : vector<64x32xf32>, vector<32x96xf32>, vector<64x96xf32> -> vector<64x96xf32>
    %7 = vector.shape_cast %6 : vector<64x96xf32> to vector<8x8x96xf32>
    %c0_7 = arith.constant 0 : index
    %c0_8 = arith.constant 0 : index
    %c0_9 = arith.constant 0 : index
    %8 = vector.load %arg12[%c0_7, %c0_8, %c0_9] : memref<8x8x96xf32, #tpu.memory_space<vmem>>, vector<8x8x96xf32>
    tpu.vector_store %arg12[%c0_7, %c0_8, %c0_9], %7 {strides = array<i32>} : memref<8x8x96xf32, #tpu.memory_space<vmem>>, vector<8x8x96xf32>,
    %c0_10 = arith.constant 0 : index
    %c0_11 = arith.constant 0 : index
    %9 = vector.load %arg4[%c0_10, %c0_11] : memref<16x48xf32, #tpu.memory_space<vmem>>, vector<16x48xf32>
    %c0_12 = arith.constant 0 : index
    %c0_13 = arith.constant 0 : index
    %10 = vector.load %arg5[%c0_12, %c0_13] : memref<16x48xf32, #tpu.memory_space<vmem>>, vector<16x48xf32>
    %cst_14 = arith.constant 0.000000e+00 : f32
    %11 = vector.broadcast %cst_14 : f32 to vector<8x16xf32>
    %c0_i32 = arith.constant 0 : i32
    %12 = arith.sitofp %c0_i32 : i32 to f32
    %13 = vector.broadcast %12 : f32 to vector<8x1xf32>
    %14 = arith.cmpf ogt, %2, %13 : vector<8x1xf32>
    %15 = arith.extui %14 : vector<8x1xi1> to vector<8x1xi32>
    %16 = arith.sitofp %15 : vector<8x1xi32> to vector<8x1xf32>
    %17 = arith.index_cast %c0_i32 : i32 to index
    %c0_15 = arith.constant 0 : index
    %c0_16 = arith.constant 0 : index
    %18 = vector.load %arg12[%17, %c0_15, %c0_16] : memref<8x8x96xf32, #tpu.memory_space<vmem>>, vector<1x8x96xf32>
    %19 = vector.shape_cast %18 : vector<1x8x96xf32> to vector<8x96xf32>
    %20 = vector.extract_strided_slice %19 {offsets = [0, 0], sizes = [8, 48], strides = [1, 1]} : vector<8x96xf32> to vector<8x48xf32>
    %cst_17 = arith.constant dense<0.000000e+00> : vector<8x48xf32>
    %21 = tpu.matmul %11, %9, %cst_17 {dimension_numbers = #tpu.dot_dimension_numbers<[1], [0], [0], [1], [0, 0, 1, 1], [], []>} : vector<8x16xf32>, vector<16x48xf32>, vector<8x48xf32> -> vector<8x48xf32>
    %22 = vector.extract_strided_slice %20 {offsets = [0, 0], sizes = [8, 16], strides = [1, 1]} : vector<8x48xf32> to vector<8x16xf32>
    %23 = vector.extract_strided_slice %21 {offsets = [0, 0], sizes = [8, 16], strides = [1, 1]} : vector<8x48xf32> to vector<8x16xf32>
    %24 = arith.addf %22, %23 : vector<8x16xf32>
    %25 = arith.negf %24 : vector<8x16xf32>
    %26 = math.exp %25 : vector<8x16xf32>
    %cst_18 = arith.constant 1.000000e+00 : f32
    %27 = vector.broadcast %cst_18 : f32 to vector<8x16xf32>
    %28 = arith.addf %27, %26 : vector<8x16xf32>
    %29 = arith.divf %27, %28 : vector<8x16xf32>
    %30 = vector.extract_strided_slice %20 {offsets = [0, 16], sizes = [8, 16], strides = [1, 1]} : vector<8x48xf32> to vector<8x16xf32>
    %31 = vector.extract_strided_slice %21 {offsets = [0, 16], sizes = [8, 16], strides = [1, 1]} : vector<8x48xf32> to vector<8x16xf32>
    %32 = arith.addf %30, %31 : vector<8x16xf32>
    %33 = arith.negf %32 : vector<8x16xf32>
    %34 = math.exp %33 : vector<8x16xf32>
    %cst_19 = arith.constant 1.000000e+00 : f32
    %35 = vector.broadcast %cst_19 : f32 to vector<8x16xf32>
    %36 = arith.addf %35, %34 : vector<8x16xf32>
    %37 = arith.divf %35, %36 : vector<8x16xf32>
    %38 = vector.extract_strided_slice %20 {offsets = [0, 32], sizes = [8, 16], strides = [1, 1]} : vector<8x48xf32> to vector<8x16xf32>
    %39 = vector.extract_strided_slice %21 {offsets = [0, 32], sizes = [8, 16], strides = [1, 1]} : vector<8x48xf32> to vector<8x16xf32>
    %40 = arith.mulf %29, %39 : vector<8x16xf32>
    %41 = arith.addf %38, %40 : vector<8x16xf32>
    %42 = math.tanh %41 : vector<8x16xf32>
    %cst_20 = arith.constant 1.000000e+00 : f32
    %43 = vector.broadcast %cst_20 : f32 to vector<8x16xf32>
    %44 = arith.subf %43, %37 : vector<8x16xf32>
    %45 = arith.mulf %44, %42 : vector<8x16xf32>
    %46 = arith.mulf %37, %11 : vector<8x16xf32>
    %47 = arith.addf %45, %46 : vector<8x16xf32>
    %48 = vector.broadcast %16 : vector<8x1xf32> to vector<8x16xf32>
    %49 = arith.mulf %48, %47 : vector<8x16xf32>
    %50 = vector.shape_cast %49 : vector<8x16xf32> to vector<1x8x16xf32>
    %51 = arith.index_cast %c0_i32 : i32 to index
    %c0_21 = arith.constant 0 : index
    %c0_22 = arith.constant 0 : index
    %52 = vector.load %arg13[%51, %c0_21, %c0_22] : memref<8x8x16xf32, #tpu.memory_space<vmem>>, vector<1x8x16xf32>
    tpu.vector_store %arg13[%51, %c0_21, %c0_22], %50 {strides = array<i32>} : memref<8x8x16xf32, #tpu.memory_space<vmem>>, vector<1x8x16xf32>,
    %cst_23 = arith.constant 1.000000e+00 : f32
    %53 = vector.broadcast %cst_23 : f32 to vector<8x1xf32>
    %54 = arith.subf %53, %16 : vector<8x1xf32>
    %55 = vector.broadcast %54 : vector<8x1xf32> to vector<8x16xf32>
    %56 = arith.mulf %55, %11 : vector<8x16xf32>
    %57 = arith.addf %49, %56 : vector<8x16xf32>
    %c1_i32 = arith.constant 1 : i32
    %58 = arith.sitofp %c1_i32 : i32 to f32
    %59 = vector.broadcast %58 : f32 to vector<8x1xf32>
    %60 = arith.cmpf ogt, %2, %59 : vector<8x1xf32>
    %61 = arith.extui %60 : vector<8x1xi1> to vector<8x1xi32>
    %62 = arith.sitofp %61 : vector<8x1xi32> to vector<8x1xf32>
    %63 = arith.index_cast %c1_i32 : i32 to index
    %c0_24 = arith.constant 0 : index
    %c0_25 = arith.constant 0 : index
    %64 = vector.load %arg12[%63, %c0_24, %c0_25] : memref<8x8x96xf32, #tpu.memory_space<vmem>>, vector<1x8x96xf32>
    %65 = vector.shape_cast %64 : vector<1x8x96xf32> to vector<8x96xf32>
    %66 = vector.extract_strided_slice %65 {offsets = [0, 0], sizes = [8, 48], strides = [1, 1]} : vector<8x96xf32> to vector<8x48xf32>
    %cst_26 = arith.constant dense<0.000000e+00> : vector<8x48xf32>
    %67 = tpu.matmul %57, %9, %cst_26 {dimension_numbers = #tpu.dot_dimension_numbers<[1], [0], [0], [1], [0, 0, 1, 1], [], []>} : vector<8x16xf32>, vector<16x48xf32>, vector<8x48xf32> -> vector<8x48xf32>
    %68 = vector.extract_strided_slice %66 {offsets = [0, 0], sizes = [8, 16], strides = [1, 1]} : vector<8x48xf32> to vector<8x16xf32>
    %69 = vector.extract_strided_slice %67 {offsets = [0, 0], sizes = [8, 16], strides = [1, 1]} : vector<8x48xf32> to vector<8x16xf32>
    %70 = arith.addf %68, %69 : vector<8x16xf32>
    %71 = arith.negf %70 : vector<8x16xf32>
    %72 = math.exp %71 : vector<8x16xf32>
    %cst_27 = arith.constant 1.000000e+00 : f32
    %73 = vector.broadcast %cst_27 : f32 to vector<8x16xf32>
    %74 = arith.addf %73, %72 : vector<8x16xf32>
    %75 = arith.divf %73, %74 : vector<8x16xf32>
    %76 = vector.extract_strided_slice %66 {offsets = [0, 16], sizes = [8, 16], strides = [1, 1]} : vector<8x48xf32> to vector<8x16xf32>
    %77 = vector.extract_strided_slice %67 {offsets = [0, 16], sizes = [8, 16], strides = [1, 1]} : vector<8x48xf32> to vector<8x16xf32>
    %78 = arith.addf %76, %77 : vector<8x16xf32>
    %79 = arith.negf %78 : vector<8x16xf32>
    %80 = math.exp %79 : vector<8x16xf32>
    %cst_28 = arith.constant 1.000000e+00 : f32
    %81 = vector.broadcast %cst_28 : f32 to vector<8x16xf32>
    %82 = arith.addf %81, %80 : vector<8x16xf32>
    %83 = arith.divf %81, %82 : vector<8x16xf32>
    %84 = vector.extract_strided_slice %66 {offsets = [0, 32], sizes = [8, 16], strides = [1, 1]} : vector<8x48xf32> to vector<8x16xf32>
    %85 = vector.extract_strided_slice %67 {offsets = [0, 32], sizes = [8, 16], strides = [1, 1]} : vector<8x48xf32> to vector<8x16xf32>
    %86 = arith.mulf %75, %85 : vector<8x16xf32>
    %87 = arith.addf %84, %86 : vector<8x16xf32>
    %88 = math.tanh %87 : vector<8x16xf32>
    %cst_29 = arith.constant 1.000000e+00 : f32
    %89 = vector.broadcast %cst_29 : f32 to vector<8x16xf32>
    %90 = arith.subf %89, %83 : vector<8x16xf32>
    %91 = arith.mulf %90, %88 : vector<8x16xf32>
    %92 = arith.mulf %83, %57 : vector<8x16xf32>
    %93 = arith.addf %91, %92 : vector<8x16xf32>
    %94 = vector.broadcast %62 : vector<8x1xf32> to vector<8x16xf32>
    %95 = arith.mulf %94, %93 : vector<8x16xf32>
    %96 = vector.shape_cast %95 : vector<8x16xf32> to vector<1x8x16xf32>
    %97 = arith.index_cast %c1_i32 : i32 to index
    %c0_30 = arith.constant 0 : index
    %c0_31 = arith.constant 0 : index
    %98 = vector.load %arg13[%97, %c0_30, %c0_31] : memref<8x8x16xf32, #tpu.memory_space<vmem>>, vector<1x8x16xf32>
    tpu.vector_store %arg13[%97, %c0_30, %c0_31], %96 {strides = array<i32>} : memref<8x8x16xf32, #tpu.memory_space<vmem>>, vector<1x8x16xf32>,
    %cst_32 = arith.constant 1.000000e+00 : f32
    %99 = vector.broadcast %cst_32 : f32 to vector<8x1xf32>
    %100 = arith.subf %99, %62 : vector<8x1xf32>
    %101 = vector.broadcast %100 : vector<8x1xf32> to vector<8x16xf32>
    %102 = arith.mulf %101, %57 : vector<8x16xf32>
    %103 = arith.addf %95, %102 : vector<8x16xf32>
    %c2_i32 = arith.constant 2 : i32
    %104 = arith.sitofp %c2_i32 : i32 to f32
    %105 = vector.broadcast %104 : f32 to vector<8x1xf32>
    %106 = arith.cmpf ogt, %2, %105 : vector<8x1xf32>
    %107 = arith.extui %106 : vector<8x1xi1> to vector<8x1xi32>
    %108 = arith.sitofp %107 : vector<8x1xi32> to vector<8x1xf32>
    %109 = arith.index_cast %c2_i32 : i32 to index
    %c0_33 = arith.constant 0 : index
    %c0_34 = arith.constant 0 : index
    %110 = vector.load %arg12[%109, %c0_33, %c0_34] : memref<8x8x96xf32, #tpu.memory_space<vmem>>, vector<1x8x96xf32>
    %111 = vector.shape_cast %110 : vector<1x8x96xf32> to vector<8x96xf32>
    %112 = vector.extract_strided_slice %111 {offsets = [0, 0], sizes = [8, 48], strides = [1, 1]} : vector<8x96xf32> to vector<8x48xf32>
    %cst_35 = arith.constant dense<0.000000e+00> : vector<8x48xf32>
    %113 = tpu.matmul %103, %9, %cst_35 {dimension_numbers = #tpu.dot_dimension_numbers<[1], [0], [0], [1], [0, 0, 1, 1], [], []>} : vector<8x16xf32>, vector<16x48xf32>, vector<8x48xf32> -> vector<8x48xf32>
    %114 = vector.extract_strided_slice %112 {offsets = [0, 0], sizes = [8, 16], strides = [1, 1]} : vector<8x48xf32> to vector<8x16xf32>
    %115 = vector.extract_strided_slice %113 {offsets = [0, 0], sizes = [8, 16], strides = [1, 1]} : vector<8x48xf32> to vector<8x16xf32>
    %116 = arith.addf %114, %115 : vector<8x16xf32>
    %117 = arith.negf %116 : vector<8x16xf32>
    %118 = math.exp %117 : vector<8x16xf32>
    %cst_36 = arith.constant 1.000000e+00 : f32
    %119 = vector.broadcast %cst_36 : f32 to vector<8x16xf32>
    %120 = arith.addf %119, %118 : vector<8x16xf32>
    %121 = arith.divf %119, %120 : vector<8x16xf32>
    %122 = vector.extract_strided_slice %112 {offsets = [0, 16], sizes = [8, 16], strides = [1, 1]} : vector<8x48xf32> to vector<8x16xf32>
    %123 = vector.extract_strided_slice %113 {offsets = [0, 16], sizes = [8, 16], strides = [1, 1]} : vector<8x48xf32> to vector<8x16xf32>
    %124 = arith.addf %122, %123 : vector<8x16xf32>
    %125 = arith.negf %124 : vector<8x16xf32>
    %126 = math.exp %125 : vector<8x16xf32>
    %cst_37 = arith.constant 1.000000e+00 : f32
    %127 = vector.broadcast %cst_37 : f32 to vector<8x16xf32>
    %128 = arith.addf %127, %126 : vector<8x16xf32>
    %129 = arith.divf %127, %128 : vector<8x16xf32>
    %130 = vector.extract_strided_slice %112 {offsets = [0, 32], sizes = [8, 16], strides = [1, 1]} : vector<8x48xf32> to vector<8x16xf32>
    %131 = vector.extract_strided_slice %113 {offsets = [0, 32], sizes = [8, 16], strides = [1, 1]} : vector<8x48xf32> to vector<8x16xf32>
    %132 = arith.mulf %121, %131 : vector<8x16xf32>
    %133 = arith.addf %130, %132 : vector<8x16xf32>
    %134 = math.tanh %133 : vector<8x16xf32>
    %cst_38 = arith.constant 1.000000e+00 : f32
    %135 = vector.broadcast %cst_38 : f32 to vector<8x16xf32>
    %136 = arith.subf %135, %129 : vector<8x16xf32>
    %137 = arith.mulf %136, %134 : vector<8x16xf32>
    %138 = arith.mulf %129, %103 : vector<8x16xf32>
    %139 = arith.addf %137, %138 : vector<8x16xf32>
    %140 = vector.broadcast %108 : vector<8x1xf32> to vector<8x16xf32>
    %141 = arith.mulf %140, %139 : vector<8x16xf32>
    %142 = vector.shape_cast %141 : vector<8x16xf32> to vector<1x8x16xf32>
    %143 = arith.index_cast %c2_i32 : i32 to index
    %c0_39 = arith.constant 0 : index
    %c0_40 = arith.constant 0 : index
    %144 = vector.load %arg13[%143, %c0_39, %c0_40] : memref<8x8x16xf32, #tpu.memory_space<vmem>>, vector<1x8x16xf32>
    tpu.vector_store %arg13[%143, %c0_39, %c0_40], %142 {strides = array<i32>} : memref<8x8x16xf32, #tpu.memory_space<vmem>>, vector<1x8x16xf32>,
    %cst_41 = arith.constant 1.000000e+00 : f32
    %145 = vector.broadcast %cst_41 : f32 to vector<8x1xf32>
    %146 = arith.subf %145, %108 : vector<8x1xf32>
    %147 = vector.broadcast %146 : vector<8x1xf32> to vector<8x16xf32>
    %148 = arith.mulf %147, %103 : vector<8x16xf32>
    %149 = arith.addf %141, %148 : vector<8x16xf32>
    %c3_i32 = arith.constant 3 : i32
    %150 = arith.sitofp %c3_i32 : i32 to f32
    %151 = vector.broadcast %150 : f32 to vector<8x1xf32>
    %152 = arith.cmpf ogt, %2, %151 : vector<8x1xf32>
    %153 = arith.extui %152 : vector<8x1xi1> to vector<8x1xi32>
    %154 = arith.sitofp %153 : vector<8x1xi32> to vector<8x1xf32>
    %155 = arith.index_cast %c3_i32 : i32 to index
    %c0_42 = arith.constant 0 : index
    %c0_43 = arith.constant 0 : index
    %156 = vector.load %arg12[%155, %c0_42, %c0_43] : memref<8x8x96xf32, #tpu.memory_space<vmem>>, vector<1x8x96xf32>
    %157 = vector.shape_cast %156 : vector<1x8x96xf32> to vector<8x96xf32>
    %158 = vector.extract_strided_slice %157 {offsets = [0, 0], sizes = [8, 48], strides = [1, 1]} : vector<8x96xf32> to vector<8x48xf32>
    %cst_44 = arith.constant dense<0.000000e+00> : vector<8x48xf32>
    %159 = tpu.matmul %149, %9, %cst_44 {dimension_numbers = #tpu.dot_dimension_numbers<[1], [0], [0], [1], [0, 0, 1, 1], [], []>} : vector<8x16xf32>, vector<16x48xf32>, vector<8x48xf32> -> vector<8x48xf32>
    %160 = vector.extract_strided_slice %158 {offsets = [0, 0], sizes = [8, 16], strides = [1, 1]} : vector<8x48xf32> to vector<8x16xf32>
    %161 = vector.extract_strided_slice %159 {offsets = [0, 0], sizes = [8, 16], strides = [1, 1]} : vector<8x48xf32> to vector<8x16xf32>
    %162 = arith.addf %160, %161 : vector<8x16xf32>
    %163 = arith.negf %162 : vector<8x16xf32>
    %164 = math.exp %163 : vector<8x16xf32>
    %cst_45 = arith.constant 1.000000e+00 : f32
    %165 = vector.broadcast %cst_45 : f32 to vector<8x16xf32>
    %166 = arith.addf %165, %164 : vector<8x16xf32>
    %167 = arith.divf %165, %166 : vector<8x16xf32>
    %168 = vector.extract_strided_slice %158 {offsets = [0, 16], sizes = [8, 16], strides = [1, 1]} : vector<8x48xf32> to vector<8x16xf32>
    %169 = vector.extract_strided_slice %159 {offsets = [0, 16], sizes = [8, 16], strides = [1, 1]} : vector<8x48xf32> to vector<8x16xf32>
    %170 = arith.addf %168, %169 : vector<8x16xf32>
    %171 = arith.negf %170 : vector<8x16xf32>
    %172 = math.exp %171 : vector<8x16xf32>
    %cst_46 = arith.constant 1.000000e+00 : f32
    %173 = vector.broadcast %cst_46 : f32 to vector<8x16xf32>
    %174 = arith.addf %173, %172 : vector<8x16xf32>
    %175 = arith.divf %173, %174 : vector<8x16xf32>
    %176 = vector.extract_strided_slice %158 {offsets = [0, 32], sizes = [8, 16], strides = [1, 1]} : vector<8x48xf32> to vector<8x16xf32>
    %177 = vector.extract_strided_slice %159 {offsets = [0, 32], sizes = [8, 16], strides = [1, 1]} : vector<8x48xf32> to vector<8x16xf32>
    %178 = arith.mulf %167, %177 : vector<8x16xf32>
    %179 = arith.addf %176, %178 : vector<8x16xf32>
    %180 = math.tanh %179 : vector<8x16xf32>
    %cst_47 = arith.constant 1.000000e+00 : f32
    %181 = vector.broadcast %cst_47 : f32 to vector<8x16xf32>
    %182 = arith.subf %181, %175 : vector<8x16xf32>
    %183 = arith.mulf %182, %180 : vector<8x16xf32>
    %184 = arith.mulf %175, %149 : vector<8x16xf32>
    %185 = arith.addf %183, %184 : vector<8x16xf32>
    %186 = vector.broadcast %154 : vector<8x1xf32> to vector<8x16xf32>
    %187 = arith.mulf %186, %185 : vector<8x16xf32>
    %188 = vector.shape_cast %187 : vector<8x16xf32> to vector<1x8x16xf32>
    %189 = arith.index_cast %c3_i32 : i32 to index
    %c0_48 = arith.constant 0 : index
    %c0_49 = arith.constant 0 : index
    %190 = vector.load %arg13[%189, %c0_48, %c0_49] : memref<8x8x16xf32, #tpu.memory_space<vmem>>, vector<1x8x16xf32>
    tpu.vector_store %arg13[%189, %c0_48, %c0_49], %188 {strides = array<i32>} : memref<8x8x16xf32, #tpu.memory_space<vmem>>, vector<1x8x16xf32>,
    %cst_50 = arith.constant 1.000000e+00 : f32
    %191 = vector.broadcast %cst_50 : f32 to vector<8x1xf32>
    %192 = arith.subf %191, %154 : vector<8x1xf32>
    %193 = vector.broadcast %192 : vector<8x1xf32> to vector<8x16xf32>
    %194 = arith.mulf %193, %149 : vector<8x16xf32>
    %195 = arith.addf %187, %194 : vector<8x16xf32>
    %c4_i32 = arith.constant 4 : i32
    %196 = arith.sitofp %c4_i32 : i32 to f32
    %197 = vector.broadcast %196 : f32 to vector<8x1xf32>
    %198 = arith.cmpf ogt, %2, %197 : vector<8x1xf32>
    %199 = arith.extui %198 : vector<8x1xi1> to vector<8x1xi32>
    %200 = arith.sitofp %199 : vector<8x1xi32> to vector<8x1xf32>
    %201 = arith.index_cast %c4_i32 : i32 to index
    %c0_51 = arith.constant 0 : index
    %c0_52 = arith.constant 0 : index
    %202 = vector.load %arg12[%201, %c0_51, %c0_52] : memref<8x8x96xf32, #tpu.memory_space<vmem>>, vector<1x8x96xf32>
    %203 = vector.shape_cast %202 : vector<1x8x96xf32> to vector<8x96xf32>
    %204 = vector.extract_strided_slice %203 {offsets = [0, 0], sizes = [8, 48], strides = [1, 1]} : vector<8x96xf32> to vector<8x48xf32>
    %cst_53 = arith.constant dense<0.000000e+00> : vector<8x48xf32>
    %205 = tpu.matmul %195, %9, %cst_53 {dimension_numbers = #tpu.dot_dimension_numbers<[1], [0], [0], [1], [0, 0, 1, 1], [], []>} : vector<8x16xf32>, vector<16x48xf32>, vector<8x48xf32> -> vector<8x48xf32>
    %206 = vector.extract_strided_slice %204 {offsets = [0, 0], sizes = [8, 16], strides = [1, 1]} : vector<8x48xf32> to vector<8x16xf32>
    %207 = vector.extract_strided_slice %205 {offsets = [0, 0], sizes = [8, 16], strides = [1, 1]} : vector<8x48xf32> to vector<8x16xf32>
    %208 = arith.addf %206, %207 : vector<8x16xf32>
    %209 = arith.negf %208 : vector<8x16xf32>
    %210 = math.exp %209 : vector<8x16xf32>
    %cst_54 = arith.constant 1.000000e+00 : f32
    %211 = vector.broadcast %cst_54 : f32 to vector<8x16xf32>
    %212 = arith.addf %211, %210 : vector<8x16xf32>
    %213 = arith.divf %211, %212 : vector<8x16xf32>
    %214 = vector.extract_strided_slice %204 {offsets = [0, 16], sizes = [8, 16], strides = [1, 1]} : vector<8x48xf32> to vector<8x16xf32>
    %215 = vector.extract_strided_slice %205 {offsets = [0, 16], sizes = [8, 16], strides = [1, 1]} : vector<8x48xf32> to vector<8x16xf32>
    %216 = arith.addf %214, %215 : vector<8x16xf32>
    %217 = arith.negf %216 : vector<8x16xf32>
    %218 = math.exp %217 : vector<8x16xf32>
    %cst_55 = arith.constant 1.000000e+00 : f32
    %219 = vector.broadcast %cst_55 : f32 to vector<8x16xf32>
    %220 = arith.addf %219, %218 : vector<8x16xf32>
    %221 = arith.divf %219, %220 : vector<8x16xf32>
    %222 = vector.extract_strided_slice %204 {offsets = [0, 32], sizes = [8, 16], strides = [1, 1]} : vector<8x48xf32> to vector<8x16xf32>
    %223 = vector.extract_strided_slice %205 {offsets = [0, 32], sizes = [8, 16], strides = [1, 1]} : vector<8x48xf32> to vector<8x16xf32>
    %224 = arith.mulf %213, %223 : vector<8x16xf32>
    %225 = arith.addf %222, %224 : vector<8x16xf32>
    %226 = math.tanh %225 : vector<8x16xf32>
    %cst_56 = arith.constant 1.000000e+00 : f32
    %227 = vector.broadcast %cst_56 : f32 to vector<8x16xf32>
    %228 = arith.subf %227, %221 : vector<8x16xf32>
    %229 = arith.mulf %228, %226 : vector<8x16xf32>
    %230 = arith.mulf %221, %195 : vector<8x16xf32>
    %231 = arith.addf %229, %230 : vector<8x16xf32>
    %232 = vector.broadcast %200 : vector<8x1xf32> to vector<8x16xf32>
    %233 = arith.mulf %232, %231 : vector<8x16xf32>
    %234 = vector.shape_cast %233 : vector<8x16xf32> to vector<1x8x16xf32>
    %235 = arith.index_cast %c4_i32 : i32 to index
    %c0_57 = arith.constant 0 : index
    %c0_58 = arith.constant 0 : index
    %236 = vector.load %arg13[%235, %c0_57, %c0_58] : memref<8x8x16xf32, #tpu.memory_space<vmem>>, vector<1x8x16xf32>
    tpu.vector_store %arg13[%235, %c0_57, %c0_58], %234 {strides = array<i32>} : memref<8x8x16xf32, #tpu.memory_space<vmem>>, vector<1x8x16xf32>,
    %cst_59 = arith.constant 1.000000e+00 : f32
    %237 = vector.broadcast %cst_59 : f32 to vector<8x1xf32>
    %238 = arith.subf %237, %200 : vector<8x1xf32>
    %239 = vector.broadcast %238 : vector<8x1xf32> to vector<8x16xf32>
    %240 = arith.mulf %239, %195 : vector<8x16xf32>
    %241 = arith.addf %233, %240 : vector<8x16xf32>
    %c5_i32 = arith.constant 5 : i32
    %242 = arith.sitofp %c5_i32 : i32 to f32
    %243 = vector.broadcast %242 : f32 to vector<8x1xf32>
    %244 = arith.cmpf ogt, %2, %243 : vector<8x1xf32>
    %245 = arith.extui %244 : vector<8x1xi1> to vector<8x1xi32>
    %246 = arith.sitofp %245 : vector<8x1xi32> to vector<8x1xf32>
    %247 = arith.index_cast %c5_i32 : i32 to index
    %c0_60 = arith.constant 0 : index
    %c0_61 = arith.constant 0 : index
    %248 = vector.load %arg12[%247, %c0_60, %c0_61] : memref<8x8x96xf32, #tpu.memory_space<vmem>>, vector<1x8x96xf32>
    %249 = vector.shape_cast %248 : vector<1x8x96xf32> to vector<8x96xf32>
    %250 = vector.extract_strided_slice %249 {offsets = [0, 0], sizes = [8, 48], strides = [1, 1]} : vector<8x96xf32> to vector<8x48xf32>
    %cst_62 = arith.constant dense<0.000000e+00> : vector<8x48xf32>
    %251 = tpu.matmul %241, %9, %cst_62 {dimension_numbers = #tpu.dot_dimension_numbers<[1], [0], [0], [1], [0, 0, 1, 1], [], []>} : vector<8x16xf32>, vector<16x48xf32>, vector<8x48xf32> -> vector<8x48xf32>
    %252 = vector.extract_strided_slice %250 {offsets = [0, 0], sizes = [8, 16], strides = [1, 1]} : vector<8x48xf32> to vector<8x16xf32>
    %253 = vector.extract_strided_slice %251 {offsets = [0, 0], sizes = [8, 16], strides = [1, 1]} : vector<8x48xf32> to vector<8x16xf32>
    %254 = arith.addf %252, %253 : vector<8x16xf32>
    %255 = arith.negf %254 : vector<8x16xf32>
    %256 = math.exp %255 : vector<8x16xf32>
    %cst_63 = arith.constant 1.000000e+00 : f32
    %257 = vector.broadcast %cst_63 : f32 to vector<8x16xf32>
    %258 = arith.addf %257, %256 : vector<8x16xf32>
    %259 = arith.divf %257, %258 : vector<8x16xf32>
    %260 = vector.extract_strided_slice %250 {offsets = [0, 16], sizes = [8, 16], strides = [1, 1]} : vector<8x48xf32> to vector<8x16xf32>
    %261 = vector.extract_strided_slice %251 {offsets = [0, 16], sizes = [8, 16], strides = [1, 1]} : vector<8x48xf32> to vector<8x16xf32>
    %262 = arith.addf %260, %261 : vector<8x16xf32>
    %263 = arith.negf %262 : vector<8x16xf32>
    %264 = math.exp %263 : vector<8x16xf32>
    %cst_64 = arith.constant 1.000000e+00 : f32
    %265 = vector.broadcast %cst_64 : f32 to vector<8x16xf32>
    %266 = arith.addf %265, %264 : vector<8x16xf32>
    %267 = arith.divf %265, %266 : vector<8x16xf32>
    %268 = vector.extract_strided_slice %250 {offsets = [0, 32], sizes = [8, 16], strides = [1, 1]} : vector<8x48xf32> to vector<8x16xf32>
    %269 = vector.extract_strided_slice %251 {offsets = [0, 32], sizes = [8, 16], strides = [1, 1]} : vector<8x48xf32> to vector<8x16xf32>
    %270 = arith.mulf %259, %269 : vector<8x16xf32>
    %271 = arith.addf %268, %270 : vector<8x16xf32>
    %272 = math.tanh %271 : vector<8x16xf32>
    %cst_65 = arith.constant 1.000000e+00 : f32
    %273 = vector.broadcast %cst_65 : f32 to vector<8x16xf32>
    %274 = arith.subf %273, %267 : vector<8x16xf32>
    %275 = arith.mulf %274, %272 : vector<8x16xf32>
    %276 = arith.mulf %267, %241 : vector<8x16xf32>
    %277 = arith.addf %275, %276 : vector<8x16xf32>
    %278 = vector.broadcast %246 : vector<8x1xf32> to vector<8x16xf32>
    %279 = arith.mulf %278, %277 : vector<8x16xf32>
    %280 = vector.shape_cast %279 : vector<8x16xf32> to vector<1x8x16xf32>
    %281 = arith.index_cast %c5_i32 : i32 to index
    %c0_66 = arith.constant 0 : index
    %c0_67 = arith.constant 0 : index
    %282 = vector.load %arg13[%281, %c0_66, %c0_67] : memref<8x8x16xf32, #tpu.memory_space<vmem>>, vector<1x8x16xf32>
    tpu.vector_store %arg13[%281, %c0_66, %c0_67], %280 {strides = array<i32>} : memref<8x8x16xf32, #tpu.memory_space<vmem>>, vector<1x8x16xf32>,
    %cst_68 = arith.constant 1.000000e+00 : f32
    %283 = vector.broadcast %cst_68 : f32 to vector<8x1xf32>
    %284 = arith.subf %283, %246 : vector<8x1xf32>
    %285 = vector.broadcast %284 : vector<8x1xf32> to vector<8x16xf32>
    %286 = arith.mulf %285, %241 : vector<8x16xf32>
    %287 = arith.addf %279, %286 : vector<8x16xf32>
    %c6_i32 = arith.constant 6 : i32
    %288 = arith.sitofp %c6_i32 : i32 to f32
    %289 = vector.broadcast %288 : f32 to vector<8x1xf32>
    %290 = arith.cmpf ogt, %2, %289 : vector<8x1xf32>
    %291 = arith.extui %290 : vector<8x1xi1> to vector<8x1xi32>
    %292 = arith.sitofp %291 : vector<8x1xi32> to vector<8x1xf32>
    %293 = arith.index_cast %c6_i32 : i32 to index
    %c0_69 = arith.constant 0 : index
    %c0_70 = arith.constant 0 : index
    %294 = vector.load %arg12[%293, %c0_69, %c0_70] : memref<8x8x96xf32, #tpu.memory_space<vmem>>, vector<1x8x96xf32>
    %295 = vector.shape_cast %294 : vector<1x8x96xf32> to vector<8x96xf32>
    %296 = vector.extract_strided_slice %295 {offsets = [0, 0], sizes = [8, 48], strides = [1, 1]} : vector<8x96xf32> to vector<8x48xf32>
    %cst_71 = arith.constant dense<0.000000e+00> : vector<8x48xf32>
    %297 = tpu.matmul %287, %9, %cst_71 {dimension_numbers = #tpu.dot_dimension_numbers<[1], [0], [0], [1], [0, 0, 1, 1], [], []>} : vector<8x16xf32>, vector<16x48xf32>, vector<8x48xf32> -> vector<8x48xf32>
    %298 = vector.extract_strided_slice %296 {offsets = [0, 0], sizes = [8, 16], strides = [1, 1]} : vector<8x48xf32> to vector<8x16xf32>
    %299 = vector.extract_strided_slice %297 {offsets = [0, 0], sizes = [8, 16], strides = [1, 1]} : vector<8x48xf32> to vector<8x16xf32>
    %300 = arith.addf %298, %299 : vector<8x16xf32>
    %301 = arith.negf %300 : vector<8x16xf32>
    %302 = math.exp %301 : vector<8x16xf32>
    %cst_72 = arith.constant 1.000000e+00 : f32
    %303 = vector.broadcast %cst_72 : f32 to vector<8x16xf32>
    %304 = arith.addf %303, %302 : vector<8x16xf32>
    %305 = arith.divf %303, %304 : vector<8x16xf32>
    %306 = vector.extract_strided_slice %296 {offsets = [0, 16], sizes = [8, 16], strides = [1, 1]} : vector<8x48xf32> to vector<8x16xf32>
    %307 = vector.extract_strided_slice %297 {offsets = [0, 16], sizes = [8, 16], strides = [1, 1]} : vector<8x48xf32> to vector<8x16xf32>
    %308 = arith.addf %306, %307 : vector<8x16xf32>
    %309 = arith.negf %308 : vector<8x16xf32>
    %310 = math.exp %309 : vector<8x16xf32>
    %cst_73 = arith.constant 1.000000e+00 : f32
    %311 = vector.broadcast %cst_73 : f32 to vector<8x16xf32>
    %312 = arith.addf %311, %310 : vector<8x16xf32>
    %313 = arith.divf %311, %312 : vector<8x16xf32>
    %314 = vector.extract_strided_slice %296 {offsets = [0, 32], sizes = [8, 16], strides = [1, 1]} : vector<8x48xf32> to vector<8x16xf32>
    %315 = vector.extract_strided_slice %297 {offsets = [0, 32], sizes = [8, 16], strides = [1, 1]} : vector<8x48xf32> to vector<8x16xf32>
    %316 = arith.mulf %305, %315 : vector<8x16xf32>
    %317 = arith.addf %314, %316 : vector<8x16xf32>
    %318 = math.tanh %317 : vector<8x16xf32>
    %cst_74 = arith.constant 1.000000e+00 : f32
    %319 = vector.broadcast %cst_74 : f32 to vector<8x16xf32>
    %320 = arith.subf %319, %313 : vector<8x16xf32>
    %321 = arith.mulf %320, %318 : vector<8x16xf32>
    %322 = arith.mulf %313, %287 : vector<8x16xf32>
    %323 = arith.addf %321, %322 : vector<8x16xf32>
    %324 = vector.broadcast %292 : vector<8x1xf32> to vector<8x16xf32>
    %325 = arith.mulf %324, %323 : vector<8x16xf32>
    %326 = vector.shape_cast %325 : vector<8x16xf32> to vector<1x8x16xf32>
    %327 = arith.index_cast %c6_i32 : i32 to index
    %c0_75 = arith.constant 0 : index
    %c0_76 = arith.constant 0 : index
    %328 = vector.load %arg13[%327, %c0_75, %c0_76] : memref<8x8x16xf32, #tpu.memory_space<vmem>>, vector<1x8x16xf32>
    tpu.vector_store %arg13[%327, %c0_75, %c0_76], %326 {strides = array<i32>} : memref<8x8x16xf32, #tpu.memory_space<vmem>>, vector<1x8x16xf32>,
    %cst_77 = arith.constant 1.000000e+00 : f32
    %329 = vector.broadcast %cst_77 : f32 to vector<8x1xf32>
    %330 = arith.subf %329, %292 : vector<8x1xf32>
    %331 = vector.broadcast %330 : vector<8x1xf32> to vector<8x16xf32>
    %332 = arith.mulf %331, %287 : vector<8x16xf32>
    %333 = arith.addf %325, %332 : vector<8x16xf32>
    %c7_i32 = arith.constant 7 : i32
    %334 = arith.sitofp %c7_i32 : i32 to f32
    %335 = vector.broadcast %334 : f32 to vector<8x1xf32>
    %336 = arith.cmpf ogt, %2, %335 : vector<8x1xf32>
    %337 = arith.extui %336 : vector<8x1xi1> to vector<8x1xi32>
    %338 = arith.sitofp %337 : vector<8x1xi32> to vector<8x1xf32>
    %339 = arith.index_cast %c7_i32 : i32 to index
    %c0_78 = arith.constant 0 : index
    %c0_79 = arith.constant 0 : index
    %340 = vector.load %arg12[%339, %c0_78, %c0_79] : memref<8x8x96xf32, #tpu.memory_space<vmem>>, vector<1x8x96xf32>
    %341 = vector.shape_cast %340 : vector<1x8x96xf32> to vector<8x96xf32>
    %342 = vector.extract_strided_slice %341 {offsets = [0, 0], sizes = [8, 48], strides = [1, 1]} : vector<8x96xf32> to vector<8x48xf32>
    %cst_80 = arith.constant dense<0.000000e+00> : vector<8x48xf32>
    %343 = tpu.matmul %333, %9, %cst_80 {dimension_numbers = #tpu.dot_dimension_numbers<[1], [0], [0], [1], [0, 0, 1, 1], [], []>} : vector<8x16xf32>, vector<16x48xf32>, vector<8x48xf32> -> vector<8x48xf32>
    %344 = vector.extract_strided_slice %342 {offsets = [0, 0], sizes = [8, 16], strides = [1, 1]} : vector<8x48xf32> to vector<8x16xf32>
    %345 = vector.extract_strided_slice %343 {offsets = [0, 0], sizes = [8, 16], strides = [1, 1]} : vector<8x48xf32> to vector<8x16xf32>
    %346 = arith.addf %344, %345 : vector<8x16xf32>
    %347 = arith.negf %346 : vector<8x16xf32>
    %348 = math.exp %347 : vector<8x16xf32>
    %cst_81 = arith.constant 1.000000e+00 : f32
    %349 = vector.broadcast %cst_81 : f32 to vector<8x16xf32>
    %350 = arith.addf %349, %348 : vector<8x16xf32>
    %351 = arith.divf %349, %350 : vector<8x16xf32>
    %352 = vector.extract_strided_slice %342 {offsets = [0, 16], sizes = [8, 16], strides = [1, 1]} : vector<8x48xf32> to vector<8x16xf32>
    %353 = vector.extract_strided_slice %343 {offsets = [0, 16], sizes = [8, 16], strides = [1, 1]} : vector<8x48xf32> to vector<8x16xf32>
    %354 = arith.addf %352, %353 : vector<8x16xf32>
    %355 = arith.negf %354 : vector<8x16xf32>
    %356 = math.exp %355 : vector<8x16xf32>
    %cst_82 = arith.constant 1.000000e+00 : f32
    %357 = vector.broadcast %cst_82 : f32 to vector<8x16xf32>
    %358 = arith.addf %357, %356 : vector<8x16xf32>
    %359 = arith.divf %357, %358 : vector<8x16xf32>
    %360 = vector.extract_strided_slice %342 {offsets = [0, 32], sizes = [8, 16], strides = [1, 1]} : vector<8x48xf32> to vector<8x16xf32>
    %361 = vector.extract_strided_slice %343 {offsets = [0, 32], sizes = [8, 16], strides = [1, 1]} : vector<8x48xf32> to vector<8x16xf32>
    %362 = arith.mulf %351, %361 : vector<8x16xf32>
    %363 = arith.addf %360, %362 : vector<8x16xf32>
    %364 = math.tanh %363 : vector<8x16xf32>
    %cst_83 = arith.constant 1.000000e+00 : f32
    %365 = vector.broadcast %cst_83 : f32 to vector<8x16xf32>
    %366 = arith.subf %365, %359 : vector<8x16xf32>
    %367 = arith.mulf %366, %364 : vector<8x16xf32>
    %368 = arith.mulf %359, %333 : vector<8x16xf32>
    %369 = arith.addf %367, %368 : vector<8x16xf32>
    %370 = vector.broadcast %338 : vector<8x1xf32> to vector<8x16xf32>
    %371 = arith.mulf %370, %369 : vector<8x16xf32>
    %372 = vector.shape_cast %371 : vector<8x16xf32> to vector<1x8x16xf32>
    %373 = arith.index_cast %c7_i32 : i32 to index
    %c0_84 = arith.constant 0 : index
    %c0_85 = arith.constant 0 : index
    %374 = vector.load %arg13[%373, %c0_84, %c0_85] : memref<8x8x16xf32, #tpu.memory_space<vmem>>, vector<1x8x16xf32>
    tpu.vector_store %arg13[%373, %c0_84, %c0_85], %372 {strides = array<i32>} : memref<8x8x16xf32, #tpu.memory_space<vmem>>, vector<1x8x16xf32>,
    %cst_86 = arith.constant 1.000000e+00 : f32
    %375 = vector.broadcast %cst_86 : f32 to vector<8x1xf32>
    %376 = arith.subf %375, %338 : vector<8x1xf32>
    %377 = vector.broadcast %376 : vector<8x1xf32> to vector<8x16xf32>
    %378 = arith.mulf %377, %333 : vector<8x16xf32>
    %379 = arith.addf %371, %378 : vector<8x16xf32>
    %c8_i32 = arith.constant 8 : i32
    %c0_i32_87 = arith.constant 0 : i32
    %c7_i32_88 = arith.constant 7 : i32
    %380 = arith.subi %c7_i32_88, %c0_i32_87 : i32
    %381 = arith.sitofp %380 : i32 to f32
    %382 = vector.broadcast %381 : f32 to vector<8x1xf32>
    %383 = arith.cmpf ogt, %2, %382 : vector<8x1xf32>
    %384 = arith.extui %383 : vector<8x1xi1> to vector<8x1xi32>
    %385 = arith.sitofp %384 : vector<8x1xi32> to vector<8x1xf32>
    %386 = arith.index_cast %380 : i32 to index
    %c0_89 = arith.constant 0 : index
    %c0_90 = arith.constant 0 : index
    %387 = vector.load %arg12[%386, %c0_89, %c0_90] : memref<8x8x96xf32, #tpu.memory_space<vmem>>, vector<1x8x96xf32>
    %388 = vector.shape_cast %387 : vector<1x8x96xf32> to vector<8x96xf32>
    %389 = vector.extract_strided_slice %388 {offsets = [0, 48], sizes = [8, 48], strides = [1, 1]} : vector<8x96xf32> to vector<8x48xf32>
    %cst_91 = arith.constant dense<0.000000e+00> : vector<8x48xf32>
    %390 = tpu.matmul %11, %10, %cst_91 {dimension_numbers = #tpu.dot_dimension_numbers<[1], [0], [0], [1], [0, 0, 1, 1], [], []>} : vector<8x16xf32>, vector<16x48xf32>, vector<8x48xf32> -> vector<8x48xf32>
    %391 = vector.extract_strided_slice %389 {offsets = [0, 0], sizes = [8, 16], strides = [1, 1]} : vector<8x48xf32> to vector<8x16xf32>
    %392 = vector.extract_strided_slice %390 {offsets = [0, 0], sizes = [8, 16], strides = [1, 1]} : vector<8x48xf32> to vector<8x16xf32>
    %393 = arith.addf %391, %392 : vector<8x16xf32>
    %394 = arith.negf %393 : vector<8x16xf32>
    %395 = math.exp %394 : vector<8x16xf32>
    %cst_92 = arith.constant 1.000000e+00 : f32
    %396 = vector.broadcast %cst_92 : f32 to vector<8x16xf32>
    %397 = arith.addf %396, %395 : vector<8x16xf32>
    %398 = arith.divf %396, %397 : vector<8x16xf32>
    %399 = vector.extract_strided_slice %389 {offsets = [0, 16], sizes = [8, 16], strides = [1, 1]} : vector<8x48xf32> to vector<8x16xf32>
    %400 = vector.extract_strided_slice %390 {offsets = [0, 16], sizes = [8, 16], strides = [1, 1]} : vector<8x48xf32> to vector<8x16xf32>
    %401 = arith.addf %399, %400 : vector<8x16xf32>
    %402 = arith.negf %401 : vector<8x16xf32>
    %403 = math.exp %402 : vector<8x16xf32>
    %cst_93 = arith.constant 1.000000e+00 : f32
    %404 = vector.broadcast %cst_93 : f32 to vector<8x16xf32>
    %405 = arith.addf %404, %403 : vector<8x16xf32>
    %406 = arith.divf %404, %405 : vector<8x16xf32>
    %407 = vector.extract_strided_slice %389 {offsets = [0, 32], sizes = [8, 16], strides = [1, 1]} : vector<8x48xf32> to vector<8x16xf32>
    %408 = vector.extract_strided_slice %390 {offsets = [0, 32], sizes = [8, 16], strides = [1, 1]} : vector<8x48xf32> to vector<8x16xf32>
    %409 = arith.mulf %398, %408 : vector<8x16xf32>
    %410 = arith.addf %407, %409 : vector<8x16xf32>
    %411 = math.tanh %410 : vector<8x16xf32>
    %cst_94 = arith.constant 1.000000e+00 : f32
    %412 = vector.broadcast %cst_94 : f32 to vector<8x16xf32>
    %413 = arith.subf %412, %406 : vector<8x16xf32>
    %414 = arith.mulf %413, %411 : vector<8x16xf32>
    %415 = arith.mulf %406, %11 : vector<8x16xf32>
    %416 = arith.addf %414, %415 : vector<8x16xf32>
    %417 = vector.broadcast %385 : vector<8x1xf32> to vector<8x16xf32>
    %418 = arith.mulf %417, %416 : vector<8x16xf32>
    %419 = vector.shape_cast %418 : vector<8x16xf32> to vector<1x8x16xf32>
    %420 = arith.index_cast %380 : i32 to index
    %c0_95 = arith.constant 0 : index
    %c0_96 = arith.constant 0 : index
    %421 = vector.load %arg14[%420, %c0_95, %c0_96] : memref<8x8x16xf32, #tpu.memory_space<vmem>>, vector<1x8x16xf32>
    tpu.vector_store %arg14[%420, %c0_95, %c0_96], %419 {strides = array<i32>} : memref<8x8x16xf32, #tpu.memory_space<vmem>>, vector<1x8x16xf32>,
    %cst_97 = arith.constant 1.000000e+00 : f32
    %422 = vector.broadcast %cst_97 : f32 to vector<8x1xf32>
    %423 = arith.subf %422, %385 : vector<8x1xf32>
    %424 = vector.broadcast %423 : vector<8x1xf32> to vector<8x16xf32>
    %425 = arith.mulf %424, %11 : vector<8x16xf32>
    %426 = arith.addf %418, %425 : vector<8x16xf32>
    %c1_i32_98 = arith.constant 1 : i32
    %c7_i32_99 = arith.constant 7 : i32
    %427 = arith.subi %c7_i32_99, %c1_i32_98 : i32
    %428 = arith.sitofp %427 : i32 to f32
    %429 = vector.broadcast %428 : f32 to vector<8x1xf32>
    %430 = arith.cmpf ogt, %2, %429 : vector<8x1xf32>
    %431 = arith.extui %430 : vector<8x1xi1> to vector<8x1xi32>
    %432 = arith.sitofp %431 : vector<8x1xi32> to vector<8x1xf32>
    %433 = arith.index_cast %427 : i32 to index
    %c0_100 = arith.constant 0 : index
    %c0_101 = arith.constant 0 : index
    %434 = vector.load %arg12[%433, %c0_100, %c0_101] : memref<8x8x96xf32, #tpu.memory_space<vmem>>, vector<1x8x96xf32>
    %435 = vector.shape_cast %434 : vector<1x8x96xf32> to vector<8x96xf32>
    %436 = vector.extract_strided_slice %435 {offsets = [0, 48], sizes = [8, 48], strides = [1, 1]} : vector<8x96xf32> to vector<8x48xf32>
    %cst_102 = arith.constant dense<0.000000e+00> : vector<8x48xf32>
    %437 = tpu.matmul %426, %10, %cst_102 {dimension_numbers = #tpu.dot_dimension_numbers<[1], [0], [0], [1], [0, 0, 1, 1], [], []>} : vector<8x16xf32>, vector<16x48xf32>, vector<8x48xf32> -> vector<8x48xf32>
    %438 = vector.extract_strided_slice %436 {offsets = [0, 0], sizes = [8, 16], strides = [1, 1]} : vector<8x48xf32> to vector<8x16xf32>
    %439 = vector.extract_strided_slice %437 {offsets = [0, 0], sizes = [8, 16], strides = [1, 1]} : vector<8x48xf32> to vector<8x16xf32>
    %440 = arith.addf %438, %439 : vector<8x16xf32>
    %441 = arith.negf %440 : vector<8x16xf32>
    %442 = math.exp %441 : vector<8x16xf32>
    %cst_103 = arith.constant 1.000000e+00 : f32
    %443 = vector.broadcast %cst_103 : f32 to vector<8x16xf32>
    %444 = arith.addf %443, %442 : vector<8x16xf32>
    %445 = arith.divf %443, %444 : vector<8x16xf32>
    %446 = vector.extract_strided_slice %436 {offsets = [0, 16], sizes = [8, 16], strides = [1, 1]} : vector<8x48xf32> to vector<8x16xf32>
    %447 = vector.extract_strided_slice %437 {offsets = [0, 16], sizes = [8, 16], strides = [1, 1]} : vector<8x48xf32> to vector<8x16xf32>
    %448 = arith.addf %446, %447 : vector<8x16xf32>
    %449 = arith.negf %448 : vector<8x16xf32>
    %450 = math.exp %449 : vector<8x16xf32>
    %cst_104 = arith.constant 1.000000e+00 : f32
    %451 = vector.broadcast %cst_104 : f32 to vector<8x16xf32>
    %452 = arith.addf %451, %450 : vector<8x16xf32>
    %453 = arith.divf %451, %452 : vector<8x16xf32>
    %454 = vector.extract_strided_slice %436 {offsets = [0, 32], sizes = [8, 16], strides = [1, 1]} : vector<8x48xf32> to vector<8x16xf32>
    %455 = vector.extract_strided_slice %437 {offsets = [0, 32], sizes = [8, 16], strides = [1, 1]} : vector<8x48xf32> to vector<8x16xf32>
    %456 = arith.mulf %445, %455 : vector<8x16xf32>
    %457 = arith.addf %454, %456 : vector<8x16xf32>
    %458 = math.tanh %457 : vector<8x16xf32>
    %cst_105 = arith.constant 1.000000e+00 : f32
    %459 = vector.broadcast %cst_105 : f32 to vector<8x16xf32>
    %460 = arith.subf %459, %453 : vector<8x16xf32>
    %461 = arith.mulf %460, %458 : vector<8x16xf32>
    %462 = arith.mulf %453, %426 : vector<8x16xf32>
    %463 = arith.addf %461, %462 : vector<8x16xf32>
    %464 = vector.broadcast %432 : vector<8x1xf32> to vector<8x16xf32>
    %465 = arith.mulf %464, %463 : vector<8x16xf32>
    %466 = vector.shape_cast %465 : vector<8x16xf32> to vector<1x8x16xf32>
    %467 = arith.index_cast %427 : i32 to index
    %c0_106 = arith.constant 0 : index
    %c0_107 = arith.constant 0 : index
    %468 = vector.load %arg14[%467, %c0_106, %c0_107] : memref<8x8x16xf32, #tpu.memory_space<vmem>>, vector<1x8x16xf32>
    tpu.vector_store %arg14[%467, %c0_106, %c0_107], %466 {strides = array<i32>} : memref<8x8x16xf32, #tpu.memory_space<vmem>>, vector<1x8x16xf32>,
    %cst_108 = arith.constant 1.000000e+00 : f32
    %469 = vector.broadcast %cst_108 : f32 to vector<8x1xf32>
    %470 = arith.subf %469, %432 : vector<8x1xf32>
    %471 = vector.broadcast %470 : vector<8x1xf32> to vector<8x16xf32>
    %472 = arith.mulf %471, %426 : vector<8x16xf32>
    %473 = arith.addf %465, %472 : vector<8x16xf32>
    %c2_i32_109 = arith.constant 2 : i32
    %c7_i32_110 = arith.constant 7 : i32
    %474 = arith.subi %c7_i32_110, %c2_i32_109 : i32
    %475 = arith.sitofp %474 : i32 to f32
    %476 = vector.broadcast %475 : f32 to vector<8x1xf32>
    %477 = arith.cmpf ogt, %2, %476 : vector<8x1xf32>
    %478 = arith.extui %477 : vector<8x1xi1> to vector<8x1xi32>
    %479 = arith.sitofp %478 : vector<8x1xi32> to vector<8x1xf32>
    %480 = arith.index_cast %474 : i32 to index
    %c0_111 = arith.constant 0 : index
    %c0_112 = arith.constant 0 : index
    %481 = vector.load %arg12[%480, %c0_111, %c0_112] : memref<8x8x96xf32, #tpu.memory_space<vmem>>, vector<1x8x96xf32>
    %482 = vector.shape_cast %481 : vector<1x8x96xf32> to vector<8x96xf32>
    %483 = vector.extract_strided_slice %482 {offsets = [0, 48], sizes = [8, 48], strides = [1, 1]} : vector<8x96xf32> to vector<8x48xf32>
    %cst_113 = arith.constant dense<0.000000e+00> : vector<8x48xf32>
    %484 = tpu.matmul %473, %10, %cst_113 {dimension_numbers = #tpu.dot_dimension_numbers<[1], [0], [0], [1], [0, 0, 1, 1], [], []>} : vector<8x16xf32>, vector<16x48xf32>, vector<8x48xf32> -> vector<8x48xf32>
    %485 = vector.extract_strided_slice %483 {offsets = [0, 0], sizes = [8, 16], strides = [1, 1]} : vector<8x48xf32> to vector<8x16xf32>
    %486 = vector.extract_strided_slice %484 {offsets = [0, 0], sizes = [8, 16], strides = [1, 1]} : vector<8x48xf32> to vector<8x16xf32>
    %487 = arith.addf %485, %486 : vector<8x16xf32>
    %488 = arith.negf %487 : vector<8x16xf32>
    %489 = math.exp %488 : vector<8x16xf32>
    %cst_114 = arith.constant 1.000000e+00 : f32
    %490 = vector.broadcast %cst_114 : f32 to vector<8x16xf32>
    %491 = arith.addf %490, %489 : vector<8x16xf32>
    %492 = arith.divf %490, %491 : vector<8x16xf32>
    %493 = vector.extract_strided_slice %483 {offsets = [0, 16], sizes = [8, 16], strides = [1, 1]} : vector<8x48xf32> to vector<8x16xf32>
    %494 = vector.extract_strided_slice %484 {offsets = [0, 16], sizes = [8, 16], strides = [1, 1]} : vector<8x48xf32> to vector<8x16xf32>
    %495 = arith.addf %493, %494 : vector<8x16xf32>
    %496 = arith.negf %495 : vector<8x16xf32>
    %497 = math.exp %496 : vector<8x16xf32>
    %cst_115 = arith.constant 1.000000e+00 : f32
    %498 = vector.broadcast %cst_115 : f32 to vector<8x16xf32>
    %499 = arith.addf %498, %497 : vector<8x16xf32>
    %500 = arith.divf %498, %499 : vector<8x16xf32>
    %501 = vector.extract_strided_slice %483 {offsets = [0, 32], sizes = [8, 16], strides = [1, 1]} : vector<8x48xf32> to vector<8x16xf32>
    %502 = vector.extract_strided_slice %484 {offsets = [0, 32], sizes = [8, 16], strides = [1, 1]} : vector<8x48xf32> to vector<8x16xf32>
    %503 = arith.mulf %492, %502 : vector<8x16xf32>
    %504 = arith.addf %501, %503 : vector<8x16xf32>
    %505 = math.tanh %504 : vector<8x16xf32>
    %cst_116 = arith.constant 1.000000e+00 : f32
    %506 = vector.broadcast %cst_116 : f32 to vector<8x16xf32>
    %507 = arith.subf %506, %500 : vector<8x16xf32>
    %508 = arith.mulf %507, %505 : vector<8x16xf32>
    %509 = arith.mulf %500, %473 : vector<8x16xf32>
    %510 = arith.addf %508, %509 : vector<8x16xf32>
    %511 = vector.broadcast %479 : vector<8x1xf32> to vector<8x16xf32>
    %512 = arith.mulf %511, %510 : vector<8x16xf32>
    %513 = vector.shape_cast %512 : vector<8x16xf32> to vector<1x8x16xf32>
    %514 = arith.index_cast %474 : i32 to index
    %c0_117 = arith.constant 0 : index
    %c0_118 = arith.constant 0 : index
    %515 = vector.load %arg14[%514, %c0_117, %c0_118] : memref<8x8x16xf32, #tpu.memory_space<vmem>>, vector<1x8x16xf32>
    tpu.vector_store %arg14[%514, %c0_117, %c0_118], %513 {strides = array<i32>} : memref<8x8x16xf32, #tpu.memory_space<vmem>>, vector<1x8x16xf32>,
    %cst_119 = arith.constant 1.000000e+00 : f32
    %516 = vector.broadcast %cst_119 : f32 to vector<8x1xf32>
    %517 = arith.subf %516, %479 : vector<8x1xf32>
    %518 = vector.broadcast %517 : vector<8x1xf32> to vector<8x16xf32>
    %519 = arith.mulf %518, %473 : vector<8x16xf32>
    %520 = arith.addf %512, %519 : vector<8x16xf32>
    %c3_i32_120 = arith.constant 3 : i32
    %c7_i32_121 = arith.constant 7 : i32
    %521 = arith.subi %c7_i32_121, %c3_i32_120 : i32
    %522 = arith.sitofp %521 : i32 to f32
    %523 = vector.broadcast %522 : f32 to vector<8x1xf32>
    %524 = arith.cmpf ogt, %2, %523 : vector<8x1xf32>
    %525 = arith.extui %524 : vector<8x1xi1> to vector<8x1xi32>
    %526 = arith.sitofp %525 : vector<8x1xi32> to vector<8x1xf32>
    %527 = arith.index_cast %521 : i32 to index
    %c0_122 = arith.constant 0 : index
    %c0_123 = arith.constant 0 : index
    %528 = vector.load %arg12[%527, %c0_122, %c0_123] : memref<8x8x96xf32, #tpu.memory_space<vmem>>, vector<1x8x96xf32>
    %529 = vector.shape_cast %528 : vector<1x8x96xf32> to vector<8x96xf32>
    %530 = vector.extract_strided_slice %529 {offsets = [0, 48], sizes = [8, 48], strides = [1, 1]} : vector<8x96xf32> to vector<8x48xf32>
    %cst_124 = arith.constant dense<0.000000e+00> : vector<8x48xf32>
    %531 = tpu.matmul %520, %10, %cst_124 {dimension_numbers = #tpu.dot_dimension_numbers<[1], [0], [0], [1], [0, 0, 1, 1], [], []>} : vector<8x16xf32>, vector<16x48xf32>, vector<8x48xf32> -> vector<8x48xf32>
    %532 = vector.extract_strided_slice %530 {offsets = [0, 0], sizes = [8, 16], strides = [1, 1]} : vector<8x48xf32> to vector<8x16xf32>
    %533 = vector.extract_strided_slice %531 {offsets = [0, 0], sizes = [8, 16], strides = [1, 1]} : vector<8x48xf32> to vector<8x16xf32>
    %534 = arith.addf %532, %533 : vector<8x16xf32>
    %535 = arith.negf %534 : vector<8x16xf32>
    %536 = math.exp %535 : vector<8x16xf32>
    %cst_125 = arith.constant 1.000000e+00 : f32
    %537 = vector.broadcast %cst_125 : f32 to vector<8x16xf32>
    %538 = arith.addf %537, %536 : vector<8x16xf32>
    %539 = arith.divf %537, %538 : vector<8x16xf32>
    %540 = vector.extract_strided_slice %530 {offsets = [0, 16], sizes = [8, 16], strides = [1, 1]} : vector<8x48xf32> to vector<8x16xf32>
    %541 = vector.extract_strided_slice %531 {offsets = [0, 16], sizes = [8, 16], strides = [1, 1]} : vector<8x48xf32> to vector<8x16xf32>
    %542 = arith.addf %540, %541 : vector<8x16xf32>
    %543 = arith.negf %542 : vector<8x16xf32>
    %544 = math.exp %543 : vector<8x16xf32>
    %cst_126 = arith.constant 1.000000e+00 : f32
    %545 = vector.broadcast %cst_126 : f32 to vector<8x16xf32>
    %546 = arith.addf %545, %544 : vector<8x16xf32>
    %547 = arith.divf %545, %546 : vector<8x16xf32>
    %548 = vector.extract_strided_slice %530 {offsets = [0, 32], sizes = [8, 16], strides = [1, 1]} : vector<8x48xf32> to vector<8x16xf32>
    %549 = vector.extract_strided_slice %531 {offsets = [0, 32], sizes = [8, 16], strides = [1, 1]} : vector<8x48xf32> to vector<8x16xf32>
    %550 = arith.mulf %539, %549 : vector<8x16xf32>
    %551 = arith.addf %548, %550 : vector<8x16xf32>
    %552 = math.tanh %551 : vector<8x16xf32>
    %cst_127 = arith.constant 1.000000e+00 : f32
    %553 = vector.broadcast %cst_127 : f32 to vector<8x16xf32>
    %554 = arith.subf %553, %547 : vector<8x16xf32>
    %555 = arith.mulf %554, %552 : vector<8x16xf32>
    %556 = arith.mulf %547, %520 : vector<8x16xf32>
    %557 = arith.addf %555, %556 : vector<8x16xf32>
    %558 = vector.broadcast %526 : vector<8x1xf32> to vector<8x16xf32>
    %559 = arith.mulf %558, %557 : vector<8x16xf32>
    %560 = vector.shape_cast %559 : vector<8x16xf32> to vector<1x8x16xf32>
    %561 = arith.index_cast %521 : i32 to index
    %c0_128 = arith.constant 0 : index
    %c0_129 = arith.constant 0 : index
    %562 = vector.load %arg14[%561, %c0_128, %c0_129] : memref<8x8x16xf32, #tpu.memory_space<vmem>>, vector<1x8x16xf32>
    tpu.vector_store %arg14[%561, %c0_128, %c0_129], %560 {strides = array<i32>} : memref<8x8x16xf32, #tpu.memory_space<vmem>>, vector<1x8x16xf32>,
    %cst_130 = arith.constant 1.000000e+00 : f32
    %563 = vector.broadcast %cst_130 : f32 to vector<8x1xf32>
    %564 = arith.subf %563, %526 : vector<8x1xf32>
    %565 = vector.broadcast %564 : vector<8x1xf32> to vector<8x16xf32>
    %566 = arith.mulf %565, %520 : vector<8x16xf32>
    %567 = arith.addf %559, %566 : vector<8x16xf32>
    %c4_i32_131 = arith.constant 4 : i32
    %c7_i32_132 = arith.constant 7 : i32
    %568 = arith.subi %c7_i32_132, %c4_i32_131 : i32
    %569 = arith.sitofp %568 : i32 to f32
    %570 = vector.broadcast %569 : f32 to vector<8x1xf32>
    %571 = arith.cmpf ogt, %2, %570 : vector<8x1xf32>
    %572 = arith.extui %571 : vector<8x1xi1> to vector<8x1xi32>
    %573 = arith.sitofp %572 : vector<8x1xi32> to vector<8x1xf32>
    %574 = arith.index_cast %568 : i32 to index
    %c0_133 = arith.constant 0 : index
    %c0_134 = arith.constant 0 : index
    %575 = vector.load %arg12[%574, %c0_133, %c0_134] : memref<8x8x96xf32, #tpu.memory_space<vmem>>, vector<1x8x96xf32>
    %576 = vector.shape_cast %575 : vector<1x8x96xf32> to vector<8x96xf32>
    %577 = vector.extract_strided_slice %576 {offsets = [0, 48], sizes = [8, 48], strides = [1, 1]} : vector<8x96xf32> to vector<8x48xf32>
    %cst_135 = arith.constant dense<0.000000e+00> : vector<8x48xf32>
    %578 = tpu.matmul %567, %10, %cst_135 {dimension_numbers = #tpu.dot_dimension_numbers<[1], [0], [0], [1], [0, 0, 1, 1], [], []>} : vector<8x16xf32>, vector<16x48xf32>, vector<8x48xf32> -> vector<8x48xf32>
    %579 = vector.extract_strided_slice %577 {offsets = [0, 0], sizes = [8, 16], strides = [1, 1]} : vector<8x48xf32> to vector<8x16xf32>
    %580 = vector.extract_strided_slice %578 {offsets = [0, 0], sizes = [8, 16], strides = [1, 1]} : vector<8x48xf32> to vector<8x16xf32>
    %581 = arith.addf %579, %580 : vector<8x16xf32>
    %582 = arith.negf %581 : vector<8x16xf32>
    %583 = math.exp %582 : vector<8x16xf32>
    %cst_136 = arith.constant 1.000000e+00 : f32
    %584 = vector.broadcast %cst_136 : f32 to vector<8x16xf32>
    %585 = arith.addf %584, %583 : vector<8x16xf32>
    %586 = arith.divf %584, %585 : vector<8x16xf32>
    %587 = vector.extract_strided_slice %577 {offsets = [0, 16], sizes = [8, 16], strides = [1, 1]} : vector<8x48xf32> to vector<8x16xf32>
    %588 = vector.extract_strided_slice %578 {offsets = [0, 16], sizes = [8, 16], strides = [1, 1]} : vector<8x48xf32> to vector<8x16xf32>
    %589 = arith.addf %587, %588 : vector<8x16xf32>
    %590 = arith.negf %589 : vector<8x16xf32>
    %591 = math.exp %590 : vector<8x16xf32>
    %cst_137 = arith.constant 1.000000e+00 : f32
    %592 = vector.broadcast %cst_137 : f32 to vector<8x16xf32>
    %593 = arith.addf %592, %591 : vector<8x16xf32>
    %594 = arith.divf %592, %593 : vector<8x16xf32>
    %595 = vector.extract_strided_slice %577 {offsets = [0, 32], sizes = [8, 16], strides = [1, 1]} : vector<8x48xf32> to vector<8x16xf32>
    %596 = vector.extract_strided_slice %578 {offsets = [0, 32], sizes = [8, 16], strides = [1, 1]} : vector<8x48xf32> to vector<8x16xf32>
    %597 = arith.mulf %586, %596 : vector<8x16xf32>
    %598 = arith.addf %595, %597 : vector<8x16xf32>
    %599 = math.tanh %598 : vector<8x16xf32>
    %cst_138 = arith.constant 1.000000e+00 : f32
    %600 = vector.broadcast %cst_138 : f32 to vector<8x16xf32>
    %601 = arith.subf %600, %594 : vector<8x16xf32>
    %602 = arith.mulf %601, %599 : vector<8x16xf32>
    %603 = arith.mulf %594, %567 : vector<8x16xf32>
    %604 = arith.addf %602, %603 : vector<8x16xf32>
    %605 = vector.broadcast %573 : vector<8x1xf32> to vector<8x16xf32>
    %606 = arith.mulf %605, %604 : vector<8x16xf32>
    %607 = vector.shape_cast %606 : vector<8x16xf32> to vector<1x8x16xf32>
    %608 = arith.index_cast %568 : i32 to index
    %c0_139 = arith.constant 0 : index
    %c0_140 = arith.constant 0 : index
    %609 = vector.load %arg14[%608, %c0_139, %c0_140] : memref<8x8x16xf32, #tpu.memory_space<vmem>>, vector<1x8x16xf32>
    tpu.vector_store %arg14[%608, %c0_139, %c0_140], %607 {strides = array<i32>} : memref<8x8x16xf32, #tpu.memory_space<vmem>>, vector<1x8x16xf32>,
    %cst_141 = arith.constant 1.000000e+00 : f32
    %610 = vector.broadcast %cst_141 : f32 to vector<8x1xf32>
    %611 = arith.subf %610, %573 : vector<8x1xf32>
    %612 = vector.broadcast %611 : vector<8x1xf32> to vector<8x16xf32>
    %613 = arith.mulf %612, %567 : vector<8x16xf32>
    %614 = arith.addf %606, %613 : vector<8x16xf32>
    %c5_i32_142 = arith.constant 5 : i32
    %c7_i32_143 = arith.constant 7 : i32
    %615 = arith.subi %c7_i32_143, %c5_i32_142 : i32
    %616 = arith.sitofp %615 : i32 to f32
    %617 = vector.broadcast %616 : f32 to vector<8x1xf32>
    %618 = arith.cmpf ogt, %2, %617 : vector<8x1xf32>
    %619 = arith.extui %618 : vector<8x1xi1> to vector<8x1xi32>
    %620 = arith.sitofp %619 : vector<8x1xi32> to vector<8x1xf32>
    %621 = arith.index_cast %615 : i32 to index
    %c0_144 = arith.constant 0 : index
    %c0_145 = arith.constant 0 : index
    %622 = vector.load %arg12[%621, %c0_144, %c0_145] : memref<8x8x96xf32, #tpu.memory_space<vmem>>, vector<1x8x96xf32>
    %623 = vector.shape_cast %622 : vector<1x8x96xf32> to vector<8x96xf32>
    %624 = vector.extract_strided_slice %623 {offsets = [0, 48], sizes = [8, 48], strides = [1, 1]} : vector<8x96xf32> to vector<8x48xf32>
    %cst_146 = arith.constant dense<0.000000e+00> : vector<8x48xf32>
    %625 = tpu.matmul %614, %10, %cst_146 {dimension_numbers = #tpu.dot_dimension_numbers<[1], [0], [0], [1], [0, 0, 1, 1], [], []>} : vector<8x16xf32>, vector<16x48xf32>, vector<8x48xf32> -> vector<8x48xf32>
    %626 = vector.extract_strided_slice %624 {offsets = [0, 0], sizes = [8, 16], strides = [1, 1]} : vector<8x48xf32> to vector<8x16xf32>
    %627 = vector.extract_strided_slice %625 {offsets = [0, 0], sizes = [8, 16], strides = [1, 1]} : vector<8x48xf32> to vector<8x16xf32>
    %628 = arith.addf %626, %627 : vector<8x16xf32>
    %629 = arith.negf %628 : vector<8x16xf32>
    %630 = math.exp %629 : vector<8x16xf32>
    %cst_147 = arith.constant 1.000000e+00 : f32
    %631 = vector.broadcast %cst_147 : f32 to vector<8x16xf32>
    %632 = arith.addf %631, %630 : vector<8x16xf32>
    %633 = arith.divf %631, %632 : vector<8x16xf32>
    %634 = vector.extract_strided_slice %624 {offsets = [0, 16], sizes = [8, 16], strides = [1, 1]} : vector<8x48xf32> to vector<8x16xf32>
    %635 = vector.extract_strided_slice %625 {offsets = [0, 16], sizes = [8, 16], strides = [1, 1]} : vector<8x48xf32> to vector<8x16xf32>
    %636 = arith.addf %634, %635 : vector<8x16xf32>
    %637 = arith.negf %636 : vector<8x16xf32>
    %638 = math.exp %637 : vector<8x16xf32>
    %cst_148 = arith.constant 1.000000e+00 : f32
    %639 = vector.broadcast %cst_148 : f32 to vector<8x16xf32>
    %640 = arith.addf %639, %638 : vector<8x16xf32>
    %641 = arith.divf %639, %640 : vector<8x16xf32>
    %642 = vector.extract_strided_slice %624 {offsets = [0, 32], sizes = [8, 16], strides = [1, 1]} : vector<8x48xf32> to vector<8x16xf32>
    %643 = vector.extract_strided_slice %625 {offsets = [0, 32], sizes = [8, 16], strides = [1, 1]} : vector<8x48xf32> to vector<8x16xf32>
    %644 = arith.mulf %633, %643 : vector<8x16xf32>
    %645 = arith.addf %642, %644 : vector<8x16xf32>
    %646 = math.tanh %645 : vector<8x16xf32>
    %cst_149 = arith.constant 1.000000e+00 : f32
    %647 = vector.broadcast %cst_149 : f32 to vector<8x16xf32>
    %648 = arith.subf %647, %641 : vector<8x16xf32>
    %649 = arith.mulf %648, %646 : vector<8x16xf32>
    %650 = arith.mulf %641, %614 : vector<8x16xf32>
    %651 = arith.addf %649, %650 : vector<8x16xf32>
    %652 = vector.broadcast %620 : vector<8x1xf32> to vector<8x16xf32>
    %653 = arith.mulf %652, %651 : vector<8x16xf32>
    %654 = vector.shape_cast %653 : vector<8x16xf32> to vector<1x8x16xf32>
    %655 = arith.index_cast %615 : i32 to index
    %c0_150 = arith.constant 0 : index
    %c0_151 = arith.constant 0 : index
    %656 = vector.load %arg14[%655, %c0_150, %c0_151] : memref<8x8x16xf32, #tpu.memory_space<vmem>>, vector<1x8x16xf32>
    tpu.vector_store %arg14[%655, %c0_150, %c0_151], %654 {strides = array<i32>} : memref<8x8x16xf32, #tpu.memory_space<vmem>>, vector<1x8x16xf32>,
    %cst_152 = arith.constant 1.000000e+00 : f32
    %657 = vector.broadcast %cst_152 : f32 to vector<8x1xf32>
    %658 = arith.subf %657, %620 : vector<8x1xf32>
    %659 = vector.broadcast %658 : vector<8x1xf32> to vector<8x16xf32>
    %660 = arith.mulf %659, %614 : vector<8x16xf32>
    %661 = arith.addf %653, %660 : vector<8x16xf32>
    %c6_i32_153 = arith.constant 6 : i32
    %c7_i32_154 = arith.constant 7 : i32
    %662 = arith.subi %c7_i32_154, %c6_i32_153 : i32
    %663 = arith.sitofp %662 : i32 to f32
    %664 = vector.broadcast %663 : f32 to vector<8x1xf32>
    %665 = arith.cmpf ogt, %2, %664 : vector<8x1xf32>
    %666 = arith.extui %665 : vector<8x1xi1> to vector<8x1xi32>
    %667 = arith.sitofp %666 : vector<8x1xi32> to vector<8x1xf32>
    %668 = arith.index_cast %662 : i32 to index
    %c0_155 = arith.constant 0 : index
    %c0_156 = arith.constant 0 : index
    %669 = vector.load %arg12[%668, %c0_155, %c0_156] : memref<8x8x96xf32, #tpu.memory_space<vmem>>, vector<1x8x96xf32>
    %670 = vector.shape_cast %669 : vector<1x8x96xf32> to vector<8x96xf32>
    %671 = vector.extract_strided_slice %670 {offsets = [0, 48], sizes = [8, 48], strides = [1, 1]} : vector<8x96xf32> to vector<8x48xf32>
    %cst_157 = arith.constant dense<0.000000e+00> : vector<8x48xf32>
    %672 = tpu.matmul %661, %10, %cst_157 {dimension_numbers = #tpu.dot_dimension_numbers<[1], [0], [0], [1], [0, 0, 1, 1], [], []>} : vector<8x16xf32>, vector<16x48xf32>, vector<8x48xf32> -> vector<8x48xf32>
    %673 = vector.extract_strided_slice %671 {offsets = [0, 0], sizes = [8, 16], strides = [1, 1]} : vector<8x48xf32> to vector<8x16xf32>
    %674 = vector.extract_strided_slice %672 {offsets = [0, 0], sizes = [8, 16], strides = [1, 1]} : vector<8x48xf32> to vector<8x16xf32>
    %675 = arith.addf %673, %674 : vector<8x16xf32>
    %676 = arith.negf %675 : vector<8x16xf32>
    %677 = math.exp %676 : vector<8x16xf32>
    %cst_158 = arith.constant 1.000000e+00 : f32
    %678 = vector.broadcast %cst_158 : f32 to vector<8x16xf32>
    %679 = arith.addf %678, %677 : vector<8x16xf32>
    %680 = arith.divf %678, %679 : vector<8x16xf32>
    %681 = vector.extract_strided_slice %671 {offsets = [0, 16], sizes = [8, 16], strides = [1, 1]} : vector<8x48xf32> to vector<8x16xf32>
    %682 = vector.extract_strided_slice %672 {offsets = [0, 16], sizes = [8, 16], strides = [1, 1]} : vector<8x48xf32> to vector<8x16xf32>
    %683 = arith.addf %681, %682 : vector<8x16xf32>
    %684 = arith.negf %683 : vector<8x16xf32>
    %685 = math.exp %684 : vector<8x16xf32>
    %cst_159 = arith.constant 1.000000e+00 : f32
    %686 = vector.broadcast %cst_159 : f32 to vector<8x16xf32>
    %687 = arith.addf %686, %685 : vector<8x16xf32>
    %688 = arith.divf %686, %687 : vector<8x16xf32>
    %689 = vector.extract_strided_slice %671 {offsets = [0, 32], sizes = [8, 16], strides = [1, 1]} : vector<8x48xf32> to vector<8x16xf32>
    %690 = vector.extract_strided_slice %672 {offsets = [0, 32], sizes = [8, 16], strides = [1, 1]} : vector<8x48xf32> to vector<8x16xf32>
    %691 = arith.mulf %680, %690 : vector<8x16xf32>
    %692 = arith.addf %689, %691 : vector<8x16xf32>
    %693 = math.tanh %692 : vector<8x16xf32>
    %cst_160 = arith.constant 1.000000e+00 : f32
    %694 = vector.broadcast %cst_160 : f32 to vector<8x16xf32>
    %695 = arith.subf %694, %688 : vector<8x16xf32>
    %696 = arith.mulf %695, %693 : vector<8x16xf32>
    %697 = arith.mulf %688, %661 : vector<8x16xf32>
    %698 = arith.addf %696, %697 : vector<8x16xf32>
    %699 = vector.broadcast %667 : vector<8x1xf32> to vector<8x16xf32>
    %700 = arith.mulf %699, %698 : vector<8x16xf32>
    %701 = vector.shape_cast %700 : vector<8x16xf32> to vector<1x8x16xf32>
    %702 = arith.index_cast %662 : i32 to index
    %c0_161 = arith.constant 0 : index
    %c0_162 = arith.constant 0 : index
    %703 = vector.load %arg14[%702, %c0_161, %c0_162] : memref<8x8x16xf32, #tpu.memory_space<vmem>>, vector<1x8x16xf32>
    tpu.vector_store %arg14[%702, %c0_161, %c0_162], %701 {strides = array<i32>} : memref<8x8x16xf32, #tpu.memory_space<vmem>>, vector<1x8x16xf32>,
    %cst_163 = arith.constant 1.000000e+00 : f32
    %704 = vector.broadcast %cst_163 : f32 to vector<8x1xf32>
    %705 = arith.subf %704, %667 : vector<8x1xf32>
    %706 = vector.broadcast %705 : vector<8x1xf32> to vector<8x16xf32>
    %707 = arith.mulf %706, %661 : vector<8x16xf32>
    %708 = arith.addf %700, %707 : vector<8x16xf32>
    %c7_i32_164 = arith.constant 7 : i32
    %c7_i32_165 = arith.constant 7 : i32
    %709 = arith.subi %c7_i32_165, %c7_i32_164 : i32
    %710 = arith.sitofp %709 : i32 to f32
    %711 = vector.broadcast %710 : f32 to vector<8x1xf32>
    %712 = arith.cmpf ogt, %2, %711 : vector<8x1xf32>
    %713 = arith.extui %712 : vector<8x1xi1> to vector<8x1xi32>
    %714 = arith.sitofp %713 : vector<8x1xi32> to vector<8x1xf32>
    %715 = arith.index_cast %709 : i32 to index
    %c0_166 = arith.constant 0 : index
    %c0_167 = arith.constant 0 : index
    %716 = vector.load %arg12[%715, %c0_166, %c0_167] : memref<8x8x96xf32, #tpu.memory_space<vmem>>, vector<1x8x96xf32>
    %717 = vector.shape_cast %716 : vector<1x8x96xf32> to vector<8x96xf32>
    %718 = vector.extract_strided_slice %717 {offsets = [0, 48], sizes = [8, 48], strides = [1, 1]} : vector<8x96xf32> to vector<8x48xf32>
    %cst_168 = arith.constant dense<0.000000e+00> : vector<8x48xf32>
    %719 = tpu.matmul %708, %10, %cst_168 {dimension_numbers = #tpu.dot_dimension_numbers<[1], [0], [0], [1], [0, 0, 1, 1], [], []>} : vector<8x16xf32>, vector<16x48xf32>, vector<8x48xf32> -> vector<8x48xf32>
    %720 = vector.extract_strided_slice %718 {offsets = [0, 0], sizes = [8, 16], strides = [1, 1]} : vector<8x48xf32> to vector<8x16xf32>
    %721 = vector.extract_strided_slice %719 {offsets = [0, 0], sizes = [8, 16], strides = [1, 1]} : vector<8x48xf32> to vector<8x16xf32>
    %722 = arith.addf %720, %721 : vector<8x16xf32>
    %723 = arith.negf %722 : vector<8x16xf32>
    %724 = math.exp %723 : vector<8x16xf32>
    %cst_169 = arith.constant 1.000000e+00 : f32
    %725 = vector.broadcast %cst_169 : f32 to vector<8x16xf32>
    %726 = arith.addf %725, %724 : vector<8x16xf32>
    %727 = arith.divf %725, %726 : vector<8x16xf32>
    %728 = vector.extract_strided_slice %718 {offsets = [0, 16], sizes = [8, 16], strides = [1, 1]} : vector<8x48xf32> to vector<8x16xf32>
    %729 = vector.extract_strided_slice %719 {offsets = [0, 16], sizes = [8, 16], strides = [1, 1]} : vector<8x48xf32> to vector<8x16xf32>
    %730 = arith.addf %728, %729 : vector<8x16xf32>
    %731 = arith.negf %730 : vector<8x16xf32>
    %732 = math.exp %731 : vector<8x16xf32>
    %cst_170 = arith.constant 1.000000e+00 : f32
    %733 = vector.broadcast %cst_170 : f32 to vector<8x16xf32>
    %734 = arith.addf %733, %732 : vector<8x16xf32>
    %735 = arith.divf %733, %734 : vector<8x16xf32>
    %736 = vector.extract_strided_slice %718 {offsets = [0, 32], sizes = [8, 16], strides = [1, 1]} : vector<8x48xf32> to vector<8x16xf32>
    %737 = vector.extract_strided_slice %719 {offsets = [0, 32], sizes = [8, 16], strides = [1, 1]} : vector<8x48xf32> to vector<8x16xf32>
    %738 = arith.mulf %727, %737 : vector<8x16xf32>
    %739 = arith.addf %736, %738 : vector<8x16xf32>
    %740 = math.tanh %739 : vector<8x16xf32>
    %cst_171 = arith.constant 1.000000e+00 : f32
    %741 = vector.broadcast %cst_171 : f32 to vector<8x16xf32>
    %742 = arith.subf %741, %735 : vector<8x16xf32>
    %743 = arith.mulf %742, %740 : vector<8x16xf32>
    %744 = arith.mulf %735, %708 : vector<8x16xf32>
    %745 = arith.addf %743, %744 : vector<8x16xf32>
    %746 = vector.broadcast %714 : vector<8x1xf32> to vector<8x16xf32>
    %747 = arith.mulf %746, %745 : vector<8x16xf32>
    %748 = vector.shape_cast %747 : vector<8x16xf32> to vector<1x8x16xf32>
    %749 = arith.index_cast %709 : i32 to index
    %c0_172 = arith.constant 0 : index
    %c0_173 = arith.constant 0 : index
    %750 = vector.load %arg14[%749, %c0_172, %c0_173] : memref<8x8x16xf32, #tpu.memory_space<vmem>>, vector<1x8x16xf32>
    tpu.vector_store %arg14[%749, %c0_172, %c0_173], %748 {strides = array<i32>} : memref<8x8x16xf32, #tpu.memory_space<vmem>>, vector<1x8x16xf32>,
    %cst_174 = arith.constant 1.000000e+00 : f32
    %751 = vector.broadcast %cst_174 : f32 to vector<8x1xf32>
    %752 = arith.subf %751, %714 : vector<8x1xf32>
    %753 = vector.broadcast %752 : vector<8x1xf32> to vector<8x16xf32>
    %754 = arith.mulf %753, %708 : vector<8x16xf32>
    %755 = arith.addf %747, %754 : vector<8x16xf32>
    %c8_i32_175 = arith.constant 8 : i32
    %c0_176 = arith.constant 0 : index
    %c0_177 = arith.constant 0 : index
    %c0_178 = arith.constant 0 : index
    %756 = vector.load %arg13[%c0_176, %c0_177, %c0_178] : memref<8x8x16xf32, #tpu.memory_space<vmem>>, vector<8x8x16xf32>
    %757 = vector.shape_cast %756 : vector<8x8x16xf32> to vector<64x16xf32>
    %c0_179 = arith.constant 0 : index
    %c0_180 = arith.constant 0 : index
    %c0_181 = arith.constant 0 : index
    %758 = vector.load %arg14[%c0_179, %c0_180, %c0_181] : memref<8x8x16xf32, #tpu.memory_space<vmem>>, vector<8x8x16xf32>
    %759 = vector.shape_cast %758 : vector<8x8x16xf32> to vector<64x16xf32>
    %c0_182 = arith.constant 0 : index
    %c0_183 = arith.constant 0 : index
    %760 = vector.load %arg6[%c0_182, %c0_183] : memref<16x32xf32, #tpu.memory_space<vmem>>, vector<16x32xf32>
    %cst_184 = arith.constant dense<0.000000e+00> : vector<64x32xf32>
    %761 = tpu.matmul %757, %760, %cst_184 {dimension_numbers = #tpu.dot_dimension_numbers<[1], [0], [0], [1], [0, 0, 1, 1], [], []>} : vector<64x16xf32>, vector<16x32xf32>, vector<64x32xf32> -> vector<64x32xf32>
    %c0_185 = arith.constant 0 : index
    %c0_186 = arith.constant 0 : index
    %762 = vector.load %arg7[%c0_185, %c0_186] : memref<16x32xf32, #tpu.memory_space<vmem>>, vector<16x32xf32>
    %cst_187 = arith.constant dense<0.000000e+00> : vector<64x32xf32>
    %763 = tpu.matmul %759, %762, %cst_187 {dimension_numbers = #tpu.dot_dimension_numbers<[1], [0], [0], [1], [0, 0, 1, 1], [], []>} : vector<64x16xf32>, vector<16x32xf32>, vector<64x32xf32> -> vector<64x32xf32>
    %764 = arith.addf %761, %763 : vector<64x32xf32>
    %c0_188 = arith.constant 0 : index
    %c0_189 = arith.constant 0 : index
    %765 = vector.load %arg8[%c0_188, %c0_189] : memref<1x32xf32, #tpu.memory_space<vmem>>, vector<1x32xf32>
    %766 = vector.broadcast %765 : vector<1x32xf32> to vector<64x32xf32>
    %767 = arith.addf %764, %766 : vector<64x32xf32>
    %768 = math.tanh %767 : vector<64x32xf32>
    %769 = vector.shape_cast %768 : vector<64x32xf32> to vector<8x8x32xf32>
    %c0_190 = arith.constant 0 : index
    %c0_191 = arith.constant 0 : index
    %770 = vector.load %arg9[%c0_190, %c0_191] : memref<1x32xf32, #tpu.memory_space<vmem>>, vector<1x32xf32>
    %771 = vector.shape_cast %770 : vector<1x32xf32> to vector<1x1x32xf32>
    %772 = vector.broadcast %771 : vector<1x1x32xf32> to vector<8x8x32xf32>
    %773 = arith.mulf %769, %772 : vector<8x8x32xf32>
    %cst_192 = arith.constant dense<0.000000e+00> : vector<8x8xf32>
    %774 = vector.multi_reduction <add>, %773, %cst_192 [2] : vector<8x8x32xf32> to vector<8x8xf32>
    %775 = tpu.transpose %0, [1, 0] : vector<8x8xf32> -> vector<8x8xf32>
    %cst_193 = arith.constant 5.000000e-01 : f32
    %776 = vector.broadcast %cst_193 : f32 to vector<8x8xf32>
    %777 = arith.cmpf ogt, %775, %776 : vector<8x8xf32>
    %cst_194 = arith.constant -1.000000e+30 : f32
    %778 = vector.broadcast %cst_194 : f32 to vector<8x8xf32>
    %779 = arith.select %777, %774, %778 : vector<8x8xi1>, vector<8x8xf32>
    %cst_195 = arith.constant dense<0xFF800000> : vector<8xf32>
    %780 = vector.multi_reduction <maximumf>, %779, %cst_195 [0] : vector<8x8xf32> to vector<8xf32>
    %781 = vector.shape_cast %780 : vector<8xf32> to vector<1x8xf32>
    %782 = vector.broadcast %781 : vector<1x8xf32> to vector<8x8xf32>
    %783 = arith.subf %779, %782 : vector<8x8xf32>
    %784 = math.exp %783 : vector<8x8xf32>
    %cst_196 = arith.constant dense<0.000000e+00> : vector<8xf32>
    %785 = vector.multi_reduction <add>, %784, %cst_196 [0] : vector<8x8xf32> to vector<8xf32>
    %786 = vector.shape_cast %785 : vector<8xf32> to vector<1x8xf32>
    %787 = tpu.reciprocal %786 {approx = true} : vector<1x8xf32> -> vector<1x8xf32>
    %788 = vector.broadcast %787 : vector<1x8xf32> to vector<8x8xf32>
    %789 = arith.mulf %784, %788 : vector<8x8xf32>
    %790 = vector.shape_cast %789 : vector<8x8xf32> to vector<8x8x1xf32>
    %791 = vector.broadcast %790 : vector<8x8x1xf32> to vector<8x8x32xf32>
    %792 = arith.mulf %791, %769 : vector<8x8x32xf32>
    %cst_197 = arith.constant dense<0.000000e+00> : vector<8x32xf32>
    %793 = vector.multi_reduction <add>, %792, %cst_197 [0] : vector<8x8x32xf32> to vector<8x32xf32>
    %c0_198 = arith.constant 0 : index
    %c0_199 = arith.constant 0 : index
    %794 = vector.load %arg10[%c0_198, %c0_199] : memref<8x32xf32, #tpu.memory_space<vmem>>, vector<8x32xf32>
    tpu.vector_store %arg10[%c0_198, %c0_199], %793 {strides = array<i32>} : memref<8x32xf32, #tpu.memory_space<vmem>>, vector<8x32xf32>,
    %795 = tpu.transpose %789, [1, 0] : vector<8x8xf32> -> vector<8x8xf32>
    %c0_200 = arith.constant 0 : index
    %c0_201 = arith.constant 0 : index
    %796 = vector.load %arg11[%c0_200, %c0_201] : memref<8x8xf32, #tpu.memory_space<vmem>>, vector<8x8xf32>
    tpu.vector_store %arg11[%c0_200, %c0_201], %795 {strides = array<i32>} : memref<8x8xf32, #tpu.memory_space<vmem>>, vector<8x8xf32>,
    return
  }
  func.func @transform_0(%arg0: i32) -> (i32, i32, i32) {
    %c0_i32 = arith.constant 0 : i32
    %c0_i32_0 = arith.constant 0 : i32
    %c0_i32_1 = arith.constant 0 : i32
    return %c0_i32, %arg0, %c0_i32_0 : i32, i32, i32
  }
  func.func @transform_1(%arg0: i32) -> (i32, i32) {
    %c0_i32 = arith.constant 0 : i32
    %c0_i32_0 = arith.constant 0 : i32
    return %arg0, %c0_i32 : i32, i32
  }
  func.func @transform_2(%arg0: i32) -> (i32, i32) {
    %c0_i32 = arith.constant 0 : i32
    %c0_i32_0 = arith.constant 0 : i32
    %c0_i32_1 = arith.constant 0 : i32
    return %c0_i32, %c0_i32_0 : i32, i32
  }
  func.func @transform_3(%arg0: i32) -> (i32, i32) {
    %c0_i32 = arith.constant 0 : i32
    %c0_i32_0 = arith.constant 0 : i32
    %c0_i32_1 = arith.constant 0 : i32
    return %c0_i32, %c0_i32_0 : i32, i32
  }
  func.func @transform_4(%arg0: i32) -> (i32, i32) {
    %c0_i32 = arith.constant 0 : i32
    %c0_i32_0 = arith.constant 0 : i32
    %c0_i32_1 = arith.constant 0 : i32
    return %c0_i32, %c0_i32_0 : i32, i32
  }
  func.func @transform_5(%arg0: i32) -> (i32, i32) {
    %c0_i32 = arith.constant 0 : i32
    %c0_i32_0 = arith.constant 0 : i32
    %c0_i32_1 = arith.constant 0 : i32
    return %c0_i32, %c0_i32_0 : i32, i32
  }
  func.func @transform_6(%arg0: i32) -> (i32, i32) {
    %c0_i32 = arith.constant 0 : i32
    %c0_i32_0 = arith.constant 0 : i32
    %c0_i32_1 = arith.constant 0 : i32
    return %c0_i32, %c0_i32_0 : i32, i32
  }
  func.func @transform_7(%arg0: i32) -> (i32, i32) {
    %c0_i32 = arith.constant 0 : i32
    %c0_i32_0 = arith.constant 0 : i32
    %c0_i32_1 = arith.constant 0 : i32
    return %c0_i32, %c0_i32_0 : i32, i32
  }
  func.func @transform_8(%arg0: i32) -> (i32, i32) {
    %c0_i32 = arith.constant 0 : i32
    %c0_i32_0 = arith.constant 0 : i32
    %c0_i32_1 = arith.constant 0 : i32
    return %c0_i32, %c0_i32_0 : i32, i32
  }
  func.func @transform_9(%arg0: i32) -> (i32, i32) {
    %c0_i32 = arith.constant 0 : i32
    %c0_i32_0 = arith.constant 0 : i32
    return %arg0, %c0_i32 : i32, i32
  }
  func.func @transform_10(%arg0: i32) -> (i32, i32) {
    %c0_i32 = arith.constant 0 : i32
    %c0_i32_0 = arith.constant 0 : i32
    return %arg0, %c0_i32 : i32, i32
  }
}

</mosaic_0001>

<llo_original>
// kernel: sent_attn_forward.1
$region0: #{sent_attn_forward.1}
  #allocation0 [shape = 'u32[]', space=smem, size = 0x4, offset = 0x4, fixed_abs, tag = 'smem constant byte address 0x4 - core index']
  #allocation1 [shape = 'u32[144,128]{1,0:T(1,128)}', space=vmem, size = 0x12000, scoped, tag = 'internal scratch']
  #allocation2 [shape = 'f32[8,8,96]{2,1,0:T(8,128)}', space=vmem, size = 0x8000, scoped, tag = 'scratch operand']
  #allocation3 [shape = 'f32[8,8,16]{2,1,0:T(8,128)}', space=vmem, size = 0x8000, scoped, tag = 'scratch operand']
  #allocation4 [shape = 'f32[8,8,16]{2,1,0:T(8,128)}', space=vmem, size = 0x8000, scoped, tag = 'scratch operand']
  %s0 = inlined_call_operand.vmem [shape: f32[8,8,32], index: 0, kind: input, shape index: {}]
  %s1 = inlined_call_operand.vmem [shape: f32[8,8], index: 1, kind: input, shape index: {}]
  %s2 = inlined_call_operand.vmem [shape: f32[32,96], index: 2, kind: input, shape index: {}]
  %s3 = inlined_call_operand.vmem [shape: f32[16,48], index: 3, kind: input, shape index: {}]
  %s4 = inlined_call_operand.vmem [shape: f32[16,48], index: 4, kind: input, shape index: {}]
  %s5 = inlined_call_operand.vmem [shape: f32[16,32], index: 5, kind: input, shape index: {}]
  %s6 = inlined_call_operand.vmem [shape: f32[16,32], index: 6, kind: input, shape index: {}]
  %s7 = inlined_call_operand.vmem [shape: f32[1,32], index: 7, kind: input, shape index: {}]
  %s8 = inlined_call_operand.vmem [shape: f32[1,32], index: 8, kind: input, shape index: {}]
  %s9 = inlined_call_operand.vmem [shape: f32[8,32], index: 9, kind: output, shape index: {0}]
  %s10 = inlined_call_operand.vmem [shape: f32[8,8], index: 10, kind: output, shape index: {1}]
  %11 = xla_tuple %s9, %s10
  %s12 = sld [smem:[#allocation0]]
  $region54: #{sent_attn_forward.1} parent=0
    _
  %s14 = ssub.s32 1, %s12
  %s15 = scalar_select 0, %s14, %s12
  // Predicated region
  $region2: #{sent_attn_forward.1} parent=0 // pred_check
    _
  $region3: #{sent_attn_forward.1} parent=0 // pred_check_branch
    %17 = sbr.rel (0) target = $region5
  $region4: #{sent_attn_forward.1} parent=0 // pred_region
    _
  $region5: #{sent_attn_forward.1} parent=0 // pred_fallthru
    _
  // Predicated region
  $region6: #{sent_attn_forward.1} parent=0 // pred_check
    _
  $region7: #{sent_attn_forward.1} parent=0 // pred_check_branch
    %19 = sbr.rel (0) target = $region9
  $region8: #{sent_attn_forward.1} parent=0 // pred_region
    _
  $region9: #{sent_attn_forward.1} parent=0 // pred_fallthru
    _
  // Predicated region
  $region10: #{sent_attn_forward.1} parent=0 // pred_check
    _
  $region11: #{sent_attn_forward.1} parent=0 // pred_check_branch
    %21 = sbr.rel (0) target = $region13
  $region12: #{sent_attn_forward.1} parent=0 // pred_region
    _
  $region13: #{sent_attn_forward.1} parent=0 // pred_fallthru
    _
  // Predicated region
  $region14: #{sent_attn_forward.1} parent=0 // pred_check
    _
  $region15: #{sent_attn_forward.1} parent=0 // pred_check_branch
    %23 = sbr.rel (0) target = $region17
  $region16: #{sent_attn_forward.1} parent=0 // pred_region
    _
  $region17: #{sent_attn_forward.1} parent=0 // pred_fallthru
    _
  // Predicated region
  $region18: #{sent_attn_forward.1} parent=0 // pred_check
    _
  $region19: #{sent_attn_forward.1} parent=0 // pred_check_branch
    %25 = sbr.rel (0) target = $region21
  $region20: #{sent_attn_forward.1} parent=0 // pred_region
    _
  $region21: #{sent_attn_forward.1} parent=0 // pred_fallthru
    _
  // Predicated region
  $region22: #{sent_attn_forward.1} parent=0 // pred_check
    _
  $region23: #{sent_attn_forward.1} parent=0 // pred_check_branch
    %27 = sbr.rel (0) target = $region25
  $region24: #{sent_attn_forward.1} parent=0 // pred_region
    _
  $region25: #{sent_attn_forward.1} parent=0 // pred_fallthru
    _
  // Predicated region
  $region26: #{sent_attn_forward.1} parent=0 // pred_check
    _
  $region27: #{sent_attn_forward.1} parent=0 // pred_check_branch
    %29 = sbr.rel (0) target = $region29
  $region28: #{sent_attn_forward.1} parent=0 // pred_region
    _
  $region29: #{sent_attn_forward.1} parent=0 // pred_fallthru
    _
  // Predicated region
  $region30: #{sent_attn_forward.1} parent=0 // pred_check
    _
  $region31: #{sent_attn_forward.1} parent=0 // pred_check_branch
    %31 = sbr.rel (0) target = $region33
  $region32: #{sent_attn_forward.1} parent=0 // pred_region
    _
  $region33: #{sent_attn_forward.1} parent=0 // pred_fallthru
    _
  // Predicated region
  $region34: #{sent_attn_forward.1} parent=0 // pred_check
    _
  $region35: #{sent_attn_forward.1} parent=0 // pred_check_branch
    %33 = sbr.rel (0) target = $region37
  $region36: #{sent_attn_forward.1} parent=0 // pred_region
    _
  $region37: #{sent_attn_forward.1} parent=0 // pred_fallthru
    _
  %v34 = vld [vmem:[%s1] sm:$0xff]
  %vm35 = vcmask 64512
  %v36 = vsel %vm35, %v34, 0.0
  %37 = vadd.xlane.f32.xlu0 %v36
  %v38 = vpop.xlane.xlu0 %37
  %v39 = vld [vmem:[%s0] sm:$0xff]
  %v40 = vld [vmem:[%s0 + $0x8] sm:$0xff]
  %v41 = vld [vmem:[%s0 + $0x10] sm:$0xff]
  %v42 = vld [vmem:[%s0 + $0x18] sm:$0xff]
  %v43 = vld [vmem:[%s0 + $0x20] sm:$0xff]
  %v44 = vld [vmem:[%s0 + $0x28] sm:$0xff]
  %v45 = vld [vmem:[%s0 + $0x30] sm:$0xff]
  %v46 = vld [vmem:[%s0 + $0x38] sm:$0xff]
  %v47 = vld [vmem:[%s2] sm:$0xff]
  %v48 = vld [vmem:[%s2 + $0x8] sm:$0xff]
  %v49 = vld [vmem:[%s2 + $0x10] sm:$0xff]
  %v50 = vld [vmem:[%s2 + $0x18] sm:$0xff]
  %vm51 = vcmask 261120
  %v53 = vsel %vm51, %v39, 0
  %v56 = vsel %vm51, %v40, 0
  %v59 = vsel %vm51, %v41, 0
  %v62 = vsel %vm51, %v42, 0
  %v65 = vsel %vm51, %v43, 0
  %v68 = vsel %vm51, %v44, 0
  %v71 = vsel %vm51, %v45, 0
  %v74 = vsel %vm51, %v46, 0
  %76 = vmatprep.subr.mxu0 0.0
  %77 = vmatpush1.msra.mxu0 0.0
  %78 = vmatprep.subr.mxu0 0.0
  %79 = vmatpush1.msra.mxu0 0.0
  %80 = vmatprep.subr.mxu0 0.0
  %81 = vmatpush1.msra.mxu0 0.0
  %82 = vmatprep.subr.mxu0 0.0
  %83 = vmatpush1.msra.mxu0 0.0
  %84 = vmatprep.subr.mxu0 0.0
  %85 = vmatpush1.msra.mxu0 0.0
  %86 = vmatprep.subr.mxu0 0.0
  %87 = vmatpush1.msra.mxu0 0.0
  %88 = vmatprep.subr.mxu0 0.0
  %89 = vmatpush1.msra.mxu0 0.0
  %90 = vmatprep.subr.mxu0 0.0
  %91 = vmatpush1.msra.mxu0 0.0
  %92 = vmatprep.subr.mxu0 0.0
  %93 = vmatpush1.msra.mxu0 0.0
  %94 = vmatprep.subr.mxu0 0.0
  %95 = vmatpush1.msra.mxu0 0.0
  %96 = vmatprep.subr.mxu0 0.0
  %97 = vmatpush1.msra.mxu0 0.0
  %98 = vmatprep.subr.mxu0 0.0
  %99 = vmatpush1.msra.mxu0 0.0
  %100 = vmatprep.subr.mxu0 0.0
  %101 = vmatpush1.msra.mxu0 %v50
  %102 = vmatprep.subr.mxu0 0.0
  %103 = vmatpush1.msra.mxu0 %v49
  %104 = vmatprep.subr.mxu0 0.0
  %105 = vmatpush1.msra.mxu0 %v48
  %106 = vmatprep.subr.mxu0 0.0
  %107 = vmatpush1.msra.mxu0 %v47
  %108 = vmatprep.subr.mxu0 0.0
  %109 = vmatpush2.msra.mxu0 0.0
  %110 = vmatprep.subr.mxu0 0.0
  %111 = vmatpush2.msra.mxu0 0.0
  %112 = vmatprep.subr.mxu0 0.0
  %113 = vmatpush2.msra.mxu0 0.0
  %114 = vmatprep.subr.mxu0 0.0
  %115 = vmatpush2.msra.mxu0 0.0
  %116 = vmatprep.subr.mxu0 0.0
  %117 = vmatpush2.msra.mxu0 0.0
  %118 = vmatprep.subr.mxu0 0.0
  %119 = vmatpush2.msra.mxu0 0.0
  %120 = vmatprep.subr.mxu0 0.0
  %121 = vmatpush2.msra.mxu0 0.0
  %122 = vmatprep.subr.mxu0 0.0
  %123 = vmatpush2.msra.mxu0 0.0
  %124 = vmatprep.subr.mxu0 0.0
  %125 = vmatpush2.msra.mxu0 0.0
  %126 = vmatprep.subr.mxu0 0.0
  %127 = vmatpush2.msra.mxu0 0.0
  %128 = vmatprep.subr.mxu0 0.0
  %129 = vmatpush2.msra.mxu0 0.0
  %130 = vmatprep.subr.mxu0 0.0
  %131 = vmatpush2.msra.mxu0 0.0
  %132 = vmatprep.subr.mxu0 0.0
  %133 = vmatpush2.msra.mxu0 0.0
  %134 = vmatprep.subr.mxu0 0.0
  %135 = vmatpush2.msra.mxu0 0.0
  %136 = vmatprep.subr.mxu0 0.0
  %137 = vmatpush2.msra.mxu0 0.0
  %138 = vmatprep.subr.mxu0 0.0
  %139 = vmatpush2.msra.mxu0 0.0
  %140 = vmatprep.mubr.f32.mxu0 0.0
  %141 = vmatmul.mubr.f32.gmra.mxu0 %v53
  %v142 = vpop.f32.mrf.mxu0
  %v143 = vadd.f32 0.0, %v142
  %v144 = vpop.f32.mrf.mxu0
  %145 = vmatprep.mubr.f32.mxu0 0.0
  %146 = vmatmul.mubr.f32.gmra.mxu0 %v56
  %v147 = vpop.f32.mrf.mxu0
  %v148 = vadd.f32 0.0, %v147
  %v149 = vpop.f32.mrf.mxu0
  %150 = vmatprep.mubr.f32.mxu0 0.0
  %151 = vmatmul.mubr.f32.gmra.mxu0 %v59
  %v152 = vpop.f32.mrf.mxu0
  %v153 = vadd.f32 0.0, %v152
  %v154 = vpop.f32.mrf.mxu0
  %155 = vmatprep.mubr.f32.mxu0 0.0
  %156 = vmatmul.mubr.f32.gmra.mxu0 %v62
  %v157 = vpop.f32.mrf.mxu0
  %v158 = vadd.f32 0.0, %v157
  %v159 = vpop.f32.mrf.mxu0
  %160 = vmatprep.mubr.f32.mxu0 0.0
  %161 = vmatmul.mubr.f32.gmra.mxu0 %v65
  %v162 = vpop.f32.mrf.mxu0
  %v163 = vadd.f32 0.0, %v162
  %v164 = vpop.f32.mrf.mxu0
  %165 = vmatprep.mubr.f32.mxu0 0.0
  %166 = vmatmul.mubr.f32.gmra.mxu0 %v68
  %v167 = vpop.f32.mrf.mxu0
  %v168 = vadd.f32 0.0, %v167
  %v169 = vpop.f32.mrf.mxu0
  %170 = vmatprep.mubr.f32.mxu0 0.0
  %171 = vmatmul.mubr.f32.gmra.mxu0 %v71
  %v172 = vpop.f32.mrf.mxu0
  %v173 = vadd.f32 0.0, %v172
  %v174 = vpop.f32.mrf.mxu0
  %175 = vmatprep.mubr.f32.mxu0 0.0
  %176 = vmatmul.mubr.f32.gmra.mxu0 %v74
  %v177 = vpop.f32.mrf.mxu0
  %v178 = vadd.f32 0.0, %v177
  %v179 = vpop.f32.mrf.mxu0
  %180 = vdwg.mxu0
  %vm181 = vcmask 785408
  %182 = vst.msk [vmem:[#allocation2] sm:$0xff] %vm181, %v143
  %183 = vst.msk [vmem:[#allocation2 + $0x8] sm:$0xff] %vm181, %v148
  %184 = vst.msk [vmem:[#allocation2 + $0x10] sm:$0xff] %vm181, %v153
  %185 = vst.msk [vmem:[#allocation2 + $0x18] sm:$0xff] %vm181, %v158
  %186 = vst.msk [vmem:[#allocation2 + $0x20] sm:$0xff] %vm181, %v163
  %187 = vst.msk [vmem:[#allocation2 + $0x28] sm:$0xff] %vm181, %v168
  %188 = vst.msk [vmem:[#allocation2 + $0x30] sm:$0xff] %vm181, %v173
  %189 = vst.msk [vmem:[#allocation2 + $0x38] sm:$0xff] %vm181, %v178
  %v190 = vld [vmem:[%s3] sm:$0xff]
  %v191 = vld [vmem:[%s3 + $0x8] sm:$0xff]
  %v192 = vld [vmem:[%s4] sm:$0xff]
  %v193 = vld [vmem:[%s4 + $0x8] sm:$0xff]
  %vm194 = vcmp.gt.f32.partialorder %v38, 0.0
  %v195 = vsel %vm194, 1, 0
  %v196 = vcvt.s32.f32 %v195
  %v197 = vld [vmem:[#allocation2] sm:$0xff]
  %vm198 = vcmask 130048
  %v200 = vsel %vm198, 0.0, 0
  %202 = vmatprep.subr.mxu0 0.0
  %203 = vmatpush1.msra.mxu0 0.0
  %204 = vmatprep.subr.mxu0 0.0
  %205 = vmatpush1.msra.mxu0 0.0
  %206 = vmatprep.subr.mxu0 0.0
  %207 = vmatpush1.msra.mxu0 0.0
  %208 = vmatprep.subr.mxu0 0.0
  %209 = vmatpush1.msra.mxu0 0.0
  %210 = vmatprep.subr.mxu0 0.0
  %211 = vmatpush1.msra.mxu0 0.0
  %212 = vmatprep.subr.mxu0 0.0
  %213 = vmatpush1.msra.mxu0 0.0
  %214 = vmatprep.subr.mxu0 0.0
  %215 = vmatpush1.msra.mxu0 0.0
  %216 = vmatprep.subr.mxu0 0.0
  %217 = vmatpush1.msra.mxu0 0.0
  %218 = vmatprep.subr.mxu0 0.0
  %219 = vmatpush1.msra.mxu0 0.0
  %220 = vmatprep.subr.mxu0 0.0
  %221 = vmatpush1.msra.mxu0 0.0
  %222 = vmatprep.subr.mxu0 0.0
  %223 = vmatpush1.msra.mxu0 0.0
  %224 = vmatprep.subr.mxu0 0.0
  %225 = vmatpush1.msra.mxu0 0.0
  %226 = vmatprep.subr.mxu0 0.0
  %227 = vmatpush1.msra.mxu0 0.0
  %228 = vmatprep.subr.mxu0 0.0
  %229 = vmatpush1.msra.mxu0 0.0
  %230 = vmatprep.subr.mxu0 0.0
  %231 = vmatpush1.msra.mxu0 %v191
  %232 = vmatprep.subr.mxu0 0.0
  %233 = vmatpush1.msra.mxu0 %v190
  %234 = vmatprep.subr.mxu0 0.0
  %235 = vmatpush2.msra.mxu0 0.0
  %236 = vmatprep.subr.mxu0 0.0
  %237 = vmatpush2.msra.mxu0 0.0
  %238 = vmatprep.subr.mxu0 0.0
  %239 = vmatpush2.msra.mxu0 0.0
  %240 = vmatprep.subr.mxu0 0.0
  %241 = vmatpush2.msra.mxu0 0.0
  %242 = vmatprep.subr.mxu0 0.0
  %243 = vmatpush2.msra.mxu0 0.0
  %244 = vmatprep.subr.mxu0 0.0
  %245 = vmatpush2.msra.mxu0 0.0
  %246 = vmatprep.subr.mxu0 0.0
  %247 = vmatpush2.msra.mxu0 0.0
  %248 = vmatprep.subr.mxu0 0.0
  %249 = vmatpush2.msra.mxu0 0.0
  %250 = vmatprep.subr.mxu0 0.0
  %251 = vmatpush2.msra.mxu0 0.0
  %252 = vmatprep.subr.mxu0 0.0
  %253 = vmatpush2.msra.mxu0 0.0
  %254 = vmatprep.subr.mxu0 0.0
  %255 = vmatpush2.msra.mxu0 0.0
  %256 = vmatprep.subr.mxu0 0.0
  %257 = vmatpush2.msra.mxu0 0.0
  %258 = vmatprep.subr.mxu0 0.0
  %259 = vmatpush2.msra.mxu0 0.0
  %260 = vmatprep.subr.mxu0 0.0
  %261 = vmatpush2.msra.mxu0 0.0
  %262 = vmatprep.subr.mxu0 0.0
  %263 = vmatpush2.msra.mxu0 0.0
  %264 = vmatprep.subr.mxu0 0.0
  %265 = vmatpush2.msra.mxu0 0.0
  %266 = vmatprep.mubr.f32.mxu0 0.0
  %267 = vmatmul.mubr.f32.gmra.mxu0 %v200
  %v268 = vpop.f32.mrf.mxu0
  %v269 = vadd.f32 0.0, %v268
  %v270 = vpop.f32.mrf.mxu0
  %271 = vdwg.mxu0
  %v272 = vadd.f32 %v197, %v269
  %v273 = vxor.u32 %v272, 2147483648
  %v274 = vmul.f32 %v273, 1.442695
  %v275 = vpow.pop %v274
  %v276 = vadd.f32 %v275, 1.0
  %v277 = vrcp.pop %v276
  %v278 = vmul.f32 1.0, %v277
  %280 = vrot.lane.b32.xlu0 %v269, 96
  %v281 = vpop.permute.xlu0 %280
  %v283 = vmul.f32 %v278, %v281
  %285 = vrot.lane.b32.xlu0 %v283, 32
  %v286 = vpop.permute.xlu0 %285
  %v288 = vadd.f32 %v197, %v286
  %v289 = vtanh.pop %v288
  %v290 = vsub.f32 1.0, %v278
  %292 = vrot.lane.b32.xlu0 %v289, 112
  %v293 = vpop.permute.xlu0 %292
  %v295 = vmul.f32 %v290, %v293
  %v296 = vmul.f32 %v278, 0.0
  %v297 = vadd.f32 %v295, %v296
  %v298 = vmul.f32 %v196, %v297
  %300 = vrot.lane.b32.xlu0 %v298, 112
  %v301 = vpop.permute.xlu0 %300
  %303 = vst.msk [vmem:[#allocation3] sm:$0xff] %vm198, %v301
  %v304 = vsub.f32 1.0, %v196
  %v305 = vmul.f32 %v304, 0.0
  %v306 = vadd.f32 %v298, %v305
  %vm307 = vcmp.gt.f32.partialorder %v38, 1.0
  %v308 = vsel %vm307, 1, 0
  %v309 = vcvt.s32.f32 %v308
  %s310 = scalar_lea.vmem [#allocation2], 8
  %v311 = vld [vmem:[%s310] sm:$0xff]
  %313 = vrot.lane.b32.xlu0 %v306, 112
  %v314 = vpop.permute.xlu0 %313
  %v315 = vsel %vm198, %v314, 0
  %317 = vmatprep.subr.mxu0 0.0
  %318 = vmatpush1.msra.mxu0 0.0
  %319 = vmatprep.subr.mxu0 0.0
  %320 = vmatpush1.msra.mxu0 0.0
  %321 = vmatprep.subr.mxu0 0.0
  %322 = vmatpush1.msra.mxu0 0.0
  %323 = vmatprep.subr.mxu0 0.0
  %324 = vmatpush1.msra.mxu0 0.0
  %325 = vmatprep.subr.mxu0 0.0
  %326 = vmatpush1.msra.mxu0 0.0
  %327 = vmatprep.subr.mxu0 0.0
  %328 = vmatpush1.msra.mxu0 0.0
  %329 = vmatprep.subr.mxu0 0.0
  %330 = vmatpush1.msra.mxu0 0.0
  %331 = vmatprep.subr.mxu0 0.0
  %332 = vmatpush1.msra.mxu0 0.0
  %333 = vmatprep.subr.mxu0 0.0
  %334 = vmatpush1.msra.mxu0 0.0
  %335 = vmatprep.subr.mxu0 0.0
  %336 = vmatpush1.msra.mxu0 0.0
  %337 = vmatprep.subr.mxu0 0.0
  %338 = vmatpush1.msra.mxu0 0.0
  %339 = vmatprep.subr.mxu0 0.0
  %340 = vmatpush1.msra.mxu0 0.0
  %341 = vmatprep.subr.mxu0 0.0
  %342 = vmatpush1.msra.mxu0 0.0
  %343 = vmatprep.subr.mxu0 0.0
  %344 = vmatpush1.msra.mxu0 0.0
  %345 = vmatprep.subr.mxu0 0.0
  %346 = vmatpush1.msra.mxu0 %v191
  %347 = vmatprep.subr.mxu0 0.0
  %348 = vmatpush1.msra.mxu0 %v190
  %349 = vmatprep.subr.mxu0 0.0
  %350 = vmatpush2.msra.mxu0 0.0
  %351 = vmatprep.subr.mxu0 0.0
  %352 = vmatpush2.msra.mxu0 0.0
  %353 = vmatprep.subr.mxu0 0.0
  %354 = vmatpush2.msra.mxu0 0.0
  %355 = vmatprep.subr.mxu0 0.0
  %356 = vmatpush2.msra.mxu0 0.0
  %357 = vmatprep.subr.mxu0 0.0
  %358 = vmatpush2.msra.mxu0 0.0
  %359 = vmatprep.subr.mxu0 0.0
  %360 = vmatpush2.msra.mxu0 0.0
  %361 = vmatprep.subr.mxu0 0.0
  %362 = vmatpush2.msra.mxu0 0.0
  %363 = vmatprep.subr.mxu0 0.0
  %364 = vmatpush2.msra.mxu0 0.0
  %365 = vmatprep.subr.mxu0 0.0
  %366 = vmatpush2.msra.mxu0 0.0
  %367 = vmatprep.subr.mxu0 0.0
  %368 = vmatpush2.msra.mxu0 0.0
  %369 = vmatprep.subr.mxu0 0.0
  %370 = vmatpush2.msra.mxu0 0.0
  %371 = vmatprep.subr.mxu0 0.0
  %372 = vmatpush2.msra.mxu0 0.0
  %373 = vmatprep.subr.mxu0 0.0
  %374 = vmatpush2.msra.mxu0 0.0
  %375 = vmatprep.subr.mxu0 0.0
  %376 = vmatpush2.msra.mxu0 0.0
  %377 = vmatprep.subr.mxu0 0.0
  %378 = vmatpush2.msra.mxu0 0.0
  %379 = vmatprep.subr.mxu0 0.0
  %380 = vmatpush2.msra.mxu0 0.0
  %381 = vmatprep.mubr.f32.mxu0 0.0
  %382 = vmatmul.mubr.f32.gmra.mxu0 %v315
  %v383 = vpop.f32.mrf.mxu0
  %v384 = vadd.f32 0.0, %v383
  %v385 = vpop.f32.mrf.mxu0
  %386 = vdwg.mxu0
  %v387 = vadd.f32 %v311, %v384
  %v388 = vxor.u32 %v387, 2147483648
  %v389 = vmul.f32 %v388, 1.442695
  %v390 = vpow.pop %v389
  %v391 = vadd.f32 %v390, 1.0
  %v392 = vrcp.pop %v391
  %v393 = vmul.f32 1.0, %v392
  %395 = vrot.lane.b32.xlu0 %v384, 96
  %v396 = vpop.permute.xlu0 %395
  %v398 = vmul.f32 %v393, %v396
  %400 = vrot.lane.b32.xlu0 %v398, 32
  %v401 = vpop.permute.xlu0 %400
  %v403 = vadd.f32 %v311, %v401
  %v404 = vtanh.pop %v403
  %v405 = vsub.f32 1.0, %v393
  %407 = vrot.lane.b32.xlu0 %v404, 112
  %v408 = vpop.permute.xlu0 %407
  %v410 = vmul.f32 %v405, %v408
  %v411 = vmul.f32 %v393, %v306
  %v412 = vadd.f32 %v410, %v411
  %v413 = vmul.f32 %v309, %v412
  %415 = vrot.lane.b32.xlu0 %v413, 112
  %v416 = vpop.permute.xlu0 %415
  %s418 = scalar_lea.vmem [#allocation3], 8
  %419 = vst.msk [vmem:[%s418] sm:$0xff] %vm198, %v416
  %v420 = vsub.f32 1.0, %v309
  %v421 = vmul.f32 %v420, %v306
  %v422 = vadd.f32 %v413, %v421
  %vm423 = vcmp.gt.f32.partialorder %v38, 2.0
  %v424 = vsel %vm423, 1, 0
  %v425 = vcvt.s32.f32 %v424
  %s426 = scalar_lea.vmem [#allocation2], 16
  %v427 = vld [vmem:[%s426] sm:$0xff]
  %429 = vrot.lane.b32.xlu0 %v422, 112
  %v430 = vpop.permute.xlu0 %429
  %v431 = vsel %vm198, %v430, 0
  %433 = vmatprep.subr.mxu0 0.0
  %434 = vmatpush1.msra.mxu0 0.0
  %435 = vmatprep.subr.mxu0 0.0
  %436 = vmatpush1.msra.mxu0 0.0
  %437 = vmatprep.subr.mxu0 0.0
  %438 = vmatpush1.msra.mxu0 0.0
  %439 = vmatprep.subr.mxu0 0.0
  %440 = vmatpush1.msra.mxu0 0.0
  %441 = vmatprep.subr.mxu0 0.0
  %442 = vmatpush1.msra.mxu0 0.0
  %443 = vmatprep.subr.mxu0 0.0
  %444 = vmatpush1.msra.mxu0 0.0
  %445 = vmatprep.subr.mxu0 0.0
  %446 = vmatpush1.msra.mxu0 0.0
  %447 = vmatprep.subr.mxu0 0.0
  %448 = vmatpush1.msra.mxu0 0.0
  %449 = vmatprep.subr.mxu0 0.0
  %450 = vmatpush1.msra.mxu0 0.0
  %451 = vmatprep.subr.mxu0 0.0
  %452 = vmatpush1.msra.mxu0 0.0
  %453 = vmatprep.subr.mxu0 0.0
  %454 = vmatpush1.msra.mxu0 0.0
  %455 = vmatprep.subr.mxu0 0.0
  %456 = vmatpush1.msra.mxu0 0.0
  %457 = vmatprep.subr.mxu0 0.0
  %458 = vmatpush1.msra.mxu0 0.0
  %459 = vmatprep.subr.mxu0 0.0
  %460 = vmatpush1.msra.mxu0 0.0
  %461 = vmatprep.subr.mxu0 0.0
  %462 = vmatpush1.msra.mxu0 %v191
  %463 = vmatprep.subr.mxu0 0.0
  %464 = vmatpush1.msra.mxu0 %v190
  %465 = vmatprep.subr.mxu0 0.0
  %466 = vmatpush2.msra.mxu0 0.0
  %467 = vmatprep.subr.mxu0 0.0
  %468 = vmatpush2.msra.mxu0 0.0
  %469 = vmatprep.subr.mxu0 0.0
  %470 = vmatpush2.msra.mxu0 0.0
  %471 = vmatprep.subr.mxu0 0.0
  %472 = vmatpush2.msra.mxu0 0.0
  %473 = vmatprep.subr.mxu0 0.0
  %474 = vmatpush2.msra.mxu0 0.0
  %475 = vmatprep.subr.mxu0 0.0
  %476 = vmatpush2.msra.mxu0 0.0
  %477 = vmatprep.subr.mxu0 0.0
  %478 = vmatpush2.msra.mxu0 0.0
  %479 = vmatprep.subr.mxu0 0.0
  %480 = vmatpush2.msra.mxu0 0.0
  %481 = vmatprep.subr.mxu0 0.0
  %482 = vmatpush2.msra.mxu0 0.0
  %483 = vmatprep.subr.mxu0 0.0
  %484 = vmatpush2.msra.mxu0 0.0
  %485 = vmatprep.subr.mxu0 0.0
  %486 = vmatpush2.msra.mxu0 0.0
  %487 = vmatprep.subr.mxu0 0.0
  %488 = vmatpush2.msra.mxu0 0.0
  %489 = vmatprep.subr.mxu0 0.0
  %490 = vmatpush2.msra.mxu0 0.0
  %491 = vmatprep.subr.mxu0 0.0
  %492 = vmatpush2.msra.mxu0 0.0
  %493 = vmatprep.subr.mxu0 0.0
  %494 = vmatpush2.msra.mxu0 0.0
  %495 = vmatprep.subr.mxu0 0.0
  %496 = vmatpush2.msra.mxu0 0.0
  %497 = vmatprep.mubr.f32.mxu0 0.0
  %498 = vmatmul.mubr.f32.gmra.mxu0 %v431
  %v499 = vpop.f32.mrf.mxu0
  %v500 = vadd.f32 0.0, %v499
  %v501 = vpop.f32.mrf.mxu0
  %502 = vdwg.mxu0
  %v503 = vadd.f32 %v427, %v500
  %v504 = vxor.u32 %v503, 2147483648
  %v505 = vmul.f32 %v504, 1.442695
  %v506 = vpow.pop %v505
  %v507 = vadd.f32 %v506, 1.0
  %v508 = vrcp.pop %v507
  %v509 = vmul.f32 1.0, %v508
  %511 = vrot.lane.b32.xlu0 %v500, 96
  %v512 = vpop.permute.xlu0 %511
  %v514 = vmul.f32 %v509, %v512
  %516 = vrot.lane.b32.xlu0 %v514, 32
  %v517 = vpop.permute.xlu0 %516
  %v519 = vadd.f32 %v427, %v517
  %v520 = vtanh.pop %v519
  %v521 = vsub.f32 1.0, %v509
  %523 = vrot.lane.b32.xlu0 %v520, 112
  %v524 = vpop.permute.xlu0 %523
  %v526 = vmul.f32 %v521, %v524
  %v527 = vmul.f32 %v509, %v422
  %v528 = vadd.f32 %v526, %v527
  %v529 = vmul.f32 %v425, %v528
  %531 = vrot.lane.b32.xlu0 %v529, 112
  %v532 = vpop.permute.xlu0 %531
  %s534 = scalar_lea.vmem [#allocation3], 16
  %535 = vst.msk [vmem:[%s534] sm:$0xff] %vm198, %v532
  %v536 = vsub.f32 1.0, %v425
  %v537 = vmul.f32 %v536, %v422
  %v538 = vadd.f32 %v529, %v537
  %vm539 = vcmp.gt.f32.partialorder %v38, 3.0
  %v540 = vsel %vm539, 1, 0
  %v541 = vcvt.s32.f32 %v540
  %s542 = scalar_lea.vmem [#allocation2], 24
  %v543 = vld [vmem:[%s542] sm:$0xff]
  %545 = vrot.lane.b32.xlu0 %v538, 112
  %v546 = vpop.permute.xlu0 %545
  %v547 = vsel %vm198, %v546, 0
  %549 = vmatprep.subr.mxu0 0.0
  %550 = vmatpush1.msra.mxu0 0.0
  %551 = vmatprep.subr.mxu0 0.0
  %552 = vmatpush1.msra.mxu0 0.0
  %553 = vmatprep.subr.mxu0 0.0
  %554 = vmatpush1.msra.mxu0 0.0
  %555 = vmatprep.subr.mxu0 0.0
  %556 = vmatpush1.msra.mxu0 0.0
  %557 = vmatprep.subr.mxu0 0.0
  %558 = vmatpush1.msra.mxu0 0.0
  %559 = vmatprep.subr.mxu0 0.0
  %560 = vmatpush1.msra.mxu0 0.0
  %561 = vmatprep.subr.mxu0 0.0
  %562 = vmatpush1.msra.mxu0 0.0
  %563 = vmatprep.subr.mxu0 0.0
  %564 = vmatpush1.msra.mxu0 0.0
  %565 = vmatprep.subr.mxu0 0.0
  %566 = vmatpush1.msra.mxu0 0.0
  %567 = vmatprep.subr.mxu0 0.0
  %568 = vmatpush1.msra.mxu0 0.0
  %569 = vmatprep.subr.mxu0 0.0
  %570 = vmatpush1.msra.mxu0 0.0
  %571 = vmatprep.subr.mxu0 0.0
  %572 = vmatpush1.msra.mxu0 0.0
  %573 = vmatprep.subr.mxu0 0.0
  %574 = vmatpush1.msra.mxu0 0.0
  %575 = vmatprep.subr.mxu0 0.0
  %576 = vmatpush1.msra.mxu0 0.0
  %577 = vmatprep.subr.mxu0 0.0
  %578 = vmatpush1.msra.mxu0 %v191
  %579 = vmatprep.subr.mxu0 0.0
  %580 = vmatpush1.msra.mxu0 %v190
  %581 = vmatprep.subr.mxu0 0.0
  %582 = vmatpush2.msra.mxu0 0.0
  %583 = vmatprep.subr.mxu0 0.0
  %584 = vmatpush2.msra.mxu0 0.0
  %585 = vmatprep.subr.mxu0 0.0
  %586 = vmatpush2.msra.mxu0 0.0
  %587 = vmatprep.subr.mxu0 0.0
  %588 = vmatpush2.msra.mxu0 0.0
  %589 = vmatprep.subr.mxu0 0.0
  %590 = vmatpush2.msra.mxu0 0.0
  %591 = vmatprep.subr.mxu0 0.0
  %592 = vmatpush2.msra.mxu0 0.0
  %593 = vmatprep.subr.mxu0 0.0
  %594 = vmatpush2.msra.mxu0 0.0
  %595 = vmatprep.subr.mxu0 0.0
  %596 = vmatpush2.msra.mxu0 0.0
  %597 = vmatprep.subr.mxu0 0.0
  %598 = vmatpush2.msra.mxu0 0.0
  %599 = vmatprep.subr.mxu0 0.0
  %600 = vmatpush2.msra.mxu0 0.0
  %601 = vmatprep.subr.mxu0 0.0
  %602 = vmatpush2.msra.mxu0 0.0
  %603 = vmatprep.subr.mxu0 0.0
  %604 = vmatpush2.msra.mxu0 0.0
  %605 = vmatprep.subr.mxu0 0.0
  %606 = vmatpush2.msra.mxu0 0.0
  %607 = vmatprep.subr.mxu0 0.0
  %608 = vmatpush2.msra.mxu0 0.0
  %609 = vmatprep.subr.mxu0 0.0
  %610 = vmatpush2.msra.mxu0 0.0
  %611 = vmatprep.subr.mxu0 0.0
  %612 = vmatpush2.msra.mxu0 0.0
  %613 = vmatprep.mubr.f32.mxu0 0.0
  %614 = vmatmul.mubr.f32.gmra.mxu0 %v547
  %v615 = vpop.f32.mrf.mxu0
  %v616 = vadd.f32 0.0, %v615
  %v617 = vpop.f32.mrf.mxu0
  %618 = vdwg.mxu0
  %v619 = vadd.f32 %v543, %v616
  %v620 = vxor.u32 %v619, 2147483648
  %v621 = vmul.f32 %v620, 1.442695
  %v622 = vpow.pop %v621
  %v623 = vadd.f32 %v622, 1.0
  %v624 = vrcp.pop %v623
  %v625 = vmul.f32 1.0, %v624
  %627 = vrot.lane.b32.xlu0 %v616, 96
  %v628 = vpop.permute.xlu0 %627
  %v630 = vmul.f32 %v625, %v628
  %632 = vrot.lane.b32.xlu0 %v630, 32
  %v633 = vpop.permute.xlu0 %632
  %v635 = vadd.f32 %v543, %v633
  %v636 = vtanh.pop %v635
  %v637 = vsub.f32 1.0, %v625
  %639 = vrot.lane.b32.xlu0 %v636, 112
  %v640 = vpop.permute.xlu0 %639
  %v642 = vmul.f32 %v637, %v640
  %v643 = vmul.f32 %v625, %v538
  %v644 = vadd.f32 %v642, %v643
  %v645 = vmul.f32 %v541, %v644
  %647 = vrot.lane.b32.xlu0 %v645, 112
  %v648 = vpop.permute.xlu0 %647
  %s650 = scalar_lea.vmem [#allocation3], 24
  %651 = vst.msk [vmem:[%s650] sm:$0xff] %vm198, %v648
  %v652 = vsub.f32 1.0, %v541
  %v653 = vmul.f32 %v652, %v538
  %v654 = vadd.f32 %v645, %v653
  %vm655 = vcmp.gt.f32.partialorder %v38, 4.0
  %v656 = vsel %vm655, 1, 0
  %v657 = vcvt.s32.f32 %v656
  %s658 = scalar_lea.vmem [#allocation2], 32
  %v659 = vld [vmem:[%s658] sm:$0xff]
  %661 = vrot.lane.b32.xlu0 %v654, 112
  %v662 = vpop.permute.xlu0 %661
  %v663 = vsel %vm198, %v662, 0
  %665 = vmatprep.subr.mxu0 0.0
  %666 = vmatpush1.msra.mxu0 0.0
  %667 = vmatprep.subr.mxu0 0.0
  %668 = vmatpush1.msra.mxu0 0.0
  %669 = vmatprep.subr.mxu0 0.0
  %670 = vmatpush1.msra.mxu0 0.0
  %671 = vmatprep.subr.mxu0 0.0
  %672 = vmatpush1.msra.mxu0 0.0
  %673 = vmatprep.subr.mxu0 0.0
  %674 = vmatpush1.msra.mxu0 0.0
  %675 = vmatprep.subr.mxu0 0.0
  %676 = vmatpush1.msra.mxu0 0.0
  %677 = vmatprep.subr.mxu0 0.0
  %678 = vmatpush1.msra.mxu0 0.0
  %679 = vmatprep.subr.mxu0 0.0
  %680 = vmatpush1.msra.mxu0 0.0
  %681 = vmatprep.subr.mxu0 0.0
  %682 = vmatpush1.msra.mxu0 0.0
  %683 = vmatprep.subr.mxu0 0.0
  %684 = vmatpush1.msra.mxu0 0.0
  %685 = vmatprep.subr.mxu0 0.0
  %686 = vmatpush1.msra.mxu0 0.0
  %687 = vmatprep.subr.mxu0 0.0
  %688 = vmatpush1.msra.mxu0 0.0
  %689 = vmatprep.subr.mxu0 0.0
  %690 = vmatpush1.msra.mxu0 0.0
  %691 = vmatprep.subr.mxu0 0.0
  %692 = vmatpush1.msra.mxu0 0.0
  %693 = vmatprep.subr.mxu0 0.0
  %694 = vmatpush1.msra.mxu0 %v191
  %695 = vmatprep.subr.mxu0 0.0
  %696 = vmatpush1.msra.mxu0 %v190
  %697 = vmatprep.subr.mxu0 0.0
  %698 = vmatpush2.msra.mxu0 0.0
  %699 = vmatprep.subr.mxu0 0.0
  %700 = vmatpush2.msra.mxu0 0.0
  %701 = vmatprep.subr.mxu0 0.0
  %702 = vmatpush2.msra.mxu0 0.0
  %703 = vmatprep.subr.mxu0 0.0
  %704 = vmatpush2.msra.mxu0 0.0
  %705 = vmatprep.subr.mxu0 0.0
  %706 = vmatpush2.msra.mxu0 0.0
  %707 = vmatprep.subr.mxu0 0.0
  %708 = vmatpush2.msra.mxu0 0.0
  %709 = vmatprep.subr.mxu0 0.0
  %710 = vmatpush2.msra.mxu0 0.0
  %711 = vmatprep.subr.mxu0 0.0
  %712 = vmatpush2.msra.mxu0 0.0
  %713 = vmatprep.subr.mxu0 0.0
  %714 = vmatpush2.msra.mxu0 0.0
  %715 = vmatprep.subr.mxu0 0.0
  %716 = vmatpush2.msra.mxu0 0.0
  %717 = vmatprep.subr.mxu0 0.0
  %718 = vmatpush2.msra.mxu0 0.0
  %719 = vmatprep.subr.mxu0 0.0
  %720 = vmatpush2.msra.mxu0 0.0
  %721 = vmatprep.subr.mxu0 0.0
  %722 = vmatpush2.msra.mxu0 0.0
  %723 = vmatprep.subr.mxu0 0.0
  %724 = vmatpush2.msra.mxu0 0.0
  %725 = vmatprep.subr.mxu0 0.0
  %726 = vmatpush2.msra.mxu0 0.0
  %727 = vmatprep.subr.mxu0 0.0
  %728 = vmatpush2.msra.mxu0 0.0
  %729 = vmatprep.mubr.f32.mxu0 0.0
  %730 = vmatmul.mubr.f32.gmra.mxu0 %v663
  %v731 = vpop.f32.mrf.mxu0
  %v732 = vadd.f32 0.0, %v731
  %v733 = vpop.f32.mrf.mxu0
  %734 = vdwg.mxu0
  %v735 = vadd.f32 %v659, %v732
  %v736 = vxor.u32 %v735, 2147483648
  %v737 = vmul.f32 %v736, 1.442695
  %v738 = vpow.pop %v737
  %v739 = vadd.f32 %v738, 1.0
  %v740 = vrcp.pop %v739
  %v741 = vmul.f32 1.0, %v740
  %743 = vrot.lane.b32.xlu0 %v732, 96
  %v744 = vpop.permute.xlu0 %743
  %v746 = vmul.f32 %v741, %v744
  %748 = vrot.lane.b32.xlu0 %v746, 32
  %v749 = vpop.permute.xlu0 %748
  %v751 = vadd.f32 %v659, %v749
  %v752 = vtanh.pop %v751
  %v753 = vsub.f32 1.0, %v741
  %755 = vrot.lane.b32.xlu0 %v752, 112
  %v756 = vpop.permute.xlu0 %755
  %v758 = vmul.f32 %v753, %v756
  %v759 = vmul.f32 %v741, %v654
  %v760 = vadd.f32 %v758, %v759
  %v761 = vmul.f32 %v657, %v760
  %763 = vrot.lane.b32.xlu0 %v761, 112
  %v764 = vpop.permute.xlu0 %763
  %s766 = scalar_lea.vmem [#allocation3], 32
  %767 = vst.msk [vmem:[%s766] sm:$0xff] %vm198, %v764
  %v768 = vsub.f32 1.0, %v657
  %v769 = vmul.f32 %v768, %v654
  %v770 = vadd.f32 %v761, %v769
  %vm771 = vcmp.gt.f32.partialorder %v38, 5.0
  %v772 = vsel %vm771, 1, 0
  %v773 = vcvt.s32.f32 %v772
  %s774 = scalar_lea.vmem [#allocation2], 40
  %v775 = vld [vmem:[%s774] sm:$0xff]
  %777 = vrot.lane.b32.xlu0 %v770, 112
  %v778 = vpop.permute.xlu0 %777
  %v779 = vsel %vm198, %v778, 0
  %781 = vmatprep.subr.mxu0 0.0
  %782 = vmatpush1.msra.mxu0 0.0
  %783 = vmatprep.subr.mxu0 0.0
  %784 = vmatpush1.msra.mxu0 0.0
  %785 = vmatprep.subr.mxu0 0.0
  %786 = vmatpush1.msra.mxu0 0.0
  %787 = vmatprep.subr.mxu0 0.0
  %788 = vmatpush1.msra.mxu0 0.0
  %789 = vmatprep.subr.mxu0 0.0
  %790 = vmatpush1.msra.mxu0 0.0
  %791 = vmatprep.subr.mxu0 0.0
  %792 = vmatpush1.msra.mxu0 0.0
  %793 = vmatprep.subr.mxu0 0.0
  %794 = vmatpush1.msra.mxu0 0.0
  %795 = vmatprep.subr.mxu0 0.0
  %796 = vmatpush1.msra.mxu0 0.0
  %797 = vmatprep.subr.mxu0 0.0
  %798 = vmatpush1.msra.mxu0 0.0
  %799 = vmatprep.subr.mxu0 0.0
  %800 = vmatpush1.msra.mxu0 0.0
  %801 = vmatprep.subr.mxu0 0.0
  %802 = vmatpush1.msra.mxu0 0.0
  %803 = vmatprep.subr.mxu0 0.0
  %804 = vmatpush1.msra.mxu0 0.0
  %805 = vmatprep.subr.mxu0 0.0
  %806 = vmatpush1.msra.mxu0 0.0
  %807 = vmatprep.subr.mxu0 0.0
  %808 = vmatpush1.msra.mxu0 0.0
  %809 = vmatprep.subr.mxu0 0.0
  %810 = vmatpush1.msra.mxu0 %v191
  %811 = vmatprep.subr.mxu0 0.0
  %812 = vmatpush1.msra.mxu0 %v190
  %813 = vmatprep.subr.mxu0 0.0
  %814 = vmatpush2.msra.mxu0 0.0
  %815 = vmatprep.subr.mxu0 0.0
  %816 = vmatpush2.msra.mxu0 0.0
  %817 = vmatprep.subr.mxu0 0.0
  %818 = vmatpush2.msra.mxu0 0.0
  %819 = vmatprep.subr.mxu0 0.0
  %820 = vmatpush2.msra.mxu0 0.0
  %821 = vmatprep.subr.mxu0 0.0
  %822 = vmatpush2.msra.mxu0 0.0
  %823 = vmatprep.subr.mxu0 0.0
  %824 = vmatpush2.msra.mxu0 0.0
  %825 = vmatprep.subr.mxu0 0.0
  %826 = vmatpush2.msra.mxu0 0.0
  %827 = vmatprep.subr.mxu0 0.0
  %828 = vmatpush2.msra.mxu0 0.0
  %829 = vmatprep.subr.mxu0 0.0
  %830 = vmatpush2.msra.mxu0 0.0
  %831 = vmatprep.subr.mxu0 0.0
  %832 = vmatpush2.msra.mxu0 0.0
  %833 = vmatprep.subr.mxu0 0.0
  %834 = vmatpush2.msra.mxu0 0.0
  %835 = vmatprep.subr.mxu0 0.0
  %836 = vmatpush2.msra.mxu0 0.0
  %837 = vmatprep.subr.mxu0 0.0
  %838 = vmatpush2.msra.mxu0 0.0
  %839 = vmatprep.subr.mxu0 0.0
  %840 = vmatpush2.msra.mxu0 0.0
  %841 = vmatprep.subr.mxu0 0.0
  %842 = vmatpush2.msra.mxu0 0.0
  %843 = vmatprep.subr.mxu0 0.0
  %844 = vmatpush2.msra.mxu0 0.0
  %845 = vmatprep.mubr.f32.mxu0 0.0
  %846 = vmatmul.mubr.f32.gmra.mxu0 %v779
  %v847 = vpop.f32.mrf.mxu0
  %v848 = vadd.f32 0.0, %v847
  %v849 = vpop.f32.mrf.mxu0
  %850 = vdwg.mxu0
  %v851 = vadd.f32 %v775, %v848
  %v852 = vxor.u32 %v851, 2147483648
  %v853 = vmul.f32 %v852, 1.442695
  %v854 = vpow.pop %v853
  %v855 = vadd.f32 %v854, 1.0
  %v856 = vrcp.pop %v855
  %v857 = vmul.f32 1.0, %v856
  %859 = vrot.lane.b32.xlu0 %v848, 96
  %v860 = vpop.permute.xlu0 %859
  %v862 = vmul.f32 %v857, %v860
  %864 = vrot.lane.b32.xlu0 %v862, 32
  %v865 = vpop.permute.xlu0 %864
  %v867 = vadd.f32 %v775, %v865
  %v868 = vtanh.pop %v867
  %v869 = vsub.f32 1.0, %v857
  %871 = vrot.lane.b32.xlu0 %v868, 112
  %v872 = vpop.permute.xlu0 %871
  %v874 = vmul.f32 %v869, %v872
  %v875 = vmul.f32 %v857, %v770
  %v876 = vadd.f32 %v874, %v875
  %v877 = vmul.f32 %v773, %v876
  %879 = vrot.lane.b32.xlu0 %v877, 112
  %v880 = vpop.permute.xlu0 %879
  %s882 = scalar_lea.vmem [#allocation3], 40
  %883 = vst.msk [vmem:[%s882] sm:$0xff] %vm198, %v880
  %v884 = vsub.f32 1.0, %v773
  %v885 = vmul.f32 %v884, %v770
  %v886 = vadd.f32 %v877, %v885
  %vm887 = vcmp.gt.f32.partialorder %v38, 6.0
  %v888 = vsel %vm887, 1, 0
  %v889 = vcvt.s32.f32 %v888
  %s890 = scalar_lea.vmem [#allocation2], 48
  %v891 = vld [vmem:[%s890] sm:$0xff]
  %893 = vrot.lane.b32.xlu0 %v886, 112
  %v894 = vpop.permute.xlu0 %893
  %v895 = vsel %vm198, %v894, 0
  %897 = vmatprep.subr.mxu0 0.0
  %898 = vmatpush1.msra.mxu0 0.0
  %899 = vmatprep.subr.mxu0 0.0
  %900 = vmatpush1.msra.mxu0 0.0
  %901 = vmatprep.subr.mxu0 0.0
  %902 = vmatpush1.msra.mxu0 0.0
  %903 = vmatprep.subr.mxu0 0.0
  %904 = vmatpush1.msra.mxu0 0.0
  %905 = vmatprep.subr.mxu0 0.0
  %906 = vmatpush1.msra.mxu0 0.0
  %907 = vmatprep.subr.mxu0 0.0
  %908 = vmatpush1.msra.mxu0 0.0
  %909 = vmatprep.subr.mxu0 0.0
  %910 = vmatpush1.msra.mxu0 0.0
  %911 = vmatprep.subr.mxu0 0.0
  %912 = vmatpush1.msra.mxu0 0.0
  %913 = vmatprep.subr.mxu0 0.0
  %914 = vmatpush1.msra.mxu0 0.0
  %915 = vmatprep.subr.mxu0 0.0
  %916 = vmatpush1.msra.mxu0 0.0
  %917 = vmatprep.subr.mxu0 0.0
  %918 = vmatpush1.msra.mxu0 0.0
  %919 = vmatprep.subr.mxu0 0.0
  %920 = vmatpush1.msra.mxu0 0.0
  %921 = vmatprep.subr.mxu0 0.0
  %922 = vmatpush1.msra.mxu0 0.0
  %923 = vmatprep.subr.mxu0 0.0
  %924 = vmatpush1.msra.mxu0 0.0
  %925 = vmatprep.subr.mxu0 0.0
  %926 = vmatpush1.msra.mxu0 %v191
  %927 = vmatprep.subr.mxu0 0.0
  %928 = vmatpush1.msra.mxu0 %v190
  %929 = vmatprep.subr.mxu0 0.0
  %930 = vmatpush2.msra.mxu0 0.0
  %931 = vmatprep.subr.mxu0 0.0
  %932 = vmatpush2.msra.mxu0 0.0
  %933 = vmatprep.subr.mxu0 0.0
  %934 = vmatpush2.msra.mxu0 0.0
  %935 = vmatprep.subr.mxu0 0.0
  %936 = vmatpush2.msra.mxu0 0.0
  %937 = vmatprep.subr.mxu0 0.0
  %938 = vmatpush2.msra.mxu0 0.0
  %939 = vmatprep.subr.mxu0 0.0
  %940 = vmatpush2.msra.mxu0 0.0
  %941 = vmatprep.subr.mxu0 0.0
  %942 = vmatpush2.msra.mxu0 0.0
  %943 = vmatprep.subr.mxu0 0.0
  %944 = vmatpush2.msra.mxu0 0.0
  %945 = vmatprep.subr.mxu0 0.0
  %946 = vmatpush2.msra.mxu0 0.0
  %947 = vmatprep.subr.mxu0 0.0
  %948 = vmatpush2.msra.mxu0 0.0
  %949 = vmatprep.subr.mxu0 0.0
  %950 = vmatpush2.msra.mxu0 0.0
  %951 = vmatprep.subr.mxu0 0.0
  %952 = vmatpush2.msra.mxu0 0.0
  %953 = vmatprep.subr.mxu0 0.0
  %954 = vmatpush2.msra.mxu0 0.0
  %955 = vmatprep.subr.mxu0 0.0
  %956 = vmatpush2.msra.mxu0 0.0
  %957 = vmatprep.subr.mxu0 0.0
  %958 = vmatpush2.msra.mxu0 0.0
  %959 = vmatprep.subr.mxu0 0.0
  %960 = vmatpush2.msra.mxu0 0.0
  %961 = vmatprep.mubr.f32.mxu0 0.0
  %962 = vmatmul.mubr.f32.gmra.mxu0 %v895
  %v963 = vpop.f32.mrf.mxu0
  %v964 = vadd.f32 0.0, %v963
  %v965 = vpop.f32.mrf.mxu0
  %966 = vdwg.mxu0
  %v967 = vadd.f32 %v891, %v964
  %v968 = vxor.u32 %v967, 2147483648
  %v969 = vmul.f32 %v968, 1.442695
  %v970 = vpow.pop %v969
  %v971 = vadd.f32 %v970, 1.0
  %v972 = vrcp.pop %v971
  %v973 = vmul.f32 1.0, %v972
  %975 = vrot.lane.b32.xlu0 %v964, 96
  %v976 = vpop.permute.xlu0 %975
  %v978 = vmul.f32 %v973, %v976
  %980 = vrot.lane.b32.xlu0 %v978, 32
  %v981 = vpop.permute.xlu0 %980
  %v983 = vadd.f32 %v891, %v981
  %v984 = vtanh.pop %v983
  %v985 = vsub.f32 1.0, %v973
  %987 = vrot.lane.b32.xlu0 %v984, 112
  %v988 = vpop.permute.xlu0 %987
  %v990 = vmul.f32 %v985, %v988
  %v991 = vmul.f32 %v973, %v886
  %v992 = vadd.f32 %v990, %v991
  %v993 = vmul.f32 %v889, %v992
  %995 = vrot.lane.b32.xlu0 %v993, 112
  %v996 = vpop.permute.xlu0 %995
  %s998 = scalar_lea.vmem [#allocation3], 48
  %999 = vst.msk [vmem:[%s998] sm:$0xff] %vm198, %v996
  %v1000 = vsub.f32 1.0, %v889
  %v1001 = vmul.f32 %v1000, %v886
  %v1002 = vadd.f32 %v993, %v1001
  %vm1003 = vcmp.gt.f32.partialorder %v38, 7.0
  %v1004 = vsel %vm1003, 1, 0
  %v1005 = vcvt.s32.f32 %v1004
  %s1006 = scalar_lea.vmem [#allocation2], 56
  %v1007 = vld [vmem:[%s1006] sm:$0xff]
  %1009 = vrot.lane.b32.xlu0 %v1002, 112
  %v1010 = vpop.permute.xlu0 %1009
  %v1011 = vsel %vm198, %v1010, 0
  %1013 = vmatprep.subr.mxu0 0.0
  %1014 = vmatpush1.msra.mxu0 0.0
  %1015 = vmatprep.subr.mxu0 0.0
  %1016 = vmatpush1.msra.mxu0 0.0
  %1017 = vmatprep.subr.mxu0 0.0
  %1018 = vmatpush1.msra.mxu0 0.0
  %1019 = vmatprep.subr.mxu0 0.0
  %1020 = vmatpush1.msra.mxu0 0.0
  %1021 = vmatprep.subr.mxu0 0.0
  %1022 = vmatpush1.msra.mxu0 0.0
  %1023 = vmatprep.subr.mxu0 0.0
  %1024 = vmatpush1.msra.mxu0 0.0
  %1025 = vmatprep.subr.mxu0 0.0
  %1026 = vmatpush1.msra.mxu0 0.0
  %1027 = vmatprep.subr.mxu0 0.0
  %1028 = vmatpush1.msra.mxu0 0.0
  %1029 = vmatprep.subr.mxu0 0.0
  %1030 = vmatpush1.msra.mxu0 0.0
  %1031 = vmatprep.subr.mxu0 0.0
  %1032 = vmatpush1.msra.mxu0 0.0
  %1033 = vmatprep.subr.mxu0 0.0
  %1034 = vmatpush1.msra.mxu0 0.0
  %1035 = vmatprep.subr.mxu0 0.0
  %1036 = vmatpush1.msra.mxu0 0.0
  %1037 = vmatprep.subr.mxu0 0.0
  %1038 = vmatpush1.msra.mxu0 0.0
  %1039 = vmatprep.subr.mxu0 0.0
  %1040 = vmatpush1.msra.mxu0 0.0
  %1041 = vmatprep.subr.mxu0 0.0
  %1042 = vmatpush1.msra.mxu0 %v191
  %1043 = vmatprep.subr.mxu0 0.0
  %1044 = vmatpush1.msra.mxu0 %v190
  %1045 = vmatprep.subr.mxu0 0.0
  %1046 = vmatpush2.msra.mxu0 0.0
  %1047 = vmatprep.subr.mxu0 0.0
  %1048 = vmatpush2.msra.mxu0 0.0
  %1049 = vmatprep.subr.mxu0 0.0
  %1050 = vmatpush2.msra.mxu0 0.0
  %1051 = vmatprep.subr.mxu0 0.0
  %1052 = vmatpush2.msra.mxu0 0.0
  %1053 = vmatprep.subr.mxu0 0.0
  %1054 = vmatpush2.msra.mxu0 0.0
  %1055 = vmatprep.subr.mxu0 0.0
  %1056 = vmatpush2.msra.mxu0 0.0
  %1057 = vmatprep.subr.mxu0 0.0
  %1058 = vmatpush2.msra.mxu0 0.0
  %1059 = vmatprep.subr.mxu0 0.0
  %1060 = vmatpush2.msra.mxu0 0.0
  %1061 = vmatprep.subr.mxu0 0.0
  %1062 = vmatpush2.msra.mxu0 0.0
  %1063 = vmatprep.subr.mxu0 0.0
  %1064 = vmatpush2.msra.mxu0 0.0
  %1065 = vmatprep.subr.mxu0 0.0
  %1066 = vmatpush2.msra.mxu0 0.0
  %1067 = vmatprep.subr.mxu0 0.0
  %1068 = vmatpush2.msra.mxu0 0.0
  %1069 = vmatprep.subr.mxu0 0.0
  %1070 = vmatpush2.msra.mxu0 0.0
  %1071 = vmatprep.subr.mxu0 0.0
  %1072 = vmatpush2.msra.mxu0 0.0
  %1073 = vmatprep.subr.mxu0 0.0
  %1074 = vmatpush2.msra.mxu0 0.0
  %1075 = vmatprep.subr.mxu0 0.0
  %1076 = vmatpush2.msra.mxu0 0.0
  %1077 = vmatprep.mubr.f32.mxu0 0.0
  %1078 = vmatmul.mubr.f32.gmra.mxu0 %v1011
  %v1079 = vpop.f32.mrf.mxu0
  %v1080 = vadd.f32 0.0, %v1079
  %v1081 = vpop.f32.mrf.mxu0
  %1082 = vdwg.mxu0
  %v1083 = vadd.f32 %v1007, %v1080
  %v1084 = vxor.u32 %v1083, 2147483648
  %v1085 = vmul.f32 %v1084, 1.442695
  %v1086 = vpow.pop %v1085
  %v1087 = vadd.f32 %v1086, 1.0
  %v1088 = vrcp.pop %v1087
  %v1089 = vmul.f32 1.0, %v1088
  %1091 = vrot.lane.b32.xlu0 %v1080, 96
  %v1092 = vpop.permute.xlu0 %1091
  %v1094 = vmul.f32 %v1089, %v1092
  %1096 = vrot.lane.b32.xlu0 %v1094, 32
  %v1097 = vpop.permute.xlu0 %1096
  %v1099 = vadd.f32 %v1007, %v1097
  %v1100 = vtanh.pop %v1099
  %v1101 = vsub.f32 1.0, %v1089
  %1103 = vrot.lane.b32.xlu0 %v1100, 112
  %v1104 = vpop.permute.xlu0 %1103
  %v1106 = vmul.f32 %v1101, %v1104
  %v1107 = vmul.f32 %v1089, %v1002
  %v1108 = vadd.f32 %v1106, %v1107
  %v1109 = vmul.f32 %v1005, %v1108
  %1111 = vrot.lane.b32.xlu0 %v1109, 112
  %v1112 = vpop.permute.xlu0 %1111
  %s1114 = scalar_lea.vmem [#allocation3], 56
  %1115 = vst.msk [vmem:[%s1114] sm:$0xff] %vm198, %v1112
  %v1116 = vld [vmem:[%s1006] sm:$0xff]
  %1117 = vmatprep.subr.mxu0 0.0
  %1118 = vmatpush1.msra.mxu0 0.0
  %1119 = vmatprep.subr.mxu0 0.0
  %1120 = vmatpush1.msra.mxu0 0.0
  %1121 = vmatprep.subr.mxu0 0.0
  %1122 = vmatpush1.msra.mxu0 0.0
  %1123 = vmatprep.subr.mxu0 0.0
  %1124 = vmatpush1.msra.mxu0 0.0
  %1125 = vmatprep.subr.mxu0 0.0
  %1126 = vmatpush1.msra.mxu0 0.0
  %1127 = vmatprep.subr.mxu0 0.0
  %1128 = vmatpush1.msra.mxu0 0.0
  %1129 = vmatprep.subr.mxu0 0.0
  %1130 = vmatpush1.msra.mxu0 0.0
  %1131 = vmatprep.subr.mxu0 0.0
  %1132 = vmatpush1.msra.mxu0 0.0
  %1133 = vmatprep.subr.mxu0 0.0
  %1134 = vmatpush1.msra.mxu0 0.0
  %1135 = vmatprep.subr.mxu0 0.0
  %1136 = vmatpush1.msra.mxu0 0.0
  %1137 = vmatprep.subr.mxu0 0.0
  %1138 = vmatpush1.msra.mxu0 0.0
  %1139 = vmatprep.subr.mxu0 0.0
  %1140 = vmatpush1.msra.mxu0 0.0
  %1141 = vmatprep.subr.mxu0 0.0
  %1142 = vmatpush1.msra.mxu0 0.0
  %1143 = vmatprep.subr.mxu0 0.0
  %1144 = vmatpush1.msra.mxu0 0.0
  %1145 = vmatprep.subr.mxu0 0.0
  %1146 = vmatpush1.msra.mxu0 %v193
  %1147 = vmatprep.subr.mxu0 0.0
  %1148 = vmatpush1.msra.mxu0 %v192
  %1149 = vmatprep.subr.mxu0 0.0
  %1150 = vmatpush2.msra.mxu0 0.0
  %1151 = vmatprep.subr.mxu0 0.0
  %1152 = vmatpush2.msra.mxu0 0.0
  %1153 = vmatprep.subr.mxu0 0.0
  %1154 = vmatpush2.msra.mxu0 0.0
  %1155 = vmatprep.subr.mxu0 0.0
  %1156 = vmatpush2.msra.mxu0 0.0
  %1157 = vmatprep.subr.mxu0 0.0
  %1158 = vmatpush2.msra.mxu0 0.0
  %1159 = vmatprep.subr.mxu0 0.0
  %1160 = vmatpush2.msra.mxu0 0.0
  %1161 = vmatprep.subr.mxu0 0.0
  %1162 = vmatpush2.msra.mxu0 0.0
  %1163 = vmatprep.subr.mxu0 0.0
  %1164 = vmatpush2.msra.mxu0 0.0
  %1165 = vmatprep.subr.mxu0 0.0
  %1166 = vmatpush2.msra.mxu0 0.0
  %1167 = vmatprep.subr.mxu0 0.0
  %1168 = vmatpush2.msra.mxu0 0.0
  %1169 = vmatprep.subr.mxu0 0.0
  %1170 = vmatpush2.msra.mxu0 0.0
  %1171 = vmatprep.subr.mxu0 0.0
  %1172 = vmatpush2.msra.mxu0 0.0
  %1173 = vmatprep.subr.mxu0 0.0
  %1174 = vmatpush2.msra.mxu0 0.0
  %1175 = vmatprep.subr.mxu0 0.0
  %1176 = vmatpush2.msra.mxu0 0.0
  %1177 = vmatprep.subr.mxu0 0.0
  %1178 = vmatpush2.msra.mxu0 0.0
  %1179 = vmatprep.subr.mxu0 0.0
  %1180 = vmatpush2.msra.mxu0 0.0
  %1181 = vmatprep.mubr.f32.mxu0 0.0
  %1182 = vmatmul.mubr.f32.gmra.mxu0 %v200
  %v1183 = vpop.f32.mrf.mxu0
  %v1184 = vadd.f32 0.0, %v1183
  %v1185 = vpop.f32.mrf.mxu0
  %1186 = vdwg.mxu0
  %1188 = vrot.lane.b32.xlu0 %v1184, 48
  %v1189 = vpop.permute.xlu0 %1188
  %v1191 = vadd.f32 %v1116, %v1189
  %v1192 = vxor.u32 %v1191, 2147483648
  %v1193 = vmul.f32 %v1192, 1.442695
  %v1194 = vpow.pop %v1193
  %v1195 = vadd.f32 %v1194, 1.0
  %v1196 = vrcp.pop %v1195
  %v1197 = vmul.f32 1.0, %v1196
  %1198 = vrot.lane.b32.xlu0 %v1184, 16
  %v1199 = vpop.permute.xlu0 %1198
  %v1201 = vmul.f32 %v1197, %v1199
  %1203 = vrot.lane.b32.xlu0 %v1201, 32
  %v1204 = vpop.permute.xlu0 %1203
  %v1206 = vadd.f32 %v1116, %v1204
  %v1207 = vtanh.pop %v1206
  %v1208 = vsub.f32 1.0, %v1197
  %1210 = vrot.lane.b32.xlu0 %v1207, 112
  %v1211 = vpop.permute.xlu0 %1210
  %v1213 = vmul.f32 %v1208, %v1211
  %v1214 = vmul.f32 %v1197, 0.0
  %v1215 = vadd.f32 %v1213, %v1214
  %v1216 = vmul.f32 %v1005, %v1215
  %1218 = vrot.lane.b32.xlu0 %v1216, 64
  %v1219 = vpop.permute.xlu0 %1218
  %s1221 = scalar_lea.vmem [#allocation4], 56
  %1222 = vst.msk [vmem:[%s1221] sm:$0xff] %vm198, %v1219
  %v1223 = vsub.f32 1.0, %v1005
  %v1224 = vmul.f32 %v1223, 0.0
  %v1225 = vadd.f32 %v1216, %v1224
  %v1226 = vld [vmem:[%s890] sm:$0xff]
  %1228 = vrot.lane.b32.xlu0 %v1225, 64
  %v1229 = vpop.permute.xlu0 %1228
  %v1230 = vsel %vm198, %v1229, 0
  %1232 = vmatprep.subr.mxu0 0.0
  %1233 = vmatpush1.msra.mxu0 0.0
  %1234 = vmatprep.subr.mxu0 0.0
  %1235 = vmatpush1.msra.mxu0 0.0
  %1236 = vmatprep.subr.mxu0 0.0
  %1237 = vmatpush1.msra.mxu0 0.0
  %1238 = vmatprep.subr.mxu0 0.0
  %1239 = vmatpush1.msra.mxu0 0.0
  %1240 = vmatprep.subr.mxu0 0.0
  %1241 = vmatpush1.msra.mxu0 0.0
  %1242 = vmatprep.subr.mxu0 0.0
  %1243 = vmatpush1.msra.mxu0 0.0
  %1244 = vmatprep.subr.mxu0 0.0
  %1245 = vmatpush1.msra.mxu0 0.0
  %1246 = vmatprep.subr.mxu0 0.0
  %1247 = vmatpush1.msra.mxu0 0.0
  %1248 = vmatprep.subr.mxu0 0.0
  %1249 = vmatpush1.msra.mxu0 0.0
  %1250 = vmatprep.subr.mxu0 0.0
  %1251 = vmatpush1.msra.mxu0 0.0
  %1252 = vmatprep.subr.mxu0 0.0
  %1253 = vmatpush1.msra.mxu0 0.0
  %1254 = vmatprep.subr.mxu0 0.0
  %1255 = vmatpush1.msra.mxu0 0.0
  %1256 = vmatprep.subr.mxu0 0.0
  %1257 = vmatpush1.msra.mxu0 0.0
  %1258 = vmatprep.subr.mxu0 0.0
  %1259 = vmatpush1.msra.mxu0 0.0
  %1260 = vmatprep.subr.mxu0 0.0
  %1261 = vmatpush1.msra.mxu0 %v193
  %1262 = vmatprep.subr.mxu0 0.0
  %1263 = vmatpush1.msra.mxu0 %v192
  %1264 = vmatprep.subr.mxu0 0.0
  %1265 = vmatpush2.msra.mxu0 0.0
  %1266 = vmatprep.subr.mxu0 0.0
  %1267 = vmatpush2.msra.mxu0 0.0
  %1268 = vmatprep.subr.mxu0 0.0
  %1269 = vmatpush2.msra.mxu0 0.0
  %1270 = vmatprep.subr.mxu0 0.0
  %1271 = vmatpush2.msra.mxu0 0.0
  %1272 = vmatprep.subr.mxu0 0.0
  %1273 = vmatpush2.msra.mxu0 0.0
  %1274 = vmatprep.subr.mxu0 0.0
  %1275 = vmatpush2.msra.mxu0 0.0
  %1276 = vmatprep.subr.mxu0 0.0
  %1277 = vmatpush2.msra.mxu0 0.0
  %1278 = vmatprep.subr.mxu0 0.0
  %1279 = vmatpush2.msra.mxu0 0.0
  %1280 = vmatprep.subr.mxu0 0.0
  %1281 = vmatpush2.msra.mxu0 0.0
  %1282 = vmatprep.subr.mxu0 0.0
  %1283 = vmatpush2.msra.mxu0 0.0
  %1284 = vmatprep.subr.mxu0 0.0
  %1285 = vmatpush2.msra.mxu0 0.0
  %1286 = vmatprep.subr.mxu0 0.0
  %1287 = vmatpush2.msra.mxu0 0.0
  %1288 = vmatprep.subr.mxu0 0.0
  %1289 = vmatpush2.msra.mxu0 0.0
  %1290 = vmatprep.subr.mxu0 0.0
  %1291 = vmatpush2.msra.mxu0 0.0
  %1292 = vmatprep.subr.mxu0 0.0
  %1293 = vmatpush2.msra.mxu0 0.0
  %1294 = vmatprep.subr.mxu0 0.0
  %1295 = vmatpush2.msra.mxu0 0.0
  %1296 = vmatprep.mubr.f32.mxu0 0.0
  %1297 = vmatmul.mubr.f32.gmra.mxu0 %v1230
  %v1298 = vpop.f32.mrf.mxu0
  %v1299 = vadd.f32 0.0, %v1298
  %v1300 = vpop.f32.mrf.mxu0
  %1301 = vdwg.mxu0
  %1303 = vrot.lane.b32.xlu0 %v1299, 48
  %v1304 = vpop.permute.xlu0 %1303
  %v1306 = vadd.f32 %v1226, %v1304
  %v1307 = vxor.u32 %v1306, 2147483648
  %v1308 = vmul.f32 %v1307, 1.442695
  %v1309 = vpow.pop %v1308
  %v1310 = vadd.f32 %v1309, 1.0
  %v1311 = vrcp.pop %v1310
  %v1312 = vmul.f32 1.0, %v1311
  %1313 = vrot.lane.b32.xlu0 %v1299, 16
  %v1314 = vpop.permute.xlu0 %1313
  %v1316 = vmul.f32 %v1312, %v1314
  %1318 = vrot.lane.b32.xlu0 %v1316, 32
  %v1319 = vpop.permute.xlu0 %1318
  %v1321 = vadd.f32 %v1226, %v1319
  %v1322 = vtanh.pop %v1321
  %v1323 = vsub.f32 1.0, %v1312
  %1325 = vrot.lane.b32.xlu0 %v1322, 112
  %v1326 = vpop.permute.xlu0 %1325
  %v1328 = vmul.f32 %v1323, %v1326
  %v1329 = vmul.f32 %v1312, %v1225
  %v1330 = vadd.f32 %v1328, %v1329
  %v1331 = vmul.f32 %v889, %v1330
  %1333 = vrot.lane.b32.xlu0 %v1331, 64
  %v1334 = vpop.permute.xlu0 %1333
  %s1336 = scalar_lea.vmem [#allocation4], 48
  %1337 = vst.msk [vmem:[%s1336] sm:$0xff] %vm198, %v1334
  %v1338 = vmul.f32 %v1000, %v1225
  %v1339 = vadd.f32 %v1331, %v1338
  %v1340 = vld [vmem:[%s774] sm:$0xff]
  %1342 = vrot.lane.b32.xlu0 %v1339, 64
  %v1343 = vpop.permute.xlu0 %1342
  %v1344 = vsel %vm198, %v1343, 0
  %1346 = vmatprep.subr.mxu0 0.0
  %1347 = vmatpush1.msra.mxu0 0.0
  %1348 = vmatprep.subr.mxu0 0.0
  %1349 = vmatpush1.msra.mxu0 0.0
  %1350 = vmatprep.subr.mxu0 0.0
  %1351 = vmatpush1.msra.mxu0 0.0
  %1352 = vmatprep.subr.mxu0 0.0
  %1353 = vmatpush1.msra.mxu0 0.0
  %1354 = vmatprep.subr.mxu0 0.0
  %1355 = vmatpush1.msra.mxu0 0.0
  %1356 = vmatprep.subr.mxu0 0.0
  %1357 = vmatpush1.msra.mxu0 0.0
  %1358 = vmatprep.subr.mxu0 0.0
  %1359 = vmatpush1.msra.mxu0 0.0
  %1360 = vmatprep.subr.mxu0 0.0
  %1361 = vmatpush1.msra.mxu0 0.0
  %1362 = vmatprep.subr.mxu0 0.0
  %1363 = vmatpush1.msra.mxu0 0.0
  %1364 = vmatprep.subr.mxu0 0.0
  %1365 = vmatpush1.msra.mxu0 0.0
  %1366 = vmatprep.subr.mxu0 0.0
  %1367 = vmatpush1.msra.mxu0 0.0
  %1368 = vmatprep.subr.mxu0 0.0
  %1369 = vmatpush1.msra.mxu0 0.0
  %1370 = vmatprep.subr.mxu0 0.0
  %1371 = vmatpush1.msra.mxu0 0.0
  %1372 = vmatprep.subr.mxu0 0.0
  %1373 = vmatpush1.msra.mxu0 0.0
  %1374 = vmatprep.subr.mxu0 0.0
  %1375 = vmatpush1.msra.mxu0 %v193
  %1376 = vmatprep.subr.mxu0 0.0
  %1377 = vmatpush1.msra.mxu0 %v192
  %1378 = vmatprep.subr.mxu0 0.0
  %1379 = vmatpush2.msra.mxu0 0.0
  %1380 = vmatprep.subr.mxu0 0.0
  %1381 = vmatpush2.msra.mxu0 0.0
  %1382 = vmatprep.subr.mxu0 0.0
  %1383 = vmatpush2.msra.mxu0 0.0
  %1384 = vmatprep.subr.mxu0 0.0
  %1385 = vmatpush2.msra.mxu0 0.0
  %1386 = vmatprep.subr.mxu0 0.0
  %1387 = vmatpush2.msra.mxu0 0.0
  %1388 = vmatprep.subr.mxu0 0.0
  %1389 = vmatpush2.msra.mxu0 0.0
  %1390 = vmatprep.subr.mxu0 0.0
  %1391 = vmatpush2.msra.mxu0 0.0
  %1392 = vmatprep.subr.mxu0 0.0
  %1393 = vmatpush2.msra.mxu0 0.0
  %1394 = vmatprep.subr.mxu0 0.0
  %1395 = vmatpush2.msra.mxu0 0.0
  %1396 = vmatprep.subr.mxu0 0.0
  %1397 = vmatpush2.msra.mxu0 0.0
  %1398 = vmatprep.subr.mxu0 0.0
  %1399 = vmatpush2.msra.mxu0 0.0
  %1400 = vmatprep.subr.mxu0 0.0
  %1401 = vmatpush2.msra.mxu0 0.0
  %1402 = vmatprep.subr.mxu0 0.0
  %1403 = vmatpush2.msra.mxu0 0.0
  %1404 = vmatprep.subr.mxu0 0.0
  %1405 = vmatpush2.msra.mxu0 0.0
  %1406 = vmatprep.subr.mxu0 0.0
  %1407 = vmatpush2.msra.mxu0 0.0
  %1408 = vmatprep.subr.mxu0 0.0
  %1409 = vmatpush2.msra.mxu0 0.0
  %1410 = vmatprep.mubr.f32.mxu0 0.0
  %1411 = vmatmul.mubr.f32.gmra.mxu0 %v1344
  %v1412 = vpop.f32.mrf.mxu0
  %v1413 = vadd.f32 0.0, %v1412
  %v1414 = vpop.f32.mrf.mxu0
  %1415 = vdwg.mxu0
  %1417 = vrot.lane.b32.xlu0 %v1413, 48
  %v1418 = vpop.permute.xlu0 %1417
  %v1420 = vadd.f32 %v1340, %v1418
  %v1421 = vxor.u32 %v1420, 2147483648
  %v1422 = vmul.f32 %v1421, 1.442695
  %v1423 = vpow.pop %v1422
  %v1424 = vadd.f32 %v1423, 1.0
  %v1425 = vrcp.pop %v1424
  %v1426 = vmul.f32 1.0, %v1425
  %1427 = vrot.lane.b32.xlu0 %v1413, 16
  %v1428 = vpop.permute.xlu0 %1427
  %v1430 = vmul.f32 %v1426, %v1428
  %1432 = vrot.lane.b32.xlu0 %v1430, 32
  %v1433 = vpop.permute.xlu0 %1432
  %v1435 = vadd.f32 %v1340, %v1433
  %v1436 = vtanh.pop %v1435
  %v1437 = vsub.f32 1.0, %v1426
  %1439 = vrot.lane.b32.xlu0 %v1436, 112
  %v1440 = vpop.permute.xlu0 %1439
  %v1442 = vmul.f32 %v1437, %v1440
  %v1443 = vmul.f32 %v1426, %v1339
  %v1444 = vadd.f32 %v1442, %v1443
  %v1445 = vmul.f32 %v773, %v1444
  %1447 = vrot.lane.b32.xlu0 %v1445, 64
  %v1448 = vpop.permute.xlu0 %1447
  %s1450 = scalar_lea.vmem [#allocation4], 40
  %1451 = vst.msk [vmem:[%s1450] sm:$0xff] %vm198, %v1448
  %v1452 = vmul.f32 %v884, %v1339
  %v1453 = vadd.f32 %v1445, %v1452
  %v1454 = vld [vmem:[%s658] sm:$0xff]
  %1456 = vrot.lane.b32.xlu0 %v1453, 64
  %v1457 = vpop.permute.xlu0 %1456
  %v1458 = vsel %vm198, %v1457, 0
  %1460 = vmatprep.subr.mxu0 0.0
  %1461 = vmatpush1.msra.mxu0 0.0
  %1462 = vmatprep.subr.mxu0 0.0
  %1463 = vmatpush1.msra.mxu0 0.0
  %1464 = vmatprep.subr.mxu0 0.0
  %1465 = vmatpush1.msra.mxu0 0.0
  %1466 = vmatprep.subr.mxu0 0.0
  %1467 = vmatpush1.msra.mxu0 0.0
  %1468 = vmatprep.subr.mxu0 0.0
  %1469 = vmatpush1.msra.mxu0 0.0
  %1470 = vmatprep.subr.mxu0 0.0
  %1471 = vmatpush1.msra.mxu0 0.0
  %1472 = vmatprep.subr.mxu0 0.0
  %1473 = vmatpush1.msra.mxu0 0.0
  %1474 = vmatprep.subr.mxu0 0.0
  %1475 = vmatpush1.msra.mxu0 0.0
  %1476 = vmatprep.subr.mxu0 0.0
  %1477 = vmatpush1.msra.mxu0 0.0
  %1478 = vmatprep.subr.mxu0 0.0
  %1479 = vmatpush1.msra.mxu0 0.0
  %1480 = vmatprep.subr.mxu0 0.0
  %1481 = vmatpush1.msra.mxu0 0.0
  %1482 = vmatprep.subr.mxu0 0.0
  %1483 = vmatpush1.msra.mxu0 0.0
  %1484 = vmatprep.subr.mxu0 0.0
  %1485 = vmatpush1.msra.mxu0 0.0
  %1486 = vmatprep.subr.mxu0 0.0
  %1487 = vmatpush1.msra.mxu0 0.0
  %1488 = vmatprep.subr.mxu0 0.0
  %1489 = vmatpush1.msra.mxu0 %v193
  %1490 = vmatprep.subr.mxu0 0.0
  %1491 = vmatpush1.msra.mxu0 %v192
  %1492 = vmatprep.subr.mxu0 0.0
  %1493 = vmatpush2.msra.mxu0 0.0
  %1494 = vmatprep.subr.mxu0 0.0
  %1495 = vmatpush2.msra.mxu0 0.0
  %1496 = vmatprep.subr.mxu0 0.0
  %1497 = vmatpush2.msra.mxu0 0.0
  %1498 = vmatprep.subr.mxu0 0.0
  %1499 = vmatpush2.msra.mxu0 0.0
  %1500 = vmatprep.subr.mxu0 0.0
  %1501 = vmatpush2.msra.mxu0 0.0
  %1502 = vmatprep.subr.mxu0 0.0
  %1503 = vmatpush2.msra.mxu0 0.0
  %1504 = vmatprep.subr.mxu0 0.0
  %1505 = vmatpush2.msra.mxu0 0.0
  %1506 = vmatprep.subr.mxu0 0.0
  %1507 = vmatpush2.msra.mxu0 0.0
  %1508 = vmatprep.subr.mxu0 0.0
  %1509 = vmatpush2.msra.mxu0 0.0
  %1510 = vmatprep.subr.mxu0 0.0
  %1511 = vmatpush2.msra.mxu0 0.0
  %1512 = vmatprep.subr.mxu0 0.0
  %1513 = vmatpush2.msra.mxu0 0.0
  %1514 = vmatprep.subr.mxu0 0.0
  %1515 = vmatpush2.msra.mxu0 0.0
  %1516 = vmatprep.subr.mxu0 0.0
  %1517 = vmatpush2.msra.mxu0 0.0
  %1518 = vmatprep.subr.mxu0 0.0
  %1519 = vmatpush2.msra.mxu0 0.0
  %1520 = vmatprep.subr.mxu0 0.0
  %1521 = vmatpush2.msra.mxu0 0.0
  %1522 = vmatprep.subr.mxu0 0.0
  %1523 = vmatpush2.msra.mxu0 0.0
  %1524 = vmatprep.mubr.f32.mxu0 0.0
  %1525 = vmatmul.mubr.f32.gmra.mxu0 %v1458
  %v1526 = vpop.f32.mrf.mxu0
  %v1527 = vadd.f32 0.0, %v1526
  %v1528 = vpop.f32.mrf.mxu0
  %1529 = vdwg.mxu0
  %1531 = vrot.lane.b32.xlu0 %v1527, 48
  %v1532 = vpop.permute.xlu0 %1531
  %v1534 = vadd.f32 %v1454, %v1532
  %v1535 = vxor.u32 %v1534, 2147483648
  %v1536 = vmul.f32 %v1535, 1.442695
  %v1537 = vpow.pop %v1536
  %v1538 = vadd.f32 %v1537, 1.0
  %v1539 = vrcp.pop %v1538
  %v1540 = vmul.f32 1.0, %v1539
  %1541 = vrot.lane.b32.xlu0 %v1527, 16
  %v1542 = vpop.permute.xlu0 %1541
  %v1544 = vmul.f32 %v1540, %v1542
  %1546 = vrot.lane.b32.xlu0 %v1544, 32
  %v1547 = vpop.permute.xlu0 %1546
  %v1549 = vadd.f32 %v1454, %v1547
  %v1550 = vtanh.pop %v1549
  %v1551 = vsub.f32 1.0, %v1540
  %1553 = vrot.lane.b32.xlu0 %v1550, 112
  %v1554 = vpop.permute.xlu0 %1553
  %v1556 = vmul.f32 %v1551, %v1554
  %v1557 = vmul.f32 %v1540, %v1453
  %v1558 = vadd.f32 %v1556, %v1557
  %v1559 = vmul.f32 %v657, %v1558
  %1561 = vrot.lane.b32.xlu0 %v1559, 64
  %v1562 = vpop.permute.xlu0 %1561
  %s1564 = scalar_lea.vmem [#allocation4], 32
  %1565 = vst.msk [vmem:[%s1564] sm:$0xff] %vm198, %v1562
  %v1566 = vmul.f32 %v768, %v1453
  %v1567 = vadd.f32 %v1559, %v1566
  %v1568 = vld [vmem:[%s542] sm:$0xff]
  %1570 = vrot.lane.b32.xlu0 %v1567, 64
  %v1571 = vpop.permute.xlu0 %1570
  %v1572 = vsel %vm198, %v1571, 0
  %1574 = vmatprep.subr.mxu0 0.0
  %1575 = vmatpush1.msra.mxu0 0.0
  %1576 = vmatprep.subr.mxu0 0.0
  %1577 = vmatpush1.msra.mxu0 0.0
  %1578 = vmatprep.subr.mxu0 0.0
  %1579 = vmatpush1.msra.mxu0 0.0
  %1580 = vmatprep.subr.mxu0 0.0
  %1581 = vmatpush1.msra.mxu0 0.0
  %1582 = vmatprep.subr.mxu0 0.0
  %1583 = vmatpush1.msra.mxu0 0.0
  %1584 = vmatprep.subr.mxu0 0.0
  %1585 = vmatpush1.msra.mxu0 0.0
  %1586 = vmatprep.subr.mxu0 0.0
  %1587 = vmatpush1.msra.mxu0 0.0
  %1588 = vmatprep.subr.mxu0 0.0
  %1589 = vmatpush1.msra.mxu0 0.0
  %1590 = vmatprep.subr.mxu0 0.0
  %1591 = vmatpush1.msra.mxu0 0.0
  %1592 = vmatprep.subr.mxu0 0.0
  %1593 = vmatpush1.msra.mxu0 0.0
  %1594 = vmatprep.subr.mxu0 0.0
  %1595 = vmatpush1.msra.mxu0 0.0
  %1596 = vmatprep.subr.mxu0 0.0
  %1597 = vmatpush1.msra.mxu0 0.0
  %1598 = vmatprep.subr.mxu0 0.0
  %1599 = vmatpush1.msra.mxu0 0.0
  %1600 = vmatprep.subr.mxu0 0.0
  %1601 = vmatpush1.msra.mxu0 0.0
  %1602 = vmatprep.subr.mxu0 0.0
  %1603 = vmatpush1.msra.mxu0 %v193
  %1604 = vmatprep.subr.mxu0 0.0
  %1605 = vmatpush1.msra.mxu0 %v192
  %1606 = vmatprep.subr.mxu0 0.0
  %1607 = vmatpush2.msra.mxu0 0.0
  %1608 = vmatprep.subr.mxu0 0.0
  %1609 = vmatpush2.msra.mxu0 0.0
  %1610 = vmatprep.subr.mxu0 0.0
  %1611 = vmatpush2.msra.mxu0 0.0
  %1612 = vmatprep.subr.mxu0 0.0
  %1613 = vmatpush2.msra.mxu0 0.0
  %1614 = vmatprep.subr.mxu0 0.0
  %1615 = vmatpush2.msra.mxu0 0.0
  %1616 = vmatprep.subr.mxu0 0.0
  %1617 = vmatpush2.msra.mxu0 0.0
  %1618 = vmatprep.subr.mxu0 0.0
  %1619 = vmatpush2.msra.mxu0 0.0
  %1620 = vmatprep.subr.mxu0 0.0
  %1621 = vmatpush2.msra.mxu0 0.0
  %1622 = vmatprep.subr.mxu0 0.0
  %1623 = vmatpush2.msra.mxu0 0.0
  %1624 = vmatprep.subr.mxu0 0.0
  %1625 = vmatpush2.msra.mxu0 0.0
  %1626 = vmatprep.subr.mxu0 0.0
  %1627 = vmatpush2.msra.mxu0 0.0
  %1628 = vmatprep.subr.mxu0 0.0
  %1629 = vmatpush2.msra.mxu0 0.0
  %1630 = vmatprep.subr.mxu0 0.0
  %1631 = vmatpush2.msra.mxu0 0.0
  %1632 = vmatprep.subr.mxu0 0.0
  %1633 = vmatpush2.msra.mxu0 0.0
  %1634 = vmatprep.subr.mxu0 0.0
  %1635 = vmatpush2.msra.mxu0 0.0
  %1636 = vmatprep.subr.mxu0 0.0
  %1637 = vmatpush2.msra.mxu0 0.0
  %1638 = vmatprep.mubr.f32.mxu0 0.0
  %1639 = vmatmul.mubr.f32.gmra.mxu0 %v1572
  %v1640 = vpop.f32.mrf.mxu0
  %v1641 = vadd.f32 0.0, %v1640
  %v1642 = vpop.f32.mrf.mxu0
  %1643 = vdwg.mxu0
  %1645 = vrot.lane.b32.xlu0 %v1641, 48
  %v1646 = vpop.permute.xlu0 %1645
  %v1648 = vadd.f32 %v1568, %v1646
  %v1649 = vxor.u32 %v1648, 2147483648
  %v1650 = vmul.f32 %v1649, 1.442695
  %v1651 = vpow.pop %v1650
  %v1652 = vadd.f32 %v1651, 1.0
  %v1653 = vrcp.pop %v1652
  %v1654 = vmul.f32 1.0, %v1653
  %1655 = vrot.lane.b32.xlu0 %v1641, 16
  %v1656 = vpop.permute.xlu0 %1655
  %v1658 = vmul.f32 %v1654, %v1656
  %1660 = vrot.lane.b32.xlu0 %v1658, 32
  %v1661 = vpop.permute.xlu0 %1660
  %v1663 = vadd.f32 %v1568, %v1661
  %v1664 = vtanh.pop %v1663
  %v1665 = vsub.f32 1.0, %v1654
  %1667 = vrot.lane.b32.xlu0 %v1664, 112
  %v1668 = vpop.permute.xlu0 %1667
  %v1670 = vmul.f32 %v1665, %v1668
  %v1671 = vmul.f32 %v1654, %v1567
  %v1672 = vadd.f32 %v1670, %v1671
  %v1673 = vmul.f32 %v541, %v1672
  %1675 = vrot.lane.b32.xlu0 %v1673, 64
  %v1676 = vpop.permute.xlu0 %1675
  %s1678 = scalar_lea.vmem [#allocation4], 24
  %1679 = vst.msk [vmem:[%s1678] sm:$0xff] %vm198, %v1676
  %v1680 = vmul.f32 %v652, %v1567
  %v1681 = vadd.f32 %v1673, %v1680
  %v1682 = vld [vmem:[%s426] sm:$0xff]
  %1684 = vrot.lane.b32.xlu0 %v1681, 64
  %v1685 = vpop.permute.xlu0 %1684
  %v1686 = vsel %vm198, %v1685, 0
  %1688 = vmatprep.subr.mxu0 0.0
  %1689 = vmatpush1.msra.mxu0 0.0
  %1690 = vmatprep.subr.mxu0 0.0
  %1691 = vmatpush1.msra.mxu0 0.0
  %1692 = vmatprep.subr.mxu0 0.0
  %1693 = vmatpush1.msra.mxu0 0.0
  %1694 = vmatprep.subr.mxu0 0.0
  %1695 = vmatpush1.msra.mxu0 0.0
  %1696 = vmatprep.subr.mxu0 0.0
  %1697 = vmatpush1.msra.mxu0 0.0
  %1698 = vmatprep.subr.mxu0 0.0
  %1699 = vmatpush1.msra.mxu0 0.0
  %1700 = vmatprep.subr.mxu0 0.0
  %1701 = vmatpush1.msra.mxu0 0.0
  %1702 = vmatprep.subr.mxu0 0.0
  %1703 = vmatpush1.msra.mxu0 0.0
  %1704 = vmatprep.subr.mxu0 0.0
  %1705 = vmatpush1.msra.mxu0 0.0
  %1706 = vmatprep.subr.mxu0 0.0
  %1707 = vmatpush1.msra.mxu0 0.0
  %1708 = vmatprep.subr.mxu0 0.0
  %1709 = vmatpush1.msra.mxu0 0.0
  %1710 = vmatprep.subr.mxu0 0.0
  %1711 = vmatpush1.msra.mxu0 0.0
  %1712 = vmatprep.subr.mxu0 0.0
  %1713 = vmatpush1.msra.mxu0 0.0
  %1714 = vmatprep.subr.mxu0 0.0
  %1715 = vmatpush1.msra.mxu0 0.0
  %1716 = vmatprep.subr.mxu0 0.0
  %1717 = vmatpush1.msra.mxu0 %v193
  %1718 = vmatprep.subr.mxu0 0.0
  %1719 = vmatpush1.msra.mxu0 %v192
  %1720 = vmatprep.subr.mxu0 0.0
  %1721 = vmatpush2.msra.mxu0 0.0
  %1722 = vmatprep.subr.mxu0 0.0
  %1723 = vmatpush2.msra.mxu0 0.0
  %1724 = vmatprep.subr.mxu0 0.0
  %1725 = vmatpush2.msra.mxu0 0.0
  %1726 = vmatprep.subr.mxu0 0.0
  %1727 = vmatpush2.msra.mxu0 0.0
  %1728 = vmatprep.subr.mxu0 0.0
  %1729 = vmatpush2.msra.mxu0 0.0
  %1730 = vmatprep.subr.mxu0 0.0
  %1731 = vmatpush2.msra.mxu0 0.0
  %1732 = vmatprep.subr.mxu0 0.0
  %1733 = vmatpush2.msra.mxu0 0.0
  %1734 = vmatprep.subr.mxu0 0.0
  %1735 = vmatpush2.msra.mxu0 0.0
  %1736 = vmatprep.subr.mxu0 0.0
  %1737 = vmatpush2.msra.mxu0 0.0
  %1738 = vmatprep.subr.mxu0 0.0
  %1739 = vmatpush2.msra.mxu0 0.0
  %1740 = vmatprep.subr.mxu0 0.0
  %1741 = vmatpush2.msra.mxu0 0.0
  %1742 = vmatprep.subr.mxu0 0.0
  %1743 = vmatpush2.msra.mxu0 0.0
  %1744 = vmatprep.subr.mxu0 0.0
  %1745 = vmatpush2.msra.mxu0 0.0
  %1746 = vmatprep.subr.mxu0 0.0
  %1747 = vmatpush2.msra.mxu0 0.0
  %1748 = vmatprep.subr.mxu0 0.0
  %1749 = vmatpush2.msra.mxu0 0.0
  %1750 = vmatprep.subr.mxu0 0.0
  %1751 = vmatpush2.msra.mxu0 0.0
  %1752 = vmatprep.mubr.f32.mxu0 0.0
  %1753 = vmatmul.mubr.f32.gmra.mxu0 %v1686
  %v1754 = vpop.f32.mrf.mxu0
  %v1755 = vadd.f32 0.0, %v1754
  %v1756 = vpop.f32.mrf.mxu0
  %1757 = vdwg.mxu0
  %1759 = vrot.lane.b32.xlu0 %v1755, 48
  %v1760 = vpop.permute.xlu0 %1759
  %v1762 = vadd.f32 %v1682, %v1760
  %v1763 = vxor.u32 %v1762, 2147483648
  %v1764 = vmul.f32 %v1763, 1.442695
  %v1765 = vpow.pop %v1764
  %v1766 = vadd.f32 %v1765, 1.0
  %v1767 = vrcp.pop %v1766
  %v1768 = vmul.f32 1.0, %v1767
  %1769 = vrot.lane.b32.xlu0 %v1755, 16
  %v1770 = vpop.permute.xlu0 %1769
  %v1772 = vmul.f32 %v1768, %v1770
  %1774 = vrot.lane.b32.xlu0 %v1772, 32
  %v1775 = vpop.permute.xlu0 %1774
  %v1777 = vadd.f32 %v1682, %v1775
  %v1778 = vtanh.pop %v1777
  %v1779 = vsub.f32 1.0, %v1768
  %1781 = vrot.lane.b32.xlu0 %v1778, 112
  %v1782 = vpop.permute.xlu0 %1781
  %v1784 = vmul.f32 %v1779, %v1782
  %v1785 = vmul.f32 %v1768, %v1681
  %v1786 = vadd.f32 %v1784, %v1785
  %v1787 = vmul.f32 %v425, %v1786
  %1789 = vrot.lane.b32.xlu0 %v1787, 64
  %v1790 = vpop.permute.xlu0 %1789
  %s1792 = scalar_lea.vmem [#allocation4], 16
  %1793 = vst.msk [vmem:[%s1792] sm:$0xff] %vm198, %v1790
  %v1794 = vmul.f32 %v536, %v1681
  %v1795 = vadd.f32 %v1787, %v1794
  %v1796 = vld [vmem:[%s310] sm:$0xff]
  %1798 = vrot.lane.b32.xlu0 %v1795, 64
  %v1799 = vpop.permute.xlu0 %1798
  %v1800 = vsel %vm198, %v1799, 0
  %1802 = vmatprep.subr.mxu0 0.0
  %1803 = vmatpush1.msra.mxu0 0.0
  %1804 = vmatprep.subr.mxu0 0.0
  %1805 = vmatpush1.msra.mxu0 0.0
  %1806 = vmatprep.subr.mxu0 0.0
  %1807 = vmatpush1.msra.mxu0 0.0
  %1808 = vmatprep.subr.mxu0 0.0
  %1809 = vmatpush1.msra.mxu0 0.0
  %1810 = vmatprep.subr.mxu0 0.0
  %1811 = vmatpush1.msra.mxu0 0.0
  %1812 = vmatprep.subr.mxu0 0.0
  %1813 = vmatpush1.msra.mxu0 0.0
  %1814 = vmatprep.subr.mxu0 0.0
  %1815 = vmatpush1.msra.mxu0 0.0
  %1816 = vmatprep.subr.mxu0 0.0
  %1817 = vmatpush1.msra.mxu0 0.0
  %1818 = vmatprep.subr.mxu0 0.0
  %1819 = vmatpush1.msra.mxu0 0.0
  %1820 = vmatprep.subr.mxu0 0.0
  %1821 = vmatpush1.msra.mxu0 0.0
  %1822 = vmatprep.subr.mxu0 0.0
  %1823 = vmatpush1.msra.mxu0 0.0
  %1824 = vmatprep.subr.mxu0 0.0
  %1825 = vmatpush1.msra.mxu0 0.0
  %1826 = vmatprep.subr.mxu0 0.0
  %1827 = vmatpush1.msra.mxu0 0.0
  %1828 = vmatprep.subr.mxu0 0.0
  %1829 = vmatpush1.msra.mxu0 0.0
  %1830 = vmatprep.subr.mxu0 0.0
  %1831 = vmatpush1.msra.mxu0 %v193
  %1832 = vmatprep.subr.mxu0 0.0
  %1833 = vmatpush1.msra.mxu0 %v192
  %1834 = vmatprep.subr.mxu0 0.0
  %1835 = vmatpush2.msra.mxu0 0.0
  %1836 = vmatprep.subr.mxu0 0.0
  %1837 = vmatpush2.msra.mxu0 0.0
  %1838 = vmatprep.subr.mxu0 0.0
  %1839 = vmatpush2.msra.mxu0 0.0
  %1840 = vmatprep.subr.mxu0 0.0
  %1841 = vmatpush2.msra.mxu0 0.0
  %1842 = vmatprep.subr.mxu0 0.0
  %1843 = vmatpush2.msra.mxu0 0.0
  %1844 = vmatprep.subr.mxu0 0.0
  %1845 = vmatpush2.msra.mxu0 0.0
  %1846 = vmatprep.subr.mxu0 0.0
  %1847 = vmatpush2.msra.mxu0 0.0
  %1848 = vmatprep.subr.mxu0 0.0
  %1849 = vmatpush2.msra.mxu0 0.0
  %1850 = vmatprep.subr.mxu0 0.0
  %1851 = vmatpush2.msra.mxu0 0.0
  %1852 = vmatprep.subr.mxu0 0.0
  %1853 = vmatpush2.msra.mxu0 0.0
  %1854 = vmatprep.subr.mxu0 0.0
  %1855 = vmatpush2.msra.mxu0 0.0
  %1856 = vmatprep.subr.mxu0 0.0
  %1857 = vmatpush2.msra.mxu0 0.0
  %1858 = vmatprep.subr.mxu0 0.0
  %1859 = vmatpush2.msra.mxu0 0.0
  %1860 = vmatprep.subr.mxu0 0.0
  %1861 = vmatpush2.msra.mxu0 0.0
  %1862 = vmatprep.subr.mxu0 0.0
  %1863 = vmatpush2.msra.mxu0 0.0
  %1864 = vmatprep.subr.mxu0 0.0
  %1865 = vmatpush2.msra.mxu0 0.0
  %1866 = vmatprep.mubr.f32.mxu0 0.0
  %1867 = vmatmul.mubr.f32.gmra.mxu0 %v1800
  %v1868 = vpop.f32.mrf.mxu0
  %v1869 = vadd.f32 0.0, %v1868
  %v1870 = vpop.f32.mrf.mxu0
  %1871 = vdwg.mxu0
  %1873 = vrot.lane.b32.xlu0 %v1869, 48
  %v1874 = vpop.permute.xlu0 %1873
  %v1876 = vadd.f32 %v1796, %v1874
  %v1877 = vxor.u32 %v1876, 2147483648
  %v1878 = vmul.f32 %v1877, 1.442695
  %v1879 = vpow.pop %v1878
  %v1880 = vadd.f32 %v1879, 1.0
  %v1881 = vrcp.pop %v1880
  %v1882 = vmul.f32 1.0, %v1881
  %1883 = vrot.lane.b32.xlu0 %v1869, 16
  %v1884 = vpop.permute.xlu0 %1883
  %v1886 = vmul.f32 %v1882, %v1884
  %1888 = vrot.lane.b32.xlu0 %v1886, 32
  %v1889 = vpop.permute.xlu0 %1888
  %v1891 = vadd.f32 %v1796, %v1889
  %v1892 = vtanh.pop %v1891
  %v1893 = vsub.f32 1.0, %v1882
  %1895 = vrot.lane.b32.xlu0 %v1892, 112
  %v1896 = vpop.permute.xlu0 %1895
  %v1898 = vmul.f32 %v1893, %v1896
  %v1899 = vmul.f32 %v1882, %v1795
  %v1900 = vadd.f32 %v1898, %v1899
  %v1901 = vmul.f32 %v309, %v1900
  %1903 = vrot.lane.b32.xlu0 %v1901, 64
  %v1904 = vpop.permute.xlu0 %1903
  %s1906 = scalar_lea.vmem [#allocation4], 8
  %1907 = vst.msk [vmem:[%s1906] sm:$0xff] %vm198, %v1904
  %v1908 = vmul.f32 %v420, %v1795
  %v1909 = vadd.f32 %v1901, %v1908
  %v1910 = vld [vmem:[#allocation2] sm:$0xff]
  %1912 = vrot.lane.b32.xlu0 %v1909, 64
  %v1913 = vpop.permute.xlu0 %1912
  %v1914 = vsel %vm198, %v1913, 0
  %1916 = vmatprep.subr.mxu0 0.0
  %1917 = vmatpush1.msra.mxu0 0.0
  %1918 = vmatprep.subr.mxu0 0.0
  %1919 = vmatpush1.msra.mxu0 0.0
  %1920 = vmatprep.subr.mxu0 0.0
  %1921 = vmatpush1.msra.mxu0 0.0
  %1922 = vmatprep.subr.mxu0 0.0
  %1923 = vmatpush1.msra.mxu0 0.0
  %1924 = vmatprep.subr.mxu0 0.0
  %1925 = vmatpush1.msra.mxu0 0.0
  %1926 = vmatprep.subr.mxu0 0.0
  %1927 = vmatpush1.msra.mxu0 0.0
  %1928 = vmatprep.subr.mxu0 0.0
  %1929 = vmatpush1.msra.mxu0 0.0
  %1930 = vmatprep.subr.mxu0 0.0
  %1931 = vmatpush1.msra.mxu0 0.0
  %1932 = vmatprep.subr.mxu0 0.0
  %1933 = vmatpush1.msra.mxu0 0.0
  %1934 = vmatprep.subr.mxu0 0.0
  %1935 = vmatpush1.msra.mxu0 0.0
  %1936 = vmatprep.subr.mxu0 0.0
  %1937 = vmatpush1.msra.mxu0 0.0
  %1938 = vmatprep.subr.mxu0 0.0
  %1939 = vmatpush1.msra.mxu0 0.0
  %1940 = vmatprep.subr.mxu0 0.0
  %1941 = vmatpush1.msra.mxu0 0.0
  %1942 = vmatprep.subr.mxu0 0.0
  %1943 = vmatpush1.msra.mxu0 0.0
  %1944 = vmatprep.subr.mxu0 0.0
  %1945 = vmatpush1.msra.mxu0 %v193
  %1946 = vmatprep.subr.mxu0 0.0
  %1947 = vmatpush1.msra.mxu0 %v192
  %1948 = vmatprep.subr.mxu0 0.0
  %1949 = vmatpush2.msra.mxu0 0.0
  %1950 = vmatprep.subr.mxu0 0.0
  %1951 = vmatpush2.msra.mxu0 0.0
  %1952 = vmatprep.subr.mxu0 0.0
  %1953 = vmatpush2.msra.mxu0 0.0
  %1954 = vmatprep.subr.mxu0 0.0
  %1955 = vmatpush2.msra.mxu0 0.0
  %1956 = vmatprep.subr.mxu0 0.0
  %1957 = vmatpush2.msra.mxu0 0.0
  %1958 = vmatprep.subr.mxu0 0.0
  %1959 = vmatpush2.msra.mxu0 0.0
  %1960 = vmatprep.subr.mxu0 0.0
  %1961 = vmatpush2.msra.mxu0 0.0
  %1962 = vmatprep.subr.mxu0 0.0
  %1963 = vmatpush2.msra.mxu0 0.0
  %1964 = vmatprep.subr.mxu0 0.0
  %1965 = vmatpush2.msra.mxu0 0.0
  %1966 = vmatprep.subr.mxu0 0.0
  %1967 = vmatpush2.msra.mxu0 0.0
  %1968 = vmatprep.subr.mxu0 0.0
  %1969 = vmatpush2.msra.mxu0 0.0
  %1970 = vmatprep.subr.mxu0 0.0
  %1971 = vmatpush2.msra.mxu0 0.0
  %1972 = vmatprep.subr.mxu0 0.0
  %1973 = vmatpush2.msra.mxu0 0.0
  %1974 = vmatprep.subr.mxu0 0.0
  %1975 = vmatpush2.msra.mxu0 0.0
  %1976 = vmatprep.subr.mxu0 0.0
  %1977 = vmatpush2.msra.mxu0 0.0
  %1978 = vmatprep.subr.mxu0 0.0
  %1979 = vmatpush2.msra.mxu0 0.0
  %1980 = vmatprep.mubr.f32.mxu0 0.0
  %1981 = vmatmul.mubr.f32.gmra.mxu0 %v1914
  %v1982 = vpop.f32.mrf.mxu0
  %v1983 = vadd.f32 0.0, %v1982
  %v1984 = vpop.f32.mrf.mxu0
  %1985 = vdwg.mxu0
  %1987 = vrot.lane.b32.xlu0 %v1983, 48
  %v1988 = vpop.permute.xlu0 %1987
  %v1990 = vadd.f32 %v1910, %v1988
  %v1991 = vxor.u32 %v1990, 2147483648
  %v1992 = vmul.f32 %v1991, 1.442695
  %v1993 = vpow.pop %v1992
  %v1994 = vadd.f32 %v1993, 1.0
  %v1995 = vrcp.pop %v1994
  %v1996 = vmul.f32 1.0, %v1995
  %1997 = vrot.lane.b32.xlu0 %v1983, 16
  %v1998 = vpop.permute.xlu0 %1997
  %v2000 = vmul.f32 %v1996, %v1998
  %2002 = vrot.lane.b32.xlu0 %v2000, 32
  %v2003 = vpop.permute.xlu0 %2002
  %v2005 = vadd.f32 %v1910, %v2003
  %v2006 = vtanh.pop %v2005
  %v2007 = vsub.f32 1.0, %v1996
  %2009 = vrot.lane.b32.xlu0 %v2006, 112
  %v2010 = vpop.permute.xlu0 %2009
  %v2012 = vmul.f32 %v2007, %v2010
  %v2013 = vmul.f32 %v1996, %v1909
  %v2014 = vadd.f32 %v2012, %v2013
  %v2015 = vmul.f32 %v196, %v2014
  %2017 = vrot.lane.b32.xlu0 %v2015, 64
  %v2018 = vpop.permute.xlu0 %2017
  %2020 = vst.msk [vmem:[#allocation4] sm:$0xff] %vm198, %v2018
  %v2021 = vld [vmem:[#allocation3] sm:$0xff]
  %v2022 = vld [vmem:[#allocation3 + $0x8] sm:$0xff]
  %v2023 = vld [vmem:[#allocation3 + $0x10] sm:$0xff]
  %v2024 = vld [vmem:[#allocation3 + $0x18] sm:$0xff]
  %v2025 = vld [vmem:[#allocation3 + $0x20] sm:$0xff]
  %v2026 = vld [vmem:[#allocation3 + $0x28] sm:$0xff]
  %v2027 = vld [vmem:[#allocation3 + $0x30] sm:$0xff]
  %v2028 = vld [vmem:[#allocation3 + $0x38] sm:$0xff]
  %v2029 = vld [vmem:[#allocation4] sm:$0xff]
  %v2030 = vld [vmem:[#allocation4 + $0x8] sm:$0xff]
  %v2031 = vld [vmem:[#allocation4 + $0x10] sm:$0xff]
  %v2032 = vld [vmem:[#allocation4 + $0x18] sm:$0xff]
  %v2033 = vld [vmem:[#allocation4 + $0x20] sm:$0xff]
  %v2034 = vld [vmem:[#allocation4 + $0x28] sm:$0xff]
  %v2035 = vld [vmem:[#allocation4 + $0x30] sm:$0xff]
  %v2036 = vld [vmem:[#allocation4 + $0x38] sm:$0xff]
  %v2037 = vld [vmem:[%s5] sm:$0xff]
  %v2038 = vld [vmem:[%s5 + $0x8] sm:$0xff]
  %v2039 = vld [vmem:[%s6] sm:$0xff]
  %v2040 = vld [vmem:[%s6 + $0x8] sm:$0xff]
  %v2042 = vsel %vm198, %v2029, 0
  %v2045 = vsel %vm198, %v2030, 0
  %v2048 = vsel %vm198, %v2031, 0
  %v2051 = vsel %vm198, %v2032, 0
  %v2054 = vsel %vm198, %v2033, 0
  %v2057 = vsel %vm198, %v2034, 0
  %v2060 = vsel %vm198, %v2035, 0
  %v2063 = vsel %vm198, %v2036, 0
  %2065 = vmatprep.subr.mxu0 0.0
  %2066 = vmatpush1.msra.mxu0 0.0
  %2067 = vmatprep.subr.mxu0 0.0
  %2068 = vmatpush1.msra.mxu0 0.0
  %2069 = vmatprep.subr.mxu0 0.0
  %2070 = vmatpush1.msra.mxu0 0.0
  %2071 = vmatprep.subr.mxu0 0.0
  %2072 = vmatpush1.msra.mxu0 0.0
  %2073 = vmatprep.subr.mxu0 0.0
  %2074 = vmatpush1.msra.mxu0 0.0
  %2075 = vmatprep.subr.mxu0 0.0
  %2076 = vmatpush1.msra.mxu0 0.0
  %2077 = vmatprep.subr.mxu0 0.0
  %2078 = vmatpush1.msra.mxu0 0.0
  %2079 = vmatprep.subr.mxu0 0.0
  %2080 = vmatpush1.msra.mxu0 0.0
  %2081 = vmatprep.subr.mxu0 0.0
  %2082 = vmatpush1.msra.mxu0 0.0
  %2083 = vmatprep.subr.mxu0 0.0
  %2084 = vmatpush1.msra.mxu0 0.0
  %2085 = vmatprep.subr.mxu0 0.0
  %2086 = vmatpush1.msra.mxu0 0.0
  %2087 = vmatprep.subr.mxu0 0.0
  %2088 = vmatpush1.msra.mxu0 0.0
  %2089 = vmatprep.subr.mxu0 0.0
  %2090 = vmatpush1.msra.mxu0 0.0
  %2091 = vmatprep.subr.mxu0 0.0
  %2092 = vmatpush1.msra.mxu0 0.0
  %2093 = vmatprep.subr.mxu0 0.0
  %2094 = vmatpush1.msra.mxu0 %v2040
  %2095 = vmatprep.subr.mxu0 0.0
  %2096 = vmatpush1.msra.mxu0 %v2039
  %2097 = vmatprep.subr.mxu0 0.0
  %2098 = vmatpush2.msra.mxu0 0.0
  %2099 = vmatprep.subr.mxu0 0.0
  %2100 = vmatpush2.msra.mxu0 0.0
  %2101 = vmatprep.subr.mxu0 0.0
  %2102 = vmatpush2.msra.mxu0 0.0
  %2103 = vmatprep.subr.mxu0 0.0
  %2104 = vmatpush2.msra.mxu0 0.0
  %2105 = vmatprep.subr.mxu0 0.0
  %2106 = vmatpush2.msra.mxu0 0.0
  %2107 = vmatprep.subr.mxu0 0.0
  %2108 = vmatpush2.msra.mxu0 0.0
  %2109 = vmatprep.subr.mxu0 0.0
  %2110 = vmatpush2.msra.mxu0 0.0
  %2111 = vmatprep.subr.mxu0 0.0
  %2112 = vmatpush2.msra.mxu0 0.0
  %2113 = vmatprep.subr.mxu0 0.0
  %2114 = vmatpush2.msra.mxu0 0.0
  %2115 = vmatprep.subr.mxu0 0.0
  %2116 = vmatpush2.msra.mxu0 0.0
  %2117 = vmatprep.subr.mxu0 0.0
  %2118 = vmatpush2.msra.mxu0 0.0
  %2119 = vmatprep.subr.mxu0 0.0
  %2120 = vmatpush2.msra.mxu0 0.0
  %2121 = vmatprep.subr.mxu0 0.0
  %2122 = vmatpush2.msra.mxu0 0.0
  %2123 = vmatprep.subr.mxu0 0.0
  %2124 = vmatpush2.msra.mxu0 0.0
  %2125 = vmatprep.subr.mxu0 0.0
  %2126 = vmatpush2.msra.mxu0 0.0
  %2127 = vmatprep.subr.mxu0 0.0
  %2128 = vmatpush2.msra.mxu0 0.0
  %2129 = vmatprep.mubr.f32.mxu0 0.0
  %2130 = vmatmul.mubr.f32.gmra.mxu0 %v2042
  %v2131 = vpop.f32.mrf.mxu0
  %v2132 = vadd.f32 0.0, %v2131
  %v2133 = vpop.f32.mrf.mxu0
  %2134 = vmatprep.mubr.f32.mxu0 0.0
  %2135 = vmatmul.mubr.f32.gmra.mxu0 %v2045
  %v2136 = vpop.f32.mrf.mxu0
  %v2137 = vadd.f32 0.0, %v2136
  %v2138 = vpop.f32.mrf.mxu0
  %2139 = vmatprep.mubr.f32.mxu0 0.0
  %2140 = vmatmul.mubr.f32.gmra.mxu0 %v2048
  %v2141 = vpop.f32.mrf.mxu0
  %v2142 = vadd.f32 0.0, %v2141
  %v2143 = vpop.f32.mrf.mxu0
  %2144 = vmatprep.mubr.f32.mxu0 0.0
  %2145 = vmatmul.mubr.f32.gmra.mxu0 %v2051
  %v2146 = vpop.f32.mrf.mxu0
  %v2147 = vadd.f32 0.0, %v2146
  %v2148 = vpop.f32.mrf.mxu0
  %2149 = vmatprep.mubr.f32.mxu0 0.0
  %2150 = vmatmul.mubr.f32.gmra.mxu0 %v2054
  %v2151 = vpop.f32.mrf.mxu0
  %v2152 = vadd.f32 0.0, %v2151
  %v2153 = vpop.f32.mrf.mxu0
  %2154 = vmatprep.mubr.f32.mxu0 0.0
  %2155 = vmatmul.mubr.f32.gmra.mxu0 %v2057
  %v2156 = vpop.f32.mrf.mxu0
  %v2157 = vadd.f32 0.0, %v2156
  %v2158 = vpop.f32.mrf.mxu0
  %2159 = vmatprep.mubr.f32.mxu0 0.0
  %2160 = vmatmul.mubr.f32.gmra.mxu0 %v2060
  %v2161 = vpop.f32.mrf.mxu0
  %v2162 = vadd.f32 0.0, %v2161
  %v2163 = vpop.f32.mrf.mxu0
  %2164 = vmatprep.mubr.f32.mxu0 0.0
  %2165 = vmatmul.mubr.f32.gmra.mxu0 %v2063
  %v2166 = vpop.f32.mrf.mxu0
  %v2167 = vadd.f32 0.0, %v2166
  %v2168 = vpop.f32.mrf.mxu0
  %2169 = vdwg.mxu0
  %v2171 = vsel %vm198, %v2021, 0
  %v2174 = vsel %vm198, %v2022, 0
  %v2177 = vsel %vm198, %v2023, 0
  %v2180 = vsel %vm198, %v2024, 0
  %v2183 = vsel %vm198, %v2025, 0
  %v2186 = vsel %vm198, %v2026, 0
  %v2189 = vsel %vm198, %v2027, 0
  %v2192 = vsel %vm198, %v2028, 0
  %2194 = vmatprep.subr.mxu0 0.0
  %2195 = vmatpush1.msra.mxu0 0.0
  %2196 = vmatprep.subr.mxu0 0.0
  %2197 = vmatpush1.msra.mxu0 0.0
  %2198 = vmatprep.subr.mxu0 0.0
  %2199 = vmatpush1.msra.mxu0 0.0
  %2200 = vmatprep.subr.mxu0 0.0
  %2201 = vmatpush1.msra.mxu0 0.0
  %2202 = vmatprep.subr.mxu0 0.0
  %2203 = vmatpush1.msra.mxu0 0.0
  %2204 = vmatprep.subr.mxu0 0.0
  %2205 = vmatpush1.msra.mxu0 0.0
  %2206 = vmatprep.subr.mxu0 0.0
  %2207 = vmatpush1.msra.mxu0 0.0
  %2208 = vmatprep.subr.mxu0 0.0
  %2209 = vmatpush1.msra.mxu0 0.0
  %2210 = vmatprep.subr.mxu0 0.0
  %2211 = vmatpush1.msra.mxu0 0.0
  %2212 = vmatprep.subr.mxu0 0.0
  %2213 = vmatpush1.msra.mxu0 0.0
  %2214 = vmatprep.subr.mxu0 0.0
  %2215 = vmatpush1.msra.mxu0 0.0
  %2216 = vmatprep.subr.mxu0 0.0
  %2217 = vmatpush1.msra.mxu0 0.0
  %2218 = vmatprep.subr.mxu0 0.0
  %2219 = vmatpush1.msra.mxu0 0.0
  %2220 = vmatprep.subr.mxu0 0.0
  %2221 = vmatpush1.msra.mxu0 0.0
  %2222 = vmatprep.subr.mxu0 0.0
  %2223 = vmatpush1.msra.mxu0 %v2038
  %2224 = vmatprep.subr.mxu0 0.0
  %2225 = vmatpush1.msra.mxu0 %v2037
  %2226 = vmatprep.subr.mxu0 0.0
  %2227 = vmatpush2.msra.mxu0 0.0
  %2228 = vmatprep.subr.mxu0 0.0
  %2229 = vmatpush2.msra.mxu0 0.0
  %2230 = vmatprep.subr.mxu0 0.0
  %2231 = vmatpush2.msra.mxu0 0.0
  %2232 = vmatprep.subr.mxu0 0.0
  %2233 = vmatpush2.msra.mxu0 0.0
  %2234 = vmatprep.subr.mxu0 0.0
  %2235 = vmatpush2.msra.mxu0 0.0
  %2236 = vmatprep.subr.mxu0 0.0
  %2237 = vmatpush2.msra.mxu0 0.0
  %2238 = vmatprep.subr.mxu0 0.0
  %2239 = vmatpush2.msra.mxu0 0.0
  %2240 = vmatprep.subr.mxu0 0.0
  %2241 = vmatpush2.msra.mxu0 0.0
  %2242 = vmatprep.subr.mxu0 0.0
  %2243 = vmatpush2.msra.mxu0 0.0
  %2244 = vmatprep.subr.mxu0 0.0
  %2245 = vmatpush2.msra.mxu0 0.0
  %2246 = vmatprep.subr.mxu0 0.0
  %2247 = vmatpush2.msra.mxu0 0.0
  %2248 = vmatprep.subr.mxu0 0.0
  %2249 = vmatpush2.msra.mxu0 0.0
  %2250 = vmatprep.subr.mxu0 0.0
  %2251 = vmatpush2.msra.mxu0 0.0
  %2252 = vmatprep.subr.mxu0 0.0
  %2253 = vmatpush2.msra.mxu0 0.0
  %2254 = vmatprep.subr.mxu0 0.0
  %2255 = vmatpush2.msra.mxu0 0.0
  %2256 = vmatprep.subr.mxu0 0.0
  %2257 = vmatpush2.msra.mxu0 0.0
  %2258 = vmatprep.mubr.f32.mxu0 0.0
  %2259 = vmatmul.mubr.f32.gmra.mxu0 %v2171
  %v2260 = vpop.f32.mrf.mxu0
  %v2261 = vadd.f32 %v2132, %v2260
  %v2262 = vpop.f32.mrf.mxu0
  %2263 = vmatprep.mubr.f32.mxu0 0.0
  %2264 = vmatmul.mubr.f32.gmra.mxu0 %v2174
  %v2265 = vpop.f32.mrf.mxu0
  %v2266 = vadd.f32 %v2137, %v2265
  %v2267 = vpop.f32.mrf.mxu0
  %2268 = vmatprep.mubr.f32.mxu0 0.0
  %2269 = vmatmul.mubr.f32.gmra.mxu0 %v2177
  %v2270 = vpop.f32.mrf.mxu0
  %v2271 = vadd.f32 %v2142, %v2270
  %v2272 = vpop.f32.mrf.mxu0
  %2273 = vmatprep.mubr.f32.mxu0 0.0
  %2274 = vmatmul.mubr.f32.gmra.mxu0 %v2180
  %v2275 = vpop.f32.mrf.mxu0
  %v2276 = vadd.f32 %v2147, %v2275
  %v2277 = vpop.f32.mrf.mxu0
  %2278 = vmatprep.mubr.f32.mxu0 0.0
  %2279 = vmatmul.mubr.f32.gmra.mxu0 %v2183
  %v2280 = vpop.f32.mrf.mxu0
  %v2281 = vadd.f32 %v2152, %v2280
  %v2282 = vpop.f32.mrf.mxu0
  %2283 = vmatprep.mubr.f32.mxu0 0.0
  %2284 = vmatmul.mubr.f32.gmra.mxu0 %v2186
  %v2285 = vpop.f32.mrf.mxu0
  %v2286 = vadd.f32 %v2157, %v2285
  %v2287 = vpop.f32.mrf.mxu0
  %2288 = vmatprep.mubr.f32.mxu0 0.0
  %2289 = vmatmul.mubr.f32.gmra.mxu0 %v2189
  %v2290 = vpop.f32.mrf.mxu0
  %v2291 = vadd.f32 %v2162, %v2290
  %v2292 = vpop.f32.mrf.mxu0
  %2293 = vmatprep.mubr.f32.mxu0 0.0
  %2294 = vmatmul.mubr.f32.gmra.mxu0 %v2192
  %v2295 = vpop.f32.mrf.mxu0
  %v2296 = vadd.f32 %v2167, %v2295
  %v2297 = vpop.f32.mrf.mxu0
  %2298 = vdwg.mxu0
  %v2299 = vld [vmem:[%s7] sm:$0x1]
  %v2301 = vlaneseq
  %v2302 = vshrl.u32 %v2301, 7
  %v2303 = vsub.s32 0, %v2302
  %v2304 = vrot.slane %v2299, %v2303
  %v2306 = vadd.f32 %v2261, %v2304
  %v2307 = vadd.f32 %v2266, %v2304
  %v2308 = vadd.f32 %v2271, %v2304
  %v2309 = vadd.f32 %v2276, %v2304
  %v2310 = vadd.f32 %v2281, %v2304
  %v2311 = vadd.f32 %v2286, %v2304
  %v2312 = vadd.f32 %v2291, %v2304
  %v2313 = vadd.f32 %v2296, %v2304
  %v2314 = vtanh.pop %v2306
  %v2315 = vtanh.pop %v2307
  %v2316 = vtanh.pop %v2308
  %v2317 = vtanh.pop %v2309
  %v2318 = vtanh.pop %v2310
  %v2319 = vtanh.pop %v2311
  %v2320 = vtanh.pop %v2312
  %v2321 = vtanh.pop %v2313
  %v2322 = vld [vmem:[%s8] sm:$0x1]
  %v2324 = vlaneseq
  %v2325 = vshrl.u32 %v2324, 7
  %v2326 = vsub.s32 0, %v2325
  %v2327 = vrot.slane %v2322, %v2326
  %v2329 = vmul.f32 %v2314, %v2327
  %v2330 = vmul.f32 %v2315, %v2327
  %v2331 = vmul.f32 %v2316, %v2327
  %v2332 = vmul.f32 %v2317, %v2327
  %v2333 = vmul.f32 %v2318, %v2327
  %v2334 = vmul.f32 %v2319, %v2327
  %v2335 = vmul.f32 %v2320, %v2327
  %v2336 = vmul.f32 %v2321, %v2327
  %v2337 = vsel %vm51, %v2329, 0.0
  %2338 = vadd.xlane.f32.xlu0 %v2337
  %v2339 = vpop.xlane.xlu0 %2338
  %v2340 = vsel %vm51, %v2330, 0.0
  %2341 = vadd.xlane.f32.xlu0 %v2340
  %v2342 = vpop.xlane.xlu0 %2341
  %v2343 = vsel %vm51, %v2331, 0.0
  %2344 = vadd.xlane.f32.xlu0 %v2343
  %v2345 = vpop.xlane.xlu0 %2344
  %v2346 = vsel %vm51, %v2332, 0.0
  %2347 = vadd.xlane.f32.xlu0 %v2346
  %v2348 = vpop.xlane.xlu0 %2347
  %v2349 = vsel %vm51, %v2333, 0.0
  %2350 = vadd.xlane.f32.xlu0 %v2349
  %v2351 = vpop.xlane.xlu0 %2350
  %v2352 = vsel %vm51, %v2334, 0.0
  %2353 = vadd.xlane.f32.xlu0 %v2352
  %v2354 = vpop.xlane.xlu0 %2353
  %v2355 = vsel %vm51, %v2335, 0.0
  %2356 = vadd.xlane.f32.xlu0 %v2355
  %v2357 = vpop.xlane.xlu0 %2356
  %v2358 = vsel %vm51, %v2336, 0.0
  %2359 = vadd.xlane.f32.xlu0 %v2358
  %v2360 = vpop.xlane.xlu0 %2359
  %2361 = vxpose.xlu0.b32.start [1/16] %v34, 128
  %2362 = vxpose.xlu0.b32.cont [2/16] 0.0, 128
  %2363 = vxpose.xlu0.b32.cont [3/16] 0.0, 128
  %2364 = vxpose.xlu0.b32.cont [4/16] 0.0, 128
  %2365 = vxpose.xlu0.b32.cont [5/16] 0.0, 128
  %2366 = vxpose.xlu0.b32.cont [6/16] 0.0, 128
  %2367 = vxpose.xlu0.b32.cont [7/16] 0.0, 128
  %2368 = vxpose.xlu0.b32.cont [8/16] 0.0, 128
  %2369 = vxpose.xlu0.b32.cont [9/16] 0.0, 128
  %2370 = vxpose.xlu0.b32.cont [10/16] 0.0, 128
  %2371 = vxpose.xlu0.b32.cont [11/16] 0.0, 128
  %2372 = vxpose.xlu0.b32.cont [12/16] 0.0, 128
  %2373 = vxpose.xlu0.b32.cont [13/16] 0.0, 128
  %2374 = vxpose.xlu0.b32.cont [14/16] 0.0, 128
  %2375 = vxpose.xlu0.b32.cont [15/16] 0.0, 128
  %2376 = vxpose.xlu0.b32.end [16/16] 0.0, 128
  %v2377 = vpop.trf.xlu0
  %v2378 = vpop.trf.xlu0
  %v2379 = vpop.trf.xlu0
  %v2380 = vpop.trf.xlu0
  %v2381 = vpop.trf.xlu0
  %v2382 = vpop.trf.xlu0
  %v2383 = vpop.trf.xlu0
  %v2384 = vpop.trf.xlu0
  %v2385 = vpop.trf.xlu0
  %v2386 = vpop.trf.xlu0
  %v2387 = vpop.trf.xlu0
  %v2388 = vpop.trf.xlu0
  %v2389 = vpop.trf.xlu0
  %v2390 = vpop.trf.xlu0
  %v2391 = vpop.trf.xlu0
  %v2392 = vpop.trf.xlu0
  %vm2393 = vcmp.gt.f32.partialorder %v2377, 0.5
  %v2402 = vlaneseq
  %v2403 = vand.u32 %v2402, 127
  %v2404 = vlaneseq
  %v2405 = vshrl.u32 %v2404, 7
  %v2406 = vsub.s32 %v2403, %v2405
  %v2407 = vrot.slane %v2339, %v2406
  %v2408 = vlaneseq
  %v2409 = vshrl.u32 %v2408, 7
  %v2410 = vsub.s32 %v2403, %v2409
  %v2411 = vrot.slane %v2342, %v2410
  %v2412 = vlaneseq
  %v2413 = vshrl.u32 %v2412, 7
  %v2414 = vsub.s32 %v2403, %v2413
  %v2415 = vrot.slane %v2345, %v2414
  %v2416 = vlaneseq
  %v2417 = vshrl.u32 %v2416, 7
  %v2418 = vsub.s32 %v2403, %v2417
  %v2419 = vrot.slane %v2348, %v2418
  %v2420 = vlaneseq
  %v2421 = vshrl.u32 %v2420, 7
  %v2422 = vsub.s32 %v2403, %v2421
  %v2423 = vrot.slane %v2351, %v2422
  %v2424 = vlaneseq
  %v2425 = vshrl.u32 %v2424, 7
  %v2426 = vsub.s32 %v2403, %v2425
  %v2427 = vrot.slane %v2354, %v2426
  %v2428 = vlaneseq
  %v2429 = vshrl.u32 %v2428, 7
  %v2430 = vsub.s32 %v2403, %v2429
  %v2431 = vrot.slane %v2357, %v2430
  %v2432 = vlaneseq
  %v2433 = vshrl.u32 %v2432, 7
  %v2434 = vsub.s32 %v2403, %v2433
  %v2435 = vrot.slane %v2360, %v2434
  %vm2436 = vcmask 1041409
  %v2437 = vsel %vm2436, %v2411, %v2407
  %vm2438 = vcmask 1042434
  %v2439 = vsel %vm2438, %v2415, %v2437
  %vm2440 = vcmask 1043459
  %v2441 = vsel %vm2440, %v2419, %v2439
  %vm2442 = vcmask 1044484
  %v2443 = vsel %vm2442, %v2423, %v2441
  %vm2444 = vcmask 1045509
  %v2445 = vsel %vm2444, %v2427, %v2443
  %vm2446 = vcmask 1046534
  %v2447 = vsel %vm2446, %v2431, %v2445
  %vm2448 = vcmask 1047559
  %v2449 = vsel %vm2448, %v2435, %v2447
  %v2451 = vsel %vm2393, %v2449, -1e+30
  %v2452 = vsel %vm35, %v2451, -inf
  %v2453 = vrot.slane %v2452, 4
  %v2454 = vmax.f32 %v2452, %v2453
  %v2455 = vrot.slane %v2454, 2
  %v2456 = vmax.f32 %v2454, %v2455
  %v2457 = vrot.slane %v2456, 1
  %v2458 = vmax.f32 %v2456, %v2457
  %v2459 = vsub.f32 %v2451, %v2458
  %v2460 = vmul.f32 %v2459, 1.442695
  %v2461 = vpow.pop %v2460
  %v2462 = vsel %vm35, %v2461, 0.0
  %v2463 = vrot.slane %v2462, 4
  %v2464 = vadd.f32 %v2462, %v2463
  %v2465 = vrot.slane %v2464, 2
  %v2466 = vadd.f32 %v2464, %v2465
  %v2467 = vrot.slane %v2466, 1
  %v2468 = vadd.f32 %v2466, %v2467
  %v2469 = vrcp.pop %v2468
  %v2470 = vmul.f32 %v2461, %v2469
  %v2471 = vlaneseq
  %v2472 = vshrl.u32 %v2471, 7
  %v2473 = vsub.s32 0, %v2472
  %v2474 = vrot.slane %v2470, %v2473
  %2476 = vbcast.lane.b32.xlu0 %v2474, 256
  %v2477 = vpop.permute.xlu0 %2476
  %v2478 = vlaneseq
  %v2479 = vshrl.u32 %v2478, 7
  %v2480 = vsub.s32 1, %v2479
  %v2481 = vrot.slane %v2470, %v2480
  %2483 = vbcast.lane.b32.xlu0 %v2481, 256
  %v2484 = vpop.permute.xlu0 %2483
  %v2485 = vlaneseq
  %v2486 = vshrl.u32 %v2485, 7
  %v2487 = vsub.s32 2, %v2486
  %v2488 = vrot.slane %v2470, %v2487
  %2490 = vbcast.lane.b32.xlu0 %v2488, 256
  %v2491 = vpop.permute.xlu0 %2490
  %v2492 = vlaneseq
  %v2493 = vshrl.u32 %v2492, 7
  %v2494 = vsub.s32 3, %v2493
  %v2495 = vrot.slane %v2470, %v2494
  %2497 = vbcast.lane.b32.xlu0 %v2495, 256
  %v2498 = vpop.permute.xlu0 %2497
  %v2499 = vlaneseq
  %v2500 = vshrl.u32 %v2499, 7
  %v2501 = vsub.s32 4, %v2500
  %v2502 = vrot.slane %v2470, %v2501
  %2504 = vbcast.lane.b32.xlu0 %v2502, 256
  %v2505 = vpop.permute.xlu0 %2504
  %v2506 = vlaneseq
  %v2507 = vshrl.u32 %v2506, 7
  %v2508 = vsub.s32 5, %v2507
  %v2509 = vrot.slane %v2470, %v2508
  %2511 = vbcast.lane.b32.xlu0 %v2509, 256
  %v2512 = vpop.permute.xlu0 %2511
  %v2513 = vlaneseq
  %v2514 = vshrl.u32 %v2513, 7
  %v2515 = vsub.s32 6, %v2514
  %v2516 = vrot.slane %v2470, %v2515
  %2518 = vbcast.lane.b32.xlu0 %v2516, 256
  %v2519 = vpop.permute.xlu0 %2518
  %v2520 = vlaneseq
  %v2521 = vshrl.u32 %v2520, 7
  %v2522 = vsub.s32 7, %v2521
  %v2523 = vrot.slane %v2470, %v2522
  %2525 = vbcast.lane.b32.xlu0 %v2523, 256
  %v2526 = vpop.permute.xlu0 %2525
  %v2527 = vmul.f32 %v2477, %v2314
  %v2528 = vmul.f32 %v2484, %v2315
  %v2529 = vmul.f32 %v2491, %v2316
  %v2530 = vmul.f32 %v2498, %v2317
  %v2531 = vmul.f32 %v2505, %v2318
  %v2532 = vmul.f32 %v2512, %v2319
  %v2533 = vmul.f32 %v2519, %v2320
  %v2534 = vmul.f32 %v2526, %v2321
  %v2535 = vsel %vm51, %v2527, 0.0
  %v2536 = vsel %vm51, %v2528, 0.0
  %v2537 = vadd.f32 %v2535, %v2536
  %v2538 = vsel %vm51, %v2529, 0.0
  %v2539 = vadd.f32 %v2537, %v2538
  %v2540 = vsel %vm51, %v2530, 0.0
  %v2541 = vadd.f32 %v2539, %v2540
  %v2542 = vsel %vm51, %v2531, 0.0
  %v2543 = vadd.f32 %v2541, %v2542
  %v2544 = vsel %vm51, %v2532, 0.0
  %v2545 = vadd.f32 %v2543, %v2544
  %v2546 = vsel %vm51, %v2533, 0.0
  %v2547 = vadd.f32 %v2545, %v2546
  %v2548 = vsel %vm51, %v2534, 0.0
  %v2549 = vadd.f32 %v2547, %v2548
  %2550 = vst.msk [vmem:[%s9] sm:$0xff] %vm51, %v2549
  %2551 = vxpose.xlu0.b32.start [1/16] %v2470, 128
  %2552 = vxpose.xlu0.b32.cont [2/16] 0.0, 128
  %2553 = vxpose.xlu0.b32.cont [3/16] 0.0, 128
  %2554 = vxpose.xlu0.b32.cont [4/16] 0.0, 128
  %2555 = vxpose.xlu0.b32.cont [5/16] 0.0, 128
  %2556 = vxpose.xlu0.b32.cont [6/16] 0.0, 128
  %2557 = vxpose.xlu0.b32.cont [7/16] 0.0, 128
  %2558 = vxpose.xlu0.b32.cont [8/16] 0.0, 128
  %2559 = vxpose.xlu0.b32.cont [9/16] 0.0, 128
  %2560 = vxpose.xlu0.b32.cont [10/16] 0.0, 128
  %2561 = vxpose.xlu0.b32.cont [11/16] 0.0, 128
  %2562 = vxpose.xlu0.b32.cont [12/16] 0.0, 128
  %2563 = vxpose.xlu0.b32.cont [13/16] 0.0, 128
  %2564 = vxpose.xlu0.b32.cont [14/16] 0.0, 128
  %2565 = vxpose.xlu0.b32.cont [15/16] 0.0, 128
  %2566 = vxpose.xlu0.b32.end [16/16] 0.0, 128
  %v2567 = vpop.trf.xlu0
  %v2568 = vpop.trf.xlu0
  %v2569 = vpop.trf.xlu0
  %v2570 = vpop.trf.xlu0
  %v2571 = vpop.trf.xlu0
  %v2572 = vpop.trf.xlu0
  %v2573 = vpop.trf.xlu0
  %v2574 = vpop.trf.xlu0
  %v2575 = vpop.trf.xlu0
  %v2576 = vpop.trf.xlu0
  %v2577 = vpop.trf.xlu0
  %v2578 = vpop.trf.xlu0
  %v2579 = vpop.trf.xlu0
  %v2580 = vpop.trf.xlu0
  %v2581 = vpop.trf.xlu0
  %v2582 = vpop.trf.xlu0
  %2583 = vst.msk [vmem:[%s10] sm:$0xff] %vm35, %v2567
  // Predicated region
  $region38: #{sent_attn_forward.1} parent=0 // pred_check
    _
  $region39: #{sent_attn_forward.1} parent=0 // pred_check_branch
    %2585 = sbr.rel (0) target = $region41
  $region40: #{sent_attn_forward.1} parent=0 // pred_region
    _
  $region41: #{sent_attn_forward.1} parent=0 // pred_fallthru
    _
  // Predicated region
  $region42: #{sent_attn_forward.1} parent=0 // pred_check
    _
  $region43: #{sent_attn_forward.1} parent=0 // pred_check_branch
    %2587 = sbr.rel (0) target = $region45
  $region44: #{sent_attn_forward.1} parent=0 // pred_region
    _
  $region45: #{sent_attn_forward.1} parent=0 // pred_fallthru
    _
  // Predicated region
  $region46: #{sent_attn_forward.1} parent=0 // pred_check
    _
  $region47: #{sent_attn_forward.1} parent=0 // pred_check_branch
    %2589 = sbr.rel (0) target = $region49
  $region48: #{sent_attn_forward.1} parent=0 // pred_region
    _
  $region49: #{sent_attn_forward.1} parent=0 // pred_fallthru
    _
  // Predicated region
  $region50: #{sent_attn_forward.1} parent=0 // pred_check
    _
  $region51: #{sent_attn_forward.1} parent=0 // pred_check_branch
    %2591 = sbr.rel (0) target = $region53
  $region52: #{sent_attn_forward.1} parent=0 // pred_region
    _
  $region53: #{sent_attn_forward.1} parent=0 // pred_fallthru
    _

</llo_original>
